<compile_context>
chip_gen: v6e
topology: v6e:2x2x1
jax: 0.10.0
libtpu: 0.0.40
codegen_flags: <defaults>
</compile_context>

<pallas_src>
import numpy as np
import jax
import jax.numpy as jnp
from jax.experimental import pallas as pl
from jax.experimental.pallas import tpu as pltpu

LANE = 128      # TPU lane width (last block dim)
SUBLANE = 8     # f32 sublane width (second-to-last block dim)


def _round_up(n, m):
    return ((n + m - 1) // m) * m


def _decoder_kernel(x_ref, wfc_ref, bfc_ref, k1_ref, b1_ref, k2_ref, b2_ref, o_ref):
    # x:   (TB, in_features)  f32
    # wfc: (in_features, Dp)  bf16    bfc: (1, Dp)   f32
    # k1:  (Dp, H1p)          bf16    b1:  (1, H1p)  f32
    # k2:  (H1p, OIp)         bf16    b2:  (1, OIp)  f32
    # o:   (TB, OIp)          f32
    # bf16 x bf16 on the MXU with f32 accumulation; bias + ReLU stay f32 on the
    # VPU (v5e has no bf16 VPU path).  Padded lanes carry exact zeros.
    x16 = x_ref[...].astype(jnp.bfloat16)
    h = jnp.dot(x16, wfc_ref[...], preferred_element_type=jnp.float32)
    h = jnp.maximum(h + bfc_ref[...], 0.0)                        # Linear + ReLU
    h1 = jnp.dot(h.astype(jnp.bfloat16), k1_ref[...],
                 preferred_element_type=jnp.float32)
    h1 = jnp.maximum(h1 + b1_ref[...], 0.0)                       # Conv2d(hid0->hid1,1) + ReLU
    o = jnp.dot(h1.astype(jnp.bfloat16), k2_ref[...],
                preferred_element_type=jnp.float32)
    o_ref[...] = (o + b2_ref[...]).astype(o_ref.dtype)            # Conv2d(hid1->OI,1), no act


def _resident_spec(shape, single_buffer=True):
    """Constant-index block: stays resident in VMEM across all grid steps.

    single_buffer=True requests pipeline_mode=pl.Buffered(1) (the block is
    never re-fetched, so double-buffering it is pure VMEM waste); falls back
    to a plain BlockSpec if this JAX version's BlockSpec has no pipeline_mode.
    """
    idx = lambda b: (0,) * len(shape)
    if single_buffer:
        try:
            return pl.BlockSpec(shape, idx,
                                pipeline_mode=pl.Buffered(buffer_count=1))
        except TypeError:
            pass
    return pl.BlockSpec(shape, idx)


def conv_decoder_forward(x, kparams, out_shape, *, batch_tile=None,
                         single_buffer_weights=True):
    """Batched Pallas ConvDecoder.forward.

    x: (B, in_features); returns (B, *out_shape).  Each row reproduces the
    PyTorch module's N == 1 forward (fc + ReLU, 1x1 conv + ReLU, 1x1 conv).
    """
    wfc_t, bfc_r, k1, b1_r, k2, b2_r = kparams
    B, in_features = x.shape
    HW = out_shape[2] * out_shape[3]
    OI = out_shape[0] * out_shape[1]
    OIHW = OI * HW

    Dp = wfc_t.shape[1]     # lane-padded hid0*HW
    H1p = k1.shape[1]       # lane-padded hid1*HW
    OIp = k2.shape[1]       # lane-padded OI*HW

    # Real shape validation (kparams must be consistent with x and out_shape).
    assert wfc_t.shape[0] == in_features, (wfc_t.shape, in_features)
    assert bfc_r.shape == (1, Dp), (bfc_r.shape, Dp)
    assert k1.shape[0] == Dp and b1_r.shape == (1, H1p), (k1.shape, b1_r.shape)
    assert k2.shape[0] == H1p and b2_r.shape == (1, OIp), (k2.shape, b2_r.shape)
    assert OIHW <= OIp < OIHW + LANE, (OIHW, OIp)   # OIp is the lane-padded OI*HW

    # Batch tiling: one grid step whenever the batch fits comfortably;
    # otherwise 8-row-aligned tiles (f32 sublane).
    if batch_tile is None:
        batch_tile = B if B <= 512 else 512
    if batch_tile != B:
        batch_tile = _round_up(batch_tile, SUBLANE)
    Bp = _round_up(B, batch_tile)
    if Bp != B:
        x = jnp.pad(x, ((0, Bp - B), (0, 0)))
    grid = (Bp // batch_tile,)

    # Only shard the batch across TensorCores (v7x) when each core gets a
    # meaty tile; a tiny grid split just duplicates the weight DMA.
    semantics = ("parallel",) if (grid[0] > 1 and batch_tile >= 128) else ("arbitrary",)

    # Cost of the kernel *as written* (kron-inflated FLOPs, padded widths).
    flops = 2 * Bp * (in_features * Dp + Dp * H1p + H1p * OIp)
    bytes_accessed = sum(int(a.size) * a.dtype.itemsize
                         for a in (x, wfc_t, bfc_r, k1, b1_r, k2, b2_r))
    bytes_accessed += Bp * OIp * 4

    out = pl.pallas_call(
        _decoder_kernel,
        out_shape=jax.ShapeDtypeStruct((Bp, OIp), jnp.float32),
        grid_spec=pltpu.PrefetchScalarGridSpec(
            num_scalar_prefetch=0,
            grid=grid,
            in_specs=[
                pl.BlockSpec((batch_tile, in_features), lambda b: (b, 0)),
                _resident_spec(tuple(wfc_t.shape), single_buffer_weights),
                _resident_spec(tuple(bfc_r.shape), single_buffer_weights),
                _resident_spec(tuple(k1.shape), single_buffer_weights),
                _resident_spec(tuple(b1_r.shape), single_buffer_weights),
                _resident_spec(tuple(k2.shape), single_buffer_weights),
                _resident_spec(tuple(b2_r.shape), single_buffer_weights),
            ],
            out_specs=pl.BlockSpec((batch_tile, OIp), lambda b: (b, 0)),
        ),
        compiler_params=pltpu.CompilerParams(dimension_semantics=semantics),
        cost_estimate=pl.CostEstimate(flops=flops, transcendentals=0,
                                      bytes_accessed=bytes_accessed),
    )(x, wfc_t, bfc_r, k1, b1_r, k2, b2_r)

    # Lane-dense (padded) output -> slice back to logical width, then reshape.
    out = out[:B, :OIHW]
    return out.reshape((B,) + tuple(out_shape))


def prepare_params(params, out_shape):
    """One-time conversion of raw module params into kernel-ready layouts.

    - fc weight stored transposed (in_features, hid0*HW);
    - each 1x1 Conv2d weight W (C_out, C_in) expanded to kron(W.T, I_HW) so it
      acts directly on the flattened (channel*spatial) layout the fc produces
      (no in-kernel relayout);
    - every contraction / output width zero-padded to a multiple of 128 lanes
      (zero rows/cols are numerically inert), so all matmuls, bias+ReLU ops
      and stores are lane-dense;
    - matmul operands cast to bf16 (half the weight DMA, bf16-native MXU);
      biases kept f32 for the f32 VPU epilogues.
    """
    w_fc, b_fc, w1, b1, w2, b2 = params
    HW = out_shape[2] * out_shape[3]
    D = w_fc.shape[0]              # hid0 * HW
    H1HW = w1.shape[0] * HW        # hid1 * HW
    OIHW = w2.shape[0] * HW        # (C_out*C_in) * HW

    Dp, H1p, OIp = (_round_up(n, LANE) for n in (D, H1HW, OIHW))
    eye = jnp.eye(HW, dtype=jnp.float32)

    def pad2(a, rows, cols):
        return jnp.pad(a, ((0, rows - a.shape[0]), (0, cols - a.shape[1])))

    wfc_t = pad2(jnp.transpose(w_fc), w_fc.shape[1], Dp)          # (in, Dp)
    bfc_r = pad2(b_fc.reshape(1, D), 1, Dp)                       # (1, Dp)
    k1 = pad2(jnp.kron(jnp.transpose(w1), eye), Dp, H1p)          # (Dp, H1p)
    b1_r = pad2(jnp.repeat(b1, HW)[None, :], 1, H1p)              # (1, H1p)
    k2 = pad2(jnp.kron(jnp.transpose(w2), eye), H1p, OIp)         # (H1p, OIp)
    b2_r = pad2(jnp.repeat(b2, HW)[None, :], 1, OIp)              # (1, OIp)

    bf16 = lambda a: a.astype(jnp.bfloat16)
    return (bf16(wfc_t), bfc_r, bf16(k1), b1_r, bf16(k2), b2_r)


def conv_decoder_ref(x, params, out_shape):
    """Pure-JAX f32 reference mirroring the PyTorch module (batched over rows)."""
    w_fc, b_fc, w1, b1, w2, b2 = params
    HW = out_shape[2] * out_shape[3]
    B = x.shape[0]
    h = jnp.maximum(x @ w_fc.T + b_fc, 0.0)                       # Linear + ReLU
    h = h.reshape(B, -1, HW)                                      # (B, hid0, HW)
    h1 = jnp.maximum(jnp.einsum('oc,bcs->bos', w1, h) + b1[None, :, None], 0.0)
    o = jnp.einsum('oc,bcs->bos', w2, h1) + b2[None, :, None]
    return o.reshape((B,) + tuple(out_shape))


def init_params(key, out_shape, in_features, hid):
    """Deterministic init matching the module's parameter shapes
    (PyTorch-default uniform(+-1/sqrt(fan_in)))."""
    H, W = out_shape[2], out_shape[3]
    D = hid[0] * H * W
    OI = out_shape[0] * out_shape[1]
    ks = jax.random.split(key, 6)

    kf = 1.0 / np.sqrt(in_features)
    w_fc = jax.random.uniform(ks[0], (D, in_features), jnp.float32, -kf, kf)
    b_fc = jax.random.uniform(ks[1], (D,), jnp.float32, -kf, kf)

    k1 = 1.0 / np.sqrt(hid[0])                                    # 1x1 conv fan_in = C_in
    w1 = jax.random.uniform(ks[2], (hid[1], hid[0]), jnp.float32, -k1, k1)
    b1 = jax.random.uniform(ks[3], (hid[1],), jnp.float32, -k1, k1)

    k2 = 1.0 / np.sqrt(hid[1])
    w2 = jax.random.uniform(ks[4], (OI, hid[1]), jnp.float32, -k2, k2)
    b2 = jax.random.uniform(ks[5], (OI,), jnp.float32, -k2, k2)

    return (w_fc, b_fc, w1, b1, w2, b2)


if __name__ == "__main__":
    out_shape = (4, 4, 3, 3)      # (C_out, C_in, kH, kW) of the predicted weight
    in_features = 32
    hid = (32, 64)
    B = 16                        # batched decoder invocations

    key = jax.random.PRNGKey(0)
    pkey, xkey = jax.random.split(key)
    params = init_params(pkey, out_shape, in_features, hid)
    kparams = prepare_params(params, out_shape)                   # one-time, kernel-ready
    x = jax.random.normal(xkey, (B, in_features), jnp.float32)

    fwd = jax.jit(conv_decoder_forward,
                  static_argnames=("out_shape", "batch_tile", "single_buffer_weights"))
    try:
        # Default path: grid=(1,), bf16 weights, lane-padded widths,
        # single-buffered resident weight blocks.
        y = fwd(x, kparams, out_shape=out_shape)
    except Exception:
        # Fallback if this JAX build rejects pipeline_mode=pl.Buffered(1);
        # identical numerics, just default (double-buffered) resident weights.
        y = fwd(x, kparams, out_shape=out_shape, single_buffer_weights=False)
    y = jax.block_until_ready(y)

    y_ref = conv_decoder_ref(x, params, out_shape)
    assert y.shape == (B,) + out_shape, (y.shape, out_shape)
    # bf16 matmul operands with f32 accumulation -> ~1e-3 typical deviation
    # from the pure-f32 reference at these magnitudes.
    np.testing.assert_allclose(np.asarray(y), np.asarray(y_ref), rtol=2e-2, atol=2e-2)

    print("KERNEL_OK")
</pallas_src>

<mosaic_0001>
module attributes {stable_mosaic.version = 11 : i64} {
  func.func @_decoder_kernel(%arg0: i32, %arg1: memref<16x32xf32, #tpu.memory_space<vmem>>, %arg2: memref<32x384xbf16, #tpu.memory_space<vmem>>, %arg3: memref<1x384xf32, #tpu.memory_space<vmem>>, %arg4: memref<384x640xbf16, #tpu.memory_space<vmem>>, %arg5: memref<1x640xf32, #tpu.memory_space<vmem>>, %arg6: memref<640x256xbf16, #tpu.memory_space<vmem>>, %arg7: memref<1x256xf32, #tpu.memory_space<vmem>>, %arg8: memref<16x256xf32, #tpu.memory_space<vmem>>) attributes {dimension_semantics = [#tpu.dimension_semantics<arbitrary>], iteration_bounds = array<i64: 1>, scalar_prefetch = 0 : i64, scratch_operands = 0 : i64, tpu.core_type = #tpu.core_type<tc>, window_params = [{transform_indices = @transform_0, window_bounds = array<i64: 16, 32>}, {pipeline_mode = #tpu.pipeline_mode<synchronous>, transform_indices = @transform_1, window_bounds = array<i64: 32, 384>}, {pipeline_mode = #tpu.pipeline_mode<synchronous>, transform_indices = @transform_2, window_bounds = array<i64: 1, 384>}, {pipeline_mode = #tpu.pipeline_mode<synchronous>, transform_indices = @transform_3, window_bounds = array<i64: 384, 640>}, {pipeline_mode = #tpu.pipeline_mode<synchronous>, transform_indices = @transform_4, window_bounds = array<i64: 1, 640>}, {pipeline_mode = #tpu.pipeline_mode<synchronous>, transform_indices = @transform_5, window_bounds = array<i64: 640, 256>}, {pipeline_mode = #tpu.pipeline_mode<synchronous>, transform_indices = @transform_6, window_bounds = array<i64: 1, 256>}, {transform_indices = @transform_7, window_bounds = array<i64: 16, 256>}]} {
    %c0 = arith.constant 0 : index
    %c0_0 = arith.constant 0 : index
    %0 = vector.load %arg1[%c0, %c0_0] : memref<16x32xf32, #tpu.memory_space<vmem>>, vector<16x32xf32>
    %1 = arith.truncf %0 : vector<16x32xf32> to vector<16x32xbf16>
    %c0_1 = arith.constant 0 : index
    %c0_2 = arith.constant 0 : index
    %2 = vector.load %arg2[%c0_1, %c0_2] : memref<32x384xbf16, #tpu.memory_space<vmem>>, vector<32x384xbf16>
    %cst = arith.constant dense<0.000000e+00> : vector<16x384xf32>
    %3 = tpu.matmul %1, %2, %cst {dimension_numbers = #tpu.dot_dimension_numbers<[1], [0], [0], [1], [0, 0, 1, 1], [], []>} : vector<16x32xbf16>, vector<32x384xbf16>, vector<16x384xf32> -> vector<16x384xf32>
    %c0_3 = arith.constant 0 : index
    %c0_4 = arith.constant 0 : index
    %4 = vector.load %arg3[%c0_3, %c0_4] : memref<1x384xf32, #tpu.memory_space<vmem>>, vector<1x384xf32>
    %5 = vector.broadcast %4 : vector<1x384xf32> to vector<16x384xf32>
    %6 = arith.addf %3, %5 : vector<16x384xf32>
    %cst_5 = arith.constant 0.000000e+00 : f32
    %7 = vector.broadcast %cst_5 : f32 to vector<16x384xf32>
    %8 = arith.maximumf %6, %7 : vector<16x384xf32>
    %9 = arith.truncf %8 : vector<16x384xf32> to vector<16x384xbf16>
    %c0_6 = arith.constant 0 : index
    %c0_7 = arith.constant 0 : index
    %10 = vector.load %arg4[%c0_6, %c0_7] : memref<384x640xbf16, #tpu.memory_space<vmem>>, vector<384x640xbf16>
    %cst_8 = arith.constant dense<0.000000e+00> : vector<16x640xf32>
    %11 = tpu.matmul %9, %10, %cst_8 {dimension_numbers = #tpu.dot_dimension_numbers<[1], [0], [0], [1], [0, 0, 1, 1], [], []>} : vector<16x384xbf16>, vector<384x640xbf16>, vector<16x640xf32> -> vector<16x640xf32>
    %c0_9 = arith.constant 0 : index
    %c0_10 = arith.constant 0 : index
    %12 = vector.load %arg5[%c0_9, %c0_10] : memref<1x640xf32, #tpu.memory_space<vmem>>, vector<1x640xf32>
    %13 = vector.broadcast %12 : vector<1x640xf32> to vector<16x640xf32>
    %14 = arith.addf %11, %13 : vector<16x640xf32>
    %cst_11 = arith.constant 0.000000e+00 : f32
    %15 = vector.broadcast %cst_11 : f32 to vector<16x640xf32>
    %16 = arith.maximumf %14, %15 : vector<16x640xf32>
    %17 = arith.truncf %16 : vector<16x640xf32> to vector<16x640xbf16>
    %c0_12 = arith.constant 0 : index
    %c0_13 = arith.constant 0 : index
    %18 = vector.load %arg6[%c0_12, %c0_13] : memref<640x256xbf16, #tpu.memory_space<vmem>>, vector<640x256xbf16>
    %cst_14 = arith.constant dense<0.000000e+00> : vector<16x256xf32>
    %19 = tpu.matmul %17, %18, %cst_14 {dimension_numbers = #tpu.dot_dimension_numbers<[1], [0], [0], [1], [0, 0, 1, 1], [], []>} : vector<16x640xbf16>, vector<640x256xbf16>, vector<16x256xf32> -> vector<16x256xf32>
    %c0_15 = arith.constant 0 : index
    %c0_16 = arith.constant 0 : index
    %20 = vector.load %arg7[%c0_15, %c0_16] : memref<1x256xf32, #tpu.memory_space<vmem>>, vector<1x256xf32>
    %21 = vector.broadcast %20 : vector<1x256xf32> to vector<16x256xf32>
    %22 = arith.addf %19, %21 : vector<16x256xf32>
    %c0_17 = arith.constant 0 : index
    %c0_18 = arith.constant 0 : index
    %23 = vector.load %arg8[%c0_17, %c0_18] : memref<16x256xf32, #tpu.memory_space<vmem>>, vector<16x256xf32>
    tpu.vector_store %arg8[%c0_17, %c0_18], %22 {strides = array<i32>} : memref<16x256xf32, #tpu.memory_space<vmem>>, vector<16x256xf32>,
    return
  }
  func.func @transform_0(%arg0: i32) -> (i32, i32) {
    %c0_i32 = arith.constant 0 : i32
    %c0_i32_0 = arith.constant 0 : i32
    return %arg0, %c0_i32 : i32, i32
  }
  func.func @transform_1(%arg0: i32) -> (i32, i32) {
    %c0_i32 = arith.constant 0 : i32
    %c0_i32_0 = arith.constant 0 : i32
    %c0_i32_1 = arith.constant 0 : i32
    return %c0_i32, %c0_i32_0 : i32, i32
  }
  func.func @transform_2(%arg0: i32) -> (i32, i32) {
    %c0_i32 = arith.constant 0 : i32
    %c0_i32_0 = arith.constant 0 : i32
    %c0_i32_1 = arith.constant 0 : i32
    return %c0_i32, %c0_i32_0 : i32, i32
  }
  func.func @transform_3(%arg0: i32) -> (i32, i32) {
    %c0_i32 = arith.constant 0 : i32
    %c0_i32_0 = arith.constant 0 : i32
    %c0_i32_1 = arith.constant 0 : i32
    return %c0_i32, %c0_i32_0 : i32, i32
  }
  func.func @transform_4(%arg0: i32) -> (i32, i32) {
    %c0_i32 = arith.constant 0 : i32
    %c0_i32_0 = arith.constant 0 : i32
    %c0_i32_1 = arith.constant 0 : i32
    return %c0_i32, %c0_i32_0 : i32, i32
  }
  func.func @transform_5(%arg0: i32) -> (i32, i32) {
    %c0_i32 = arith.constant 0 : i32
    %c0_i32_0 = arith.constant 0 : i32
    %c0_i32_1 = arith.constant 0 : i32
    return %c0_i32, %c0_i32_0 : i32, i32
  }
  func.func @transform_6(%arg0: i32) -> (i32, i32) {
    %c0_i32 = arith.constant 0 : i32
    %c0_i32_0 = arith.constant 0 : i32
    %c0_i32_1 = arith.constant 0 : i32
    return %c0_i32, %c0_i32_0 : i32, i32
  }
  func.func @transform_7(%arg0: i32) -> (i32, i32) {
    %c0_i32 = arith.constant 0 : i32
    %c0_i32_0 = arith.constant 0 : i32
    return %arg0, %c0_i32 : i32, i32
  }
}

module attributes {stable_mosaic.version = 11 : i64} {
  func.func @_decoder_kernel(%arg0: i32, %arg1: memref<16x32xf32, #tpu.memory_space<vmem>>, %arg2: memref<32x384xbf16, #tpu.memory_space<vmem>>, %arg3: memref<1x384xf32, #tpu.memory_space<vmem>>, %arg4: memref<384x640xbf16, #tpu.memory_space<vmem>>, %arg5: memref<1x640xf32, #tpu.memory_space<vmem>>, %arg6: memref<640x256xbf16, #tpu.memory_space<vmem>>, %arg7: memref<1x256xf32, #tpu.memory_space<vmem>>, %arg8: memref<16x256xf32, #tpu.memory_space<vmem>>) attributes {dimension_semantics = [#tpu.dimension_semantics<arbitrary>], iteration_bounds = array<i64: 1>, scalar_prefetch = 0 : i64, scratch_operands = 0 : i64, tpu.core_type = #tpu.core_type<tc>, window_params = [{transform_indices = @transform_0, window_bounds = array<i64: 16, 32>}, {pipeline_mode = #tpu.pipeline_mode<synchronous>, transform_indices = @transform_1, window_bounds = array<i64: 32, 384>}, {pipeline_mode = #tpu.pipeline_mode<synchronous>, transform_indices = @transform_2, window_bounds = array<i64: 1, 384>}, {pipeline_mode = #tpu.pipeline_mode<synchronous>, transform_indices = @transform_3, window_bounds = array<i64: 384, 640>}, {pipeline_mode = #tpu.pipeline_mode<synchronous>, transform_indices = @transform_4, window_bounds = array<i64: 1, 640>}, {pipeline_mode = #tpu.pipeline_mode<synchronous>, transform_indices = @transform_5, window_bounds = array<i64: 640, 256>}, {pipeline_mode = #tpu.pipeline_mode<synchronous>, transform_indices = @transform_6, window_bounds = array<i64: 1, 256>}, {transform_indices = @transform_7, window_bounds = array<i64: 16, 256>}]} {
    %c0 = arith.constant 0 : index
    %c0_0 = arith.constant 0 : index
    %0 = vector.load %arg1[%c0, %c0_0] : memref<16x32xf32, #tpu.memory_space<vmem>>, vector<16x32xf32>
    %1 = arith.truncf %0 : vector<16x32xf32> to vector<16x32xbf16>
    %c0_1 = arith.constant 0 : index
    %c0_2 = arith.constant 0 : index
    %2 = vector.load %arg2[%c0_1, %c0_2] : memref<32x384xbf16, #tpu.memory_space<vmem>>, vector<32x384xbf16>
    %cst = arith.constant dense<0.000000e+00> : vector<16x384xf32>
    %3 = tpu.matmul %1, %2, %cst {dimension_numbers = #tpu.dot_dimension_numbers<[1], [0], [0], [1], [0, 0, 1, 1], [], []>} : vector<16x32xbf16>, vector<32x384xbf16>, vector<16x384xf32> -> vector<16x384xf32>
    %c0_3 = arith.constant 0 : index
    %c0_4 = arith.constant 0 : index
    %4 = vector.load %arg3[%c0_3, %c0_4] : memref<1x384xf32, #tpu.memory_space<vmem>>, vector<1x384xf32>
    %5 = vector.broadcast %4 : vector<1x384xf32> to vector<16x384xf32>
    %6 = arith.addf %3, %5 : vector<16x384xf32>
    %cst_5 = arith.constant 0.000000e+00 : f32
    %7 = vector.broadcast %cst_5 : f32 to vector<16x384xf32>
    %8 = arith.maximumf %6, %7 : vector<16x384xf32>
    %9 = arith.truncf %8 : vector<16x384xf32> to vector<16x384xbf16>
    %c0_6 = arith.constant 0 : index
    %c0_7 = arith.constant 0 : index
    %10 = vector.load %arg4[%c0_6, %c0_7] : memref<384x640xbf16, #tpu.memory_space<vmem>>, vector<384x640xbf16>
    %cst_8 = arith.constant dense<0.000000e+00> : vector<16x640xf32>
    %11 = tpu.matmul %9, %10, %cst_8 {dimension_numbers = #tpu.dot_dimension_numbers<[1], [0], [0], [1], [0, 0, 1, 1], [], []>} : vector<16x384xbf16>, vector<384x640xbf16>, vector<16x640xf32> -> vector<16x640xf32>
    %c0_9 = arith.constant 0 : index
    %c0_10 = arith.constant 0 : index
    %12 = vector.load %arg5[%c0_9, %c0_10] : memref<1x640xf32, #tpu.memory_space<vmem>>, vector<1x640xf32>
    %13 = vector.broadcast %12 : vector<1x640xf32> to vector<16x640xf32>
    %14 = arith.addf %11, %13 : vector<16x640xf32>
    %cst_11 = arith.constant 0.000000e+00 : f32
    %15 = vector.broadcast %cst_11 : f32 to vector<16x640xf32>
    %16 = arith.maximumf %14, %15 : vector<16x640xf32>
    %17 = arith.truncf %16 : vector<16x640xf32> to vector<16x640xbf16>
    %c0_12 = arith.constant 0 : index
    %c0_13 = arith.constant 0 : index
    %18 = vector.load %arg6[%c0_12, %c0_13] : memref<640x256xbf16, #tpu.memory_space<vmem>>, vector<640x256xbf16>
    %cst_14 = arith.constant dense<0.000000e+00> : vector<16x256xf32>
    %19 = tpu.matmul %17, %18, %cst_14 {dimension_numbers = #tpu.dot_dimension_numbers<[1], [0], [0], [1], [0, 0, 1, 1], [], []>} : vector<16x640xbf16>, vector<640x256xbf16>, vector<16x256xf32> -> vector<16x256xf32>
    %c0_15 = arith.constant 0 : index
    %c0_16 = arith.constant 0 : index
    %20 = vector.load %arg7[%c0_15, %c0_16] : memref<1x256xf32, #tpu.memory_space<vmem>>, vector<1x256xf32>
    %21 = vector.broadcast %20 : vector<1x256xf32> to vector<16x256xf32>
    %22 = arith.addf %19, %21 : vector<16x256xf32>
    %c0_17 = arith.constant 0 : index
    %c0_18 = arith.constant 0 : index
    %23 = vector.load %arg8[%c0_17, %c0_18] : memref<16x256xf32, #tpu.memory_space<vmem>>, vector<16x256xf32>
    tpu.vector_store %arg8[%c0_17, %c0_18], %22 {strides = array<i32>} : memref<16x256xf32, #tpu.memory_space<vmem>>, vector<16x256xf32>,
    return
  }
  func.func @transform_0(%arg0: i32) -> (i32, i32) {
    %c0_i32 = arith.constant 0 : i32
    %c0_i32_0 = arith.constant 0 : i32
    return %arg0, %c0_i32 : i32, i32
  }
  func.func @transform_1(%arg0: i32) -> (i32, i32) {
    %c0_i32 = arith.constant 0 : i32
    %c0_i32_0 = arith.constant 0 : i32
    %c0_i32_1 = arith.constant 0 : i32
    return %c0_i32, %c0_i32_0 : i32, i32
  }
  func.func @transform_2(%arg0: i32) -> (i32, i32) {
    %c0_i32 = arith.constant 0 : i32
    %c0_i32_0 = arith.constant 0 : i32
    %c0_i32_1 = arith.constant 0 : i32
    return %c0_i32, %c0_i32_0 : i32, i32
  }
  func.func @transform_3(%arg0: i32) -> (i32, i32) {
    %c0_i32 = arith.constant 0 : i32
    %c0_i32_0 = arith.constant 0 : i32
    %c0_i32_1 = arith.constant 0 : i32
    return %c0_i32, %c0_i32_0 : i32, i32
  }
  func.func @transform_4(%arg0: i32) -> (i32, i32) {
    %c0_i32 = arith.constant 0 : i32
    %c0_i32_0 = arith.constant 0 : i32
    %c0_i32_1 = arith.constant 0 : i32
    return %c0_i32, %c0_i32_0 : i32, i32
  }
  func.func @transform_5(%arg0: i32) -> (i32, i32) {
    %c0_i32 = arith.constant 0 : i32
    %c0_i32_0 = arith.constant 0 : i32
    %c0_i32_1 = arith.constant 0 : i32
    return %c0_i32, %c0_i32_0 : i32, i32
  }
  func.func @transform_6(%arg0: i32) -> (i32, i32) {
    %c0_i32 = arith.constant 0 : i32
    %c0_i32_0 = arith.constant 0 : i32
    %c0_i32_1 = arith.constant 0 : i32
    return %c0_i32, %c0_i32_0 : i32, i32
  }
  func.func @transform_7(%arg0: i32) -> (i32, i32) {
    %c0_i32 = arith.constant 0 : i32
    %c0_i32_0 = arith.constant 0 : i32
    return %arg0, %c0_i32 : i32, i32
  }
}

</mosaic_0001>

<llo_original>
// kernel: conv_decoder_forward.1
$region0: #{conv_decoder_forward.1}
  #allocation0 [shape = 'u32[]', space=smem, size = 0x4, offset = 0x4, fixed_abs, tag = 'smem constant byte address 0x4 - core index']
  #allocation1 [shape = 'u32[144,128]{1,0:T(1,128)}', space=vmem, size = 0x12000, scoped, tag = 'internal scratch']
  %s0 = inlined_call_operand.hbm [shape: f32[16,32], index: 0, kind: input, shape index: {}]
  %s1 = inlined_call_operand.hbm [shape: bf16[32,384], index: 1, kind: input, shape index: {}]
  %s2 = inlined_call_operand.hbm [shape: f32[1,384], index: 2, kind: input, shape index: {}]
  %s3 = inlined_call_operand.hbm [shape: bf16[384,640], index: 3, kind: input, shape index: {}]
  %s4 = inlined_call_operand.vmem [shape: f32[1,640], index: 4, kind: input, shape index: {}]
  %s5 = inlined_call_operand.hbm [shape: bf16[640,256], index: 5, kind: input, shape index: {}]
  %s6 = inlined_call_operand.vmem [shape: f32[1,256], index: 6, kind: input, shape index: {}]
  %s7 = inlined_call_operand.vmem [shape: f32[16,256], index: 7, kind: output, shape index: {}]
  %s8 = sld [smem:[#allocation0]]
  $region58: #{conv_decoder_forward.1} parent=0
    _
  %s10 = ssub.s32 1, %s8
  %s11 = scalar_select 0, %s10, %s8
  $region1: #{conv_decoder_forward.1} parent=0
    #allocation2 [shape = 'u8[8192]{0}', space=vmem, size = 0x2000, scoped, tag = 'input window, operand 0, single buffered']
    #allocation3 [shape = 's32[1]{0}', space=sflag, size = 0x4, scoped, tag = 'scoped memory for conv_decoder_forward.1']
    #allocation4 [shape = 'u8[24576]{0}', space=vmem, size = 0x6000, scoped, tag = 'input window, operand 1, single buffered']
    #allocation5 [shape = 's32[1]{0}', space=sflag, size = 0x4, scoped, tag = 'scoped memory for conv_decoder_forward.1']
    #allocation6 [shape = 'u8[1536]{0}', space=vmem, size = 0x800, scoped, tag = 'input window, operand 2, single buffered']
    #allocation7 [shape = 'u8[491520]{0}', space=vmem, size = 0x78000, scoped, tag = 'input window, operand 3, single buffered']
    #allocation8 [shape = 's32[1]{0}', space=sflag, size = 0x4, scoped, tag = 'scoped memory for conv_decoder_forward.1']
    #allocation9 [shape = 'u8[327680]{0}', space=vmem, size = 0x50000, scoped, tag = 'input window, operand 5, single buffered']
    %12 = vsyncpa [#allocation3], 0
    %13 = vsyncpa [#allocation5], 0
    %14 = vsyncpa [#allocation8], 0
    // Predicated region
    $region2: #{conv_decoder_forward.1} parent=1 // pred_check
      _
    $region3: #{conv_decoder_forward.1} parent=1 // pred_check_branch
      %16 = sbr.rel (0) target = $region5
    $region4: #{conv_decoder_forward.1} parent=1 // pred_region
      %s18 = ssub.s32 256, 256
      %19 = vsyncadd [#allocation3], %s18
      %s20 = sshll.u32 [#allocation2], 4
      %s21 = int_to_ptr.vmem [resolvable:$true] %s20
      %26 = dma.hbm_to_vmem [thread:$0]  %s0, 256, %s21, [#allocation3], 128, 128, 8
    $region5: #{conv_decoder_forward.1} parent=1 // pred_fallthru
      _
    // Predicated region
    $region6: #{conv_decoder_forward.1} parent=1 // pred_check
      _
    $region7: #{conv_decoder_forward.1} parent=1 // pred_check_branch
      %28 = sbr.rel (0) target = $region9
    $region8: #{conv_decoder_forward.1} parent=1 // pred_region
      %s30 = ssub.s32 768, 768
      %31 = vsyncadd [#allocation5], %s30
      %s32 = sshll.u32 [#allocation4], 4
      %s33 = int_to_ptr.vmem [resolvable:$true] %s32
      %38 = dma.hbm_to_vmem [thread:$0]  %s1, 768, %s33, [#allocation5], 192, 192, 12
    $region9: #{conv_decoder_forward.1} parent=1 // pred_fallthru
      _
    // Predicated region
    $region10: #{conv_decoder_forward.1} parent=1 // pred_check
      _
    $region11: #{conv_decoder_forward.1} parent=1 // pred_check_branch
      %40 = sbr.rel (0) target = $region13
    $region12: #{conv_decoder_forward.1} parent=1 // pred_region
      %s42 = ssub.s32 48, 48
      %43 = vsyncadd [#allocation5], %s42
      %s45 = sshll.u32 [#allocation6], 4
      %s46 = int_to_ptr.vmem [resolvable:$true] %s45
      %48 = dma.hbm_to_vmem [thread:$0]  %s2, 48, %s46, [#allocation5]
    $region13: #{conv_decoder_forward.1} parent=1 // pred_fallthru
      _
    // Predicated region
    $region14: #{conv_decoder_forward.1} parent=1 // pred_check
      _
    $region15: #{conv_decoder_forward.1} parent=1 // pred_check_branch
      %50 = sbr.rel (0) target = $region17
    $region16: #{conv_decoder_forward.1} parent=1 // pred_region
      %s52 = ssub.s32 15360, 15360
      %53 = vsyncadd [#allocation8], %s52
      %s54 = sshll.u32 [#allocation7], 4
      %s55 = int_to_ptr.vmem [resolvable:$true] %s54
      %60 = dma.hbm_to_vmem [thread:$0]  %s3, 15360, %s55, [#allocation8], 320, 320, 20
    $region17: #{conv_decoder_forward.1} parent=1 // pred_fallthru
      _
    // Predicated region
    $region18: #{conv_decoder_forward.1} parent=1 // pred_check
      _
    $region19: #{conv_decoder_forward.1} parent=1 // pred_check_branch
      %62 = sbr.rel (0) target = $region21
    $region20: #{conv_decoder_forward.1} parent=1 // pred_region
      _
    $region21: #{conv_decoder_forward.1} parent=1 // pred_fallthru
      _
    // Predicated region
    $region22: #{conv_decoder_forward.1} parent=1 // pred_check
      _
    $region23: #{conv_decoder_forward.1} parent=1 // pred_check_branch
      %64 = sbr.rel (0) target = $region25
    $region24: #{conv_decoder_forward.1} parent=1 // pred_region
      %s66 = ssub.s32 10240, 10240
      %67 = vsyncadd [#allocation8], %s66
      %s68 = sshll.u32 [#allocation9], 4
      %s69 = int_to_ptr.vmem [resolvable:$true] %s68
      %74 = dma.hbm_to_vmem [thread:$0]  %s5, 10240, %s69, [#allocation8], 128, 128, 8
    $region25: #{conv_decoder_forward.1} parent=1 // pred_fallthru
      _
    // Predicated region
    $region26: #{conv_decoder_forward.1} parent=1 // pred_check
      _
    $region27: #{conv_decoder_forward.1} parent=1 // pred_check_branch
      %76 = sbr.rel (0) target = $region29
    $region28: #{conv_decoder_forward.1} parent=1 // pred_region
      _
    $region29: #{conv_decoder_forward.1} parent=1 // pred_fallthru
      _
    // Predicated region
    $region30: #{conv_decoder_forward.1} parent=1 // pred_check
      _
    $region31: #{conv_decoder_forward.1} parent=1 // pred_check_branch
      %78 = sbr.rel (0) target = $region33
    $region32: #{conv_decoder_forward.1} parent=1 // pred_region
      %79 = dma.done [#allocation3], 256
    $region33: #{conv_decoder_forward.1} parent=1 // pred_fallthru
      _
    // Predicated region
    $region34: #{conv_decoder_forward.1} parent=1 // pred_check
      _
    $region35: #{conv_decoder_forward.1} parent=1 // pred_check_branch
      %81 = sbr.rel (0) target = $region37
    $region36: #{conv_decoder_forward.1} parent=1 // pred_region
      %82 = dma.done [#allocation5], 768
    $region37: #{conv_decoder_forward.1} parent=1 // pred_fallthru
      _
    // Predicated region
    $region38: #{conv_decoder_forward.1} parent=1 // pred_check
      _
    $region39: #{conv_decoder_forward.1} parent=1 // pred_check_branch
      %84 = sbr.rel (0) target = $region41
    $region40: #{conv_decoder_forward.1} parent=1 // pred_region
      %85 = dma.done [#allocation5], 48
    $region41: #{conv_decoder_forward.1} parent=1 // pred_fallthru
      _
    // Predicated region
    $region42: #{conv_decoder_forward.1} parent=1 // pred_check
      _
    $region43: #{conv_decoder_forward.1} parent=1 // pred_check_branch
      %87 = sbr.rel (0) target = $region45
    $region44: #{conv_decoder_forward.1} parent=1 // pred_region
      %88 = dma.done [#allocation8], 15360
    $region45: #{conv_decoder_forward.1} parent=1 // pred_fallthru
      _
    // Predicated region
    $region46: #{conv_decoder_forward.1} parent=1 // pred_check
      _
    $region47: #{conv_decoder_forward.1} parent=1 // pred_check_branch
      %90 = sbr.rel (0) target = $region49
    $region48: #{conv_decoder_forward.1} parent=1 // pred_region
      %91 = dma.done [#allocation8], 10240
    $region49: #{conv_decoder_forward.1} parent=1 // pred_fallthru
      _
    %v93 = vld [vmem:[#allocation2] sm:$0xff]
    %v94 = vld [vmem:[#allocation2 + $0x8] sm:$0xff]
    %v95 = vpack.c.bf16 %v94, %v93
    %v96 = vld [vmem:[#allocation4] sm:$0xff]
    %v97 = vld [vmem:[#allocation4 + $0x8] sm:$0xf]
    %v98 = vld [vmem:[#allocation4 + $0xc] sm:$0xff]
    %v99 = vld [vmem:[#allocation4 + $0x14] sm:$0xf]
    %v100 = vld [vmem:[#allocation4 + $0x18] sm:$0xff]
    %v101 = vld [vmem:[#allocation4 + $0x20] sm:$0xf]
    %v102 = vld [vmem:[#allocation4 + $0x24] sm:$0xff]
    %v103 = vld [vmem:[#allocation4 + $0x2c] sm:$0xf]
    %v104 = vld [vmem:[#allocation6] sm:$0x7]
    %v106 = vlaneseq
    %v107 = vshrl.u32 %v106, 7
    %v108 = vsub.s32 0, %v107
    %v109 = vrot.slane %v104, %v108
    %v110 = vlaneseq
    %v111 = vshrl.u32 %v110, 7
    %v112 = vsub.s32 1, %v111
    %v113 = vrot.slane %v104, %v112
    %v114 = vlaneseq
    %v115 = vshrl.u32 %v114, 7
    %v116 = vsub.s32 2, %v115
    %v117 = vrot.slane %v104, %v116
    %v129 = vunpack.c.l.b16 %v96
    %v130 = vunpack.c.h.b16 %v96
    %v131 = vunpack.c.l.b16 %v97
    %v132 = vunpack.c.l.b16 %v98
    %v133 = vunpack.c.h.b16 %v98
    %v134 = vunpack.c.l.b16 %v99
    %v135 = vunpack.c.l.b16 %v100
    %v136 = vunpack.c.h.b16 %v100
    %v137 = vunpack.c.l.b16 %v101
    %v138 = vunpack.c.l.b16 %v102
    %v139 = vunpack.c.h.b16 %v102
    %v140 = vunpack.c.l.b16 %v103
    %v141 = vpack.c.b16 %v132, %v129
    %v142 = vpack.c.b16 %v133, %v130
    %v143 = vpack.c.b16 %v134, %v131
    %v144 = vpack.c.b16 %v138, %v135
    %v145 = vpack.c.b16 %v139, %v136
    %v146 = vpack.c.b16 %v140, %v137
    %vm153 = vcmask 261120
    %v155 = vsel %vm153, %v95, 0
    %157 = vmatprep.subr.bf16.mxu0 0
    %158 = vmatpush1.bf16.msra.mxu0 0
    %159 = vmatprep.subr.bf16.mxu0 0
    %160 = vmatpush1.bf16.msra.mxu0 0
    %161 = vmatprep.subr.bf16.mxu0 0
    %162 = vmatpush1.bf16.msra.mxu0 0
    %163 = vmatprep.subr.bf16.mxu0 0
    %164 = vmatpush1.bf16.msra.mxu0 0
    %165 = vmatprep.subr.bf16.mxu0 0
    %166 = vmatpush1.bf16.msra.mxu0 0
    %167 = vmatprep.subr.bf16.mxu0 0
    %168 = vmatpush1.bf16.msra.mxu0 0
    %169 = vmatprep.subr.bf16.mxu0 %v145
    %170 = vmatpush1.bf16.msra.mxu0 %v144
    %171 = vmatprep.subr.bf16.mxu0 %v142
    %172 = vmatpush1.bf16.msra.mxu0 %v141
    %173 = vmatprep.subr.bf16.mxu0 0
    %174 = vmatpush2.bf16.msra.mxu0 0
    %175 = vmatprep.subr.bf16.mxu0 0
    %176 = vmatpush2.bf16.msra.mxu0 0
    %177 = vmatprep.subr.bf16.mxu0 0
    %178 = vmatpush2.bf16.msra.mxu0 0
    %179 = vmatprep.subr.bf16.mxu0 0
    %180 = vmatpush2.bf16.msra.mxu0 0
    %181 = vmatprep.subr.bf16.mxu0 0
    %182 = vmatpush2.bf16.msra.mxu0 0
    %183 = vmatprep.subr.bf16.mxu0 0
    %184 = vmatpush2.bf16.msra.mxu0 0
    %185 = vmatprep.subr.bf16.mxu0 0
    %186 = vmatpush2.bf16.msra.mxu0 0
    %187 = vmatprep.subr.bf16.mxu0 0
    %188 = vmatpush2.bf16.msra.mxu0 0
    %189 = vmatprep.mubr.bf16.mxu0 0
    %190 = vmatmul.mubr.bf16.gmra.mxu0 %v155
    %v191 = vpop.f32.mrf.mxu0
    %v192 = vadd.f32 %v109, %v191
    %v193 = vpop.f32.mrf.mxu0
    %v194 = vadd.f32 %v113, %v193
    %v195 = vpop.f32.mrf.mxu0
    %v196 = vadd.f32 %v109, %v195
    %v197 = vpop.f32.mrf.mxu0
    %v198 = vadd.f32 %v113, %v197
    %199 = vdwg.mxu0
    %200 = vmatprep.subr.bf16.mxu0 0
    %201 = vmatpush1.bf16.msra.mxu0 0
    %202 = vmatprep.subr.bf16.mxu0 0
    %203 = vmatpush1.bf16.msra.mxu0 0
    %204 = vmatprep.subr.bf16.mxu0 0
    %205 = vmatpush1.bf16.msra.mxu0 0
    %206 = vmatprep.subr.bf16.mxu0 0
    %207 = vmatpush1.bf16.msra.mxu0 0
    %208 = vmatprep.subr.bf16.mxu0 0
    %209 = vmatpush1.bf16.msra.mxu0 0
    %210 = vmatprep.subr.bf16.mxu0 0
    %211 = vmatpush1.bf16.msra.mxu0 0
    %212 = vmatprep.subr.bf16.mxu0 0
    %213 = vmatpush1.bf16.msra.mxu0 %v146
    %214 = vmatprep.subr.bf16.mxu0 0
    %215 = vmatpush1.bf16.msra.mxu0 %v143
    %216 = vmatprep.subr.bf16.mxu0 0
    %217 = vmatpush2.bf16.msra.mxu0 0
    %218 = vmatprep.subr.bf16.mxu0 0
    %219 = vmatpush2.bf16.msra.mxu0 0
    %220 = vmatprep.subr.bf16.mxu0 0
    %221 = vmatpush2.bf16.msra.mxu0 0
    %222 = vmatprep.subr.bf16.mxu0 0
    %223 = vmatpush2.bf16.msra.mxu0 0
    %224 = vmatprep.subr.bf16.mxu0 0
    %225 = vmatpush2.bf16.msra.mxu0 0
    %226 = vmatprep.subr.bf16.mxu0 0
    %227 = vmatpush2.bf16.msra.mxu0 0
    %228 = vmatprep.subr.bf16.mxu0 0
    %229 = vmatpush2.bf16.msra.mxu0 0
    %230 = vmatprep.subr.bf16.mxu0 0
    %231 = vmatpush2.bf16.msra.mxu0 0
    %232 = vmatprep.mubr.bf16.mxu0 0
    %233 = vmatmul.mubr.bf16.gmra.mxu0 %v155
    %v234 = vpop.f32.mrf.mxu0
    %v235 = vadd.f32 %v117, %v234
    %v236 = vpop.f32.mrf.mxu0
    %v237 = vpop.f32.mrf.mxu0
    %v238 = vadd.f32 %v117, %v237
    %v239 = vpop.f32.mrf.mxu0
    %240 = vdwg.mxu0
    %v241 = vmax.f32 %v192, 0.0
    %v242 = vmax.f32 %v194, 0.0
    %v243 = vmax.f32 %v235, 0.0
    %v244 = vmax.f32 %v196, 0.0
    %v245 = vmax.f32 %v198, 0.0
    %v246 = vmax.f32 %v238, 0.0
    %v247 = vpack.c.bf16 %v244, %v241
    %v248 = vpack.c.bf16 %v245, %v242
    %v249 = vpack.c.bf16 %v246, %v243
    %v250 = vld [vmem:[#allocation7] sm:$0xff]
    %v251 = vld [vmem:[#allocation7 + $0x8] sm:$0xff]
    %v252 = vld [vmem:[#allocation7 + $0x10] sm:$0xf]
    %v253 = vld [vmem:[#allocation7 + $0x14] sm:$0xff]
    %v254 = vld [vmem:[#allocation7 + $0x1c] sm:$0xff]
    %v255 = vld [vmem:[#allocation7 + $0x24] sm:$0xf]
    %v256 = vld [vmem:[#allocation7 + $0x28] sm:$0xff]
    %v257 = vld [vmem:[#allocation7 + $0x30] sm:$0xff]
    %v258 = vld [vmem:[#allocation7 + $0x38] sm:$0xf]
    %v259 = vld [vmem:[#allocation7 + $0x3c] sm:$0xff]
    %v260 = vld [vmem:[#allocation7 + $0x44] sm:$0xff]
    %v261 = vld [vmem:[#allocation7 + $0x4c] sm:$0xf]
    %v262 = vld [vmem:[#allocation7 + $0x50] sm:$0xff]
    %v263 = vld [vmem:[#allocation7 + $0x58] sm:$0xff]
    %v264 = vld [vmem:[#allocation7 + $0x60] sm:$0xf]
    %v265 = vld [vmem:[#allocation7 + $0x64] sm:$0xff]
    %v266 = vld [vmem:[#allocation7 + $0x6c] sm:$0xff]
    %v267 = vld [vmem:[#allocation7 + $0x74] sm:$0xf]
    %v268 = vld [vmem:[#allocation7 + $0x78] sm:$0xff]
    %v269 = vld [vmem:[#allocation7 + $0x80] sm:$0xff]
    %v270 = vld [vmem:[#allocation7 + $0x88] sm:$0xf]
    %v271 = vld [vmem:[#allocation7 + $0x8c] sm:$0xff]
    %v272 = vld [vmem:[#allocation7 + $0x94] sm:$0xff]
    %v273 = vld [vmem:[#allocation7 + $0x9c] sm:$0xf]
    %v274 = vld [vmem:[#allocation7 + $0xa0] sm:$0xff]
    %v275 = vld [vmem:[#allocation7 + $0xa8] sm:$0xff]
    %v276 = vld [vmem:[#allocation7 + $0xb0] sm:$0xf]
    %v277 = vld [vmem:[#allocation7 + $0xb4] sm:$0xff]
    %v278 = vld [vmem:[#allocation7 + $0xbc] sm:$0xff]
    %v279 = vld [vmem:[#allocation7 + $0xc4] sm:$0xf]
    %v280 = vld [vmem:[#allocation7 + $0xc8] sm:$0xff]
    %v281 = vld [vmem:[#allocation7 + $0xd0] sm:$0xff]
    %v282 = vld [vmem:[#allocation7 + $0xd8] sm:$0xf]
    %v283 = vld [vmem:[#allocation7 + $0xdc] sm:$0xff]
    %v284 = vld [vmem:[#allocation7 + $0xe4] sm:$0xff]
    %v285 = vld [vmem:[#allocation7 + $0xec] sm:$0xf]
    %v286 = vld [vmem:[#allocation7 + $0xf0] sm:$0xff]
    %v287 = vld [vmem:[#allocation7 + $0xf8] sm:$0xff]
    %v288 = vld [vmem:[#allocation7 + $0x100] sm:$0xf]
    %v289 = vld [vmem:[#allocation7 + $0x104] sm:$0xff]
    %v290 = vld [vmem:[#allocation7 + $0x10c] sm:$0xff]
    %v291 = vld [vmem:[#allocation7 + $0x114] sm:$0xf]
    %v292 = vld [vmem:[#allocation7 + $0x118] sm:$0xff]
    %v293 = vld [vmem:[#allocation7 + $0x120] sm:$0xff]
    %v294 = vld [vmem:[#allocation7 + $0x128] sm:$0xf]
    %v295 = vld [vmem:[#allocation7 + $0x12c] sm:$0xff]
    %v296 = vld [vmem:[#allocation7 + $0x134] sm:$0xff]
    %v297 = vld [vmem:[#allocation7 + $0x13c] sm:$0xf]
    %v298 = vld [vmem:[#allocation7 + $0x140] sm:$0xff]
    %v299 = vld [vmem:[#allocation7 + $0x148] sm:$0xff]
    %v300 = vld [vmem:[#allocation7 + $0x150] sm:$0xf]
    %v301 = vld [vmem:[#allocation7 + $0x154] sm:$0xff]
    %v302 = vld [vmem:[#allocation7 + $0x15c] sm:$0xff]
    %v303 = vld [vmem:[#allocation7 + $0x164] sm:$0xf]
    %v304 = vld [vmem:[#allocation7 + $0x168] sm:$0xff]
    %v305 = vld [vmem:[#allocation7 + $0x170] sm:$0xff]
    %v306 = vld [vmem:[#allocation7 + $0x178] sm:$0xf]
    %v307 = vld [vmem:[#allocation7 + $0x17c] sm:$0xff]
    %v308 = vld [vmem:[#allocation7 + $0x184] sm:$0xff]
    %v309 = vld [vmem:[#allocation7 + $0x18c] sm:$0xf]
    %v310 = vld [vmem:[#allocation7 + $0x190] sm:$0xff]
    %v311 = vld [vmem:[#allocation7 + $0x198] sm:$0xff]
    %v312 = vld [vmem:[#allocation7 + $0x1a0] sm:$0xf]
    %v313 = vld [vmem:[#allocation7 + $0x1a4] sm:$0xff]
    %v314 = vld [vmem:[#allocation7 + $0x1ac] sm:$0xff]
    %v315 = vld [vmem:[#allocation7 + $0x1b4] sm:$0xf]
    %v316 = vld [vmem:[#allocation7 + $0x1b8] sm:$0xff]
    %v317 = vld [vmem:[#allocation7 + $0x1c0] sm:$0xff]
    %v318 = vld [vmem:[#allocation7 + $0x1c8] sm:$0xf]
    %v319 = vld [vmem:[#allocation7 + $0x1cc] sm:$0xff]
    %v320 = vld [vmem:[#allocation7 + $0x1d4] sm:$0xff]
    %v321 = vld [vmem:[#allocation7 + $0x1dc] sm:$0xf]
    %v322 = vld [vmem:[#allocation7 + $0x1e0] sm:$0xff]
    %v323 = vld [vmem:[#allocation7 + $0x1e8] sm:$0xff]
    %v324 = vld [vmem:[#allocation7 + $0x1f0] sm:$0xf]
    %v325 = vld [vmem:[#allocation7 + $0x1f4] sm:$0xff]
    %v326 = vld [vmem:[#allocation7 + $0x1fc] sm:$0xff]
    %v327 = vld [vmem:[#allocation7 + $0x204] sm:$0xf]
    %v328 = vld [vmem:[#allocation7 + $0x208] sm:$0xff]
    %v329 = vld [vmem:[#allocation7 + $0x210] sm:$0xff]
    %v330 = vld [vmem:[#allocation7 + $0x218] sm:$0xf]
    %v331 = vld [vmem:[#allocation7 + $0x21c] sm:$0xff]
    %v332 = vld [vmem:[#allocation7 + $0x224] sm:$0xff]
    %v333 = vld [vmem:[#allocation7 + $0x22c] sm:$0xf]
    %v334 = vld [vmem:[#allocation7 + $0x230] sm:$0xff]
    %v335 = vld [vmem:[#allocation7 + $0x238] sm:$0xff]
    %v336 = vld [vmem:[#allocation7 + $0x240] sm:$0xf]
    %v337 = vld [vmem:[#allocation7 + $0x244] sm:$0xff]
    %v338 = vld [vmem:[#allocation7 + $0x24c] sm:$0xff]
    %v339 = vld [vmem:[#allocation7 + $0x254] sm:$0xf]
    %v340 = vld [vmem:[#allocation7 + $0x258] sm:$0xff]
    %v341 = vld [vmem:[#allocation7 + $0x260] sm:$0xff]
    %v342 = vld [vmem:[#allocation7 + $0x268] sm:$0xf]
    %v343 = vld [vmem:[#allocation7 + $0x26c] sm:$0xff]
    %v344 = vld [vmem:[#allocation7 + $0x274] sm:$0xff]
    %v345 = vld [vmem:[#allocation7 + $0x27c] sm:$0xf]
    %v346 = vld [vmem:[#allocation7 + $0x280] sm:$0xff]
    %v347 = vld [vmem:[#allocation7 + $0x288] sm:$0xff]
    %v348 = vld [vmem:[#allocation7 + $0x290] sm:$0xf]
    %v349 = vld [vmem:[#allocation7 + $0x294] sm:$0xff]
    %v350 = vld [vmem:[#allocation7 + $0x29c] sm:$0xff]
    %v351 = vld [vmem:[#allocation7 + $0x2a4] sm:$0xf]
    %v352 = vld [vmem:[#allocation7 + $0x2a8] sm:$0xff]
    %v353 = vld [vmem:[#allocation7 + $0x2b0] sm:$0xff]
    %v354 = vld [vmem:[#allocation7 + $0x2b8] sm:$0xf]
    %v355 = vld [vmem:[#allocation7 + $0x2bc] sm:$0xff]
    %v356 = vld [vmem:[#allocation7 + $0x2c4] sm:$0xff]
    %v357 = vld [vmem:[#allocation7 + $0x2cc] sm:$0xf]
    %v358 = vld [vmem:[#allocation7 + $0x2d0] sm:$0xff]
    %v359 = vld [vmem:[#allocation7 + $0x2d8] sm:$0xff]
    %v360 = vld [vmem:[#allocation7 + $0x2e0] sm:$0xf]
    %v361 = vld [vmem:[#allocation7 + $0x2e4] sm:$0xff]
    %v362 = vld [vmem:[#allocation7 + $0x2ec] sm:$0xff]
    %v363 = vld [vmem:[#allocation7 + $0x2f4] sm:$0xf]
    %v364 = vld [vmem:[#allocation7 + $0x2f8] sm:$0xff]
    %v365 = vld [vmem:[#allocation7 + $0x300] sm:$0xff]
    %v366 = vld [vmem:[#allocation7 + $0x308] sm:$0xf]
    %v367 = vld [vmem:[#allocation7 + $0x30c] sm:$0xff]
    %v368 = vld [vmem:[#allocation7 + $0x314] sm:$0xff]
    %v369 = vld [vmem:[#allocation7 + $0x31c] sm:$0xf]
    %v370 = vld [vmem:[#allocation7 + $0x320] sm:$0xff]
    %v371 = vld [vmem:[#allocation7 + $0x328] sm:$0xff]
    %v372 = vld [vmem:[#allocation7 + $0x330] sm:$0xf]
    %v373 = vld [vmem:[#allocation7 + $0x334] sm:$0xff]
    %v374 = vld [vmem:[#allocation7 + $0x33c] sm:$0xff]
    %v375 = vld [vmem:[#allocation7 + $0x344] sm:$0xf]
    %v376 = vld [vmem:[#allocation7 + $0x348] sm:$0xff]
    %v377 = vld [vmem:[#allocation7 + $0x350] sm:$0xff]
    %v378 = vld [vmem:[#allocation7 + $0x358] sm:$0xf]
    %v379 = vld [vmem:[#allocation7 + $0x35c] sm:$0xff]
    %v380 = vld [vmem:[#allocation7 + $0x364] sm:$0xff]
    %v381 = vld [vmem:[#allocation7 + $0x36c] sm:$0xf]
    %v382 = vld [vmem:[#allocation7 + $0x370] sm:$0xff]
    %v383 = vld [vmem:[#allocation7 + $0x378] sm:$0xff]
    %v384 = vld [vmem:[#allocation7 + $0x380] sm:$0xf]
    %v385 = vld [vmem:[#allocation7 + $0x384] sm:$0xff]
    %v386 = vld [vmem:[#allocation7 + $0x38c] sm:$0xff]
    %v387 = vld [vmem:[#allocation7 + $0x394] sm:$0xf]
    %v388 = vld [vmem:[#allocation7 + $0x398] sm:$0xff]
    %v389 = vld [vmem:[#allocation7 + $0x3a0] sm:$0xff]
    %v390 = vld [vmem:[#allocation7 + $0x3a8] sm:$0xf]
    %v391 = vld [vmem:[#allocation7 + $0x3ac] sm:$0xff]
    %v392 = vld [vmem:[#allocation7 + $0x3b4] sm:$0xff]
    %v393 = vld [vmem:[#allocation7 + $0x3bc] sm:$0xf]
    %v394 = vld [vmem:[%s4] sm:$0x1f]
    %v396 = vlaneseq
    %v397 = vshrl.u32 %v396, 7
    %v398 = vsub.s32 0, %v397
    %v399 = vrot.slane %v394, %v398
    %v400 = vlaneseq
    %v401 = vshrl.u32 %v400, 7
    %v402 = vsub.s32 1, %v401
    %v403 = vrot.slane %v394, %v402
    %v404 = vlaneseq
    %v405 = vshrl.u32 %v404, 7
    %v406 = vsub.s32 2, %v405
    %v407 = vrot.slane %v394, %v406
    %v408 = vlaneseq
    %v409 = vshrl.u32 %v408, 7
    %v410 = vsub.s32 3, %v409
    %v411 = vrot.slane %v394, %v410
    %v412 = vlaneseq
    %v413 = vshrl.u32 %v412, 7
    %v414 = vsub.s32 4, %v413
    %v415 = vrot.slane %v394, %v414
    %v565 = vunpack.c.l.b16 %v250
    %v566 = vunpack.c.h.b16 %v250
    %v567 = vunpack.c.l.b16 %v251
    %v568 = vunpack.c.h.b16 %v251
    %v569 = vunpack.c.l.b16 %v252
    %v570 = vunpack.c.l.b16 %v253
    %v571 = vunpack.c.h.b16 %v253
    %v572 = vunpack.c.l.b16 %v254
    %v573 = vunpack.c.h.b16 %v254
    %v574 = vunpack.c.l.b16 %v255
    %v575 = vunpack.c.l.b16 %v256
    %v576 = vunpack.c.h.b16 %v256
    %v577 = vunpack.c.l.b16 %v257
    %v578 = vunpack.c.h.b16 %v257
    %v579 = vunpack.c.l.b16 %v258
    %v580 = vunpack.c.l.b16 %v259
    %v581 = vunpack.c.h.b16 %v259
    %v582 = vunpack.c.l.b16 %v260
    %v583 = vunpack.c.h.b16 %v260
    %v584 = vunpack.c.l.b16 %v261
    %v585 = vunpack.c.l.b16 %v262
    %v586 = vunpack.c.h.b16 %v262
    %v587 = vunpack.c.l.b16 %v263
    %v588 = vunpack.c.h.b16 %v263
    %v589 = vunpack.c.l.b16 %v264
    %v590 = vunpack.c.l.b16 %v265
    %v591 = vunpack.c.h.b16 %v265
    %v592 = vunpack.c.l.b16 %v266
    %v593 = vunpack.c.h.b16 %v266
    %v594 = vunpack.c.l.b16 %v267
    %v595 = vunpack.c.l.b16 %v268
    %v596 = vunpack.c.h.b16 %v268
    %v597 = vunpack.c.l.b16 %v269
    %v598 = vunpack.c.h.b16 %v269
    %v599 = vunpack.c.l.b16 %v270
    %v600 = vunpack.c.l.b16 %v271
    %v601 = vunpack.c.h.b16 %v271
    %v602 = vunpack.c.l.b16 %v272
    %v603 = vunpack.c.h.b16 %v272
    %v604 = vunpack.c.l.b16 %v273
    %v605 = vunpack.c.l.b16 %v274
    %v606 = vunpack.c.h.b16 %v274
    %v607 = vunpack.c.l.b16 %v275
    %v608 = vunpack.c.h.b16 %v275
    %v609 = vunpack.c.l.b16 %v276
    %v610 = vunpack.c.l.b16 %v277
    %v611 = vunpack.c.h.b16 %v277
    %v612 = vunpack.c.l.b16 %v278
    %v613 = vunpack.c.h.b16 %v278
    %v614 = vunpack.c.l.b16 %v279
    %v615 = vunpack.c.l.b16 %v280
    %v616 = vunpack.c.h.b16 %v280
    %v617 = vunpack.c.l.b16 %v281
    %v618 = vunpack.c.h.b16 %v281
    %v619 = vunpack.c.l.b16 %v282
    %v620 = vunpack.c.l.b16 %v283
    %v621 = vunpack.c.h.b16 %v283
    %v622 = vunpack.c.l.b16 %v284
    %v623 = vunpack.c.h.b16 %v284
    %v624 = vunpack.c.l.b16 %v285
    %v625 = vunpack.c.l.b16 %v286
    %v626 = vunpack.c.h.b16 %v286
    %v627 = vunpack.c.l.b16 %v287
    %v628 = vunpack.c.h.b16 %v287
    %v629 = vunpack.c.l.b16 %v288
    %v630 = vunpack.c.l.b16 %v289
    %v631 = vunpack.c.h.b16 %v289
    %v632 = vunpack.c.l.b16 %v290
    %v633 = vunpack.c.h.b16 %v290
    %v634 = vunpack.c.l.b16 %v291
    %v635 = vunpack.c.l.b16 %v292
    %v636 = vunpack.c.h.b16 %v292
    %v637 = vunpack.c.l.b16 %v293
    %v638 = vunpack.c.h.b16 %v293
    %v639 = vunpack.c.l.b16 %v294
    %v640 = vunpack.c.l.b16 %v295
    %v641 = vunpack.c.h.b16 %v295
    %v642 = vunpack.c.l.b16 %v296
    %v643 = vunpack.c.h.b16 %v296
    %v644 = vunpack.c.l.b16 %v297
    %v645 = vunpack.c.l.b16 %v298
    %v646 = vunpack.c.h.b16 %v298
    %v647 = vunpack.c.l.b16 %v299
    %v648 = vunpack.c.h.b16 %v299
    %v649 = vunpack.c.l.b16 %v300
    %v650 = vunpack.c.l.b16 %v301
    %v651 = vunpack.c.h.b16 %v301
    %v652 = vunpack.c.l.b16 %v302
    %v653 = vunpack.c.h.b16 %v302
    %v654 = vunpack.c.l.b16 %v303
    %v655 = vunpack.c.l.b16 %v304
    %v656 = vunpack.c.h.b16 %v304
    %v657 = vunpack.c.l.b16 %v305
    %v658 = vunpack.c.h.b16 %v305
    %v659 = vunpack.c.l.b16 %v306
    %v660 = vunpack.c.l.b16 %v307
    %v661 = vunpack.c.h.b16 %v307
    %v662 = vunpack.c.l.b16 %v308
    %v663 = vunpack.c.h.b16 %v308
    %v664 = vunpack.c.l.b16 %v309
    %v665 = vunpack.c.l.b16 %v310
    %v666 = vunpack.c.h.b16 %v310
    %v667 = vunpack.c.l.b16 %v311
    %v668 = vunpack.c.h.b16 %v311
    %v669 = vunpack.c.l.b16 %v312
    %v670 = vunpack.c.l.b16 %v313
    %v671 = vunpack.c.h.b16 %v313
    %v672 = vunpack.c.l.b16 %v314
    %v673 = vunpack.c.h.b16 %v314
    %v674 = vunpack.c.l.b16 %v315
    %v675 = vunpack.c.l.b16 %v316
    %v676 = vunpack.c.h.b16 %v316
    %v677 = vunpack.c.l.b16 %v317
    %v678 = vunpack.c.h.b16 %v317
    %v679 = vunpack.c.l.b16 %v318
    %v680 = vunpack.c.l.b16 %v319
    %v681 = vunpack.c.h.b16 %v319
    %v682 = vunpack.c.l.b16 %v320
    %v683 = vunpack.c.h.b16 %v320
    %v684 = vunpack.c.l.b16 %v321
    %v685 = vunpack.c.l.b16 %v322
    %v686 = vunpack.c.h.b16 %v322
    %v687 = vunpack.c.l.b16 %v323
    %v688 = vunpack.c.h.b16 %v323
    %v689 = vunpack.c.l.b16 %v324
    %v690 = vunpack.c.l.b16 %v325
    %v691 = vunpack.c.h.b16 %v325
    %v692 = vunpack.c.l.b16 %v326
    %v693 = vunpack.c.h.b16 %v326
    %v694 = vunpack.c.l.b16 %v327
    %v695 = vunpack.c.l.b16 %v328
    %v696 = vunpack.c.h.b16 %v328
    %v697 = vunpack.c.l.b16 %v329
    %v698 = vunpack.c.h.b16 %v329
    %v699 = vunpack.c.l.b16 %v330
    %v700 = vunpack.c.l.b16 %v331
    %v701 = vunpack.c.h.b16 %v331
    %v702 = vunpack.c.l.b16 %v332
    %v703 = vunpack.c.h.b16 %v332
    %v704 = vunpack.c.l.b16 %v333
    %v705 = vunpack.c.l.b16 %v334
    %v706 = vunpack.c.h.b16 %v334
    %v707 = vunpack.c.l.b16 %v335
    %v708 = vunpack.c.h.b16 %v335
    %v709 = vunpack.c.l.b16 %v336
    %v710 = vunpack.c.l.b16 %v337
    %v711 = vunpack.c.h.b16 %v337
    %v712 = vunpack.c.l.b16 %v338
    %v713 = vunpack.c.h.b16 %v338
    %v714 = vunpack.c.l.b16 %v339
    %v715 = vunpack.c.l.b16 %v340
    %v716 = vunpack.c.h.b16 %v340
    %v717 = vunpack.c.l.b16 %v341
    %v718 = vunpack.c.h.b16 %v341
    %v719 = vunpack.c.l.b16 %v342
    %v720 = vunpack.c.l.b16 %v343
    %v721 = vunpack.c.h.b16 %v343
    %v722 = vunpack.c.l.b16 %v344
    %v723 = vunpack.c.h.b16 %v344
    %v724 = vunpack.c.l.b16 %v345
    %v725 = vunpack.c.l.b16 %v346
    %v726 = vunpack.c.h.b16 %v346
    %v727 = vunpack.c.l.b16 %v347
    %v728 = vunpack.c.h.b16 %v347
    %v729 = vunpack.c.l.b16 %v348
    %v730 = vunpack.c.l.b16 %v349
    %v731 = vunpack.c.h.b16 %v349
    %v732 = vunpack.c.l.b16 %v350
    %v733 = vunpack.c.h.b16 %v350
    %v734 = vunpack.c.l.b16 %v351
    %v735 = vunpack.c.l.b16 %v352
    %v736 = vunpack.c.h.b16 %v352
    %v737 = vunpack.c.l.b16 %v353
    %v738 = vunpack.c.h.b16 %v353
    %v739 = vunpack.c.l.b16 %v354
    %v740 = vunpack.c.l.b16 %v355
    %v741 = vunpack.c.h.b16 %v355
    %v742 = vunpack.c.l.b16 %v356
    %v743 = vunpack.c.h.b16 %v356
    %v744 = vunpack.c.l.b16 %v357
    %v745 = vunpack.c.l.b16 %v358
    %v746 = vunpack.c.h.b16 %v358
    %v747 = vunpack.c.l.b16 %v359
    %v748 = vunpack.c.h.b16 %v359
    %v749 = vunpack.c.l.b16 %v360
    %v750 = vunpack.c.l.b16 %v361
    %v751 = vunpack.c.h.b16 %v361
    %v752 = vunpack.c.l.b16 %v362
    %v753 = vunpack.c.h.b16 %v362
    %v754 = vunpack.c.l.b16 %v363
    %v755 = vunpack.c.l.b16 %v364
    %v756 = vunpack.c.h.b16 %v364
    %v757 = vunpack.c.l.b16 %v365
    %v758 = vunpack.c.h.b16 %v365
    %v759 = vunpack.c.l.b16 %v366
    %v760 = vunpack.c.l.b16 %v367
    %v761 = vunpack.c.h.b16 %v367
    %v762 = vunpack.c.l.b16 %v368
    %v763 = vunpack.c.h.b16 %v368
    %v764 = vunpack.c.l.b16 %v369
    %v765 = vunpack.c.l.b16 %v370
    %v766 = vunpack.c.h.b16 %v370
    %v767 = vunpack.c.l.b16 %v371
    %v768 = vunpack.c.h.b16 %v371
    %v769 = vunpack.c.l.b16 %v372
    %v770 = vunpack.c.l.b16 %v373
    %v771 = vunpack.c.h.b16 %v373
    %v772 = vunpack.c.l.b16 %v374
    %v773 = vunpack.c.h.b16 %v374
    %v774 = vunpack.c.l.b16 %v375
    %v775 = vunpack.c.l.b16 %v376
    %v776 = vunpack.c.h.b16 %v376
    %v777 = vunpack.c.l.b16 %v377
    %v778 = vunpack.c.h.b16 %v377
    %v779 = vunpack.c.l.b16 %v378
    %v780 = vunpack.c.l.b16 %v379
    %v781 = vunpack.c.h.b16 %v379
    %v782 = vunpack.c.l.b16 %v380
    %v783 = vunpack.c.h.b16 %v380
    %v784 = vunpack.c.l.b16 %v381
    %v785 = vunpack.c.l.b16 %v382
    %v786 = vunpack.c.h.b16 %v382
    %v787 = vunpack.c.l.b16 %v383
    %v788 = vunpack.c.h.b16 %v383
    %v789 = vunpack.c.l.b16 %v384
    %v790 = vunpack.c.l.b16 %v385
    %v791 = vunpack.c.h.b16 %v385
    %v792 = vunpack.c.l.b16 %v386
    %v793 = vunpack.c.h.b16 %v386
    %v794 = vunpack.c.l.b16 %v387
    %v795 = vunpack.c.l.b16 %v388
    %v796 = vunpack.c.h.b16 %v388
    %v797 = vunpack.c.l.b16 %v389
    %v798 = vunpack.c.h.b16 %v389
    %v799 = vunpack.c.l.b16 %v390
    %v800 = vunpack.c.l.b16 %v391
    %v801 = vunpack.c.h.b16 %v391
    %v802 = vunpack.c.l.b16 %v392
    %v803 = vunpack.c.h.b16 %v392
    %v804 = vunpack.c.l.b16 %v393
    %v805 = vpack.c.b16 %v570, %v565
    %v806 = vpack.c.b16 %v571, %v566
    %v807 = vpack.c.b16 %v572, %v567
    %v808 = vpack.c.b16 %v573, %v568
    %v809 = vpack.c.b16 %v574, %v569
    %v810 = vpack.c.b16 %v580, %v575
    %v811 = vpack.c.b16 %v581, %v576
    %v812 = vpack.c.b16 %v582, %v577
    %v813 = vpack.c.b16 %v583, %v578
    %v814 = vpack.c.b16 %v584, %v579
    %v815 = vpack.c.b16 %v590, %v585
    %v816 = vpack.c.b16 %v591, %v586
    %v817 = vpack.c.b16 %v592, %v587
    %v818 = vpack.c.b16 %v593, %v588
    %v819 = vpack.c.b16 %v594, %v589
    %v820 = vpack.c.b16 %v600, %v595
    %v821 = vpack.c.b16 %v601, %v596
    %v822 = vpack.c.b16 %v602, %v597
    %v823 = vpack.c.b16 %v603, %v598
    %v824 = vpack.c.b16 %v604, %v599
    %v825 = vpack.c.b16 %v610, %v605
    %v826 = vpack.c.b16 %v611, %v606
    %v827 = vpack.c.b16 %v612, %v607
    %v828 = vpack.c.b16 %v613, %v608
    %v829 = vpack.c.b16 %v614, %v609
    %v830 = vpack.c.b16 %v620, %v615
    %v831 = vpack.c.b16 %v621, %v616
    %v832 = vpack.c.b16 %v622, %v617
    %v833 = vpack.c.b16 %v623, %v618
    %v834 = vpack.c.b16 %v624, %v619
    %v835 = vpack.c.b16 %v630, %v625
    %v836 = vpack.c.b16 %v631, %v626
    %v837 = vpack.c.b16 %v632, %v627
    %v838 = vpack.c.b16 %v633, %v628
    %v839 = vpack.c.b16 %v634, %v629
    %v840 = vpack.c.b16 %v640, %v635
    %v841 = vpack.c.b16 %v641, %v636
    %v842 = vpack.c.b16 %v642, %v637
    %v843 = vpack.c.b16 %v643, %v638
    %v844 = vpack.c.b16 %v644, %v639
    %v845 = vpack.c.b16 %v650, %v645
    %v846 = vpack.c.b16 %v651, %v646
    %v847 = vpack.c.b16 %v652, %v647
    %v848 = vpack.c.b16 %v653, %v648
    %v849 = vpack.c.b16 %v654, %v649
    %v850 = vpack.c.b16 %v660, %v655
    %v851 = vpack.c.b16 %v661, %v656
    %v852 = vpack.c.b16 %v662, %v657
    %v853 = vpack.c.b16 %v663, %v658
    %v854 = vpack.c.b16 %v664, %v659
    %v855 = vpack.c.b16 %v670, %v665
    %v856 = vpack.c.b16 %v671, %v666
    %v857 = vpack.c.b16 %v672, %v667
    %v858 = vpack.c.b16 %v673, %v668
    %v859 = vpack.c.b16 %v674, %v669
    %v860 = vpack.c.b16 %v680, %v675
    %v861 = vpack.c.b16 %v681, %v676
    %v862 = vpack.c.b16 %v682, %v677
    %v863 = vpack.c.b16 %v683, %v678
    %v864 = vpack.c.b16 %v684, %v679
    %v865 = vpack.c.b16 %v690, %v685
    %v866 = vpack.c.b16 %v691, %v686
    %v867 = vpack.c.b16 %v692, %v687
    %v868 = vpack.c.b16 %v693, %v688
    %v869 = vpack.c.b16 %v694, %v689
    %v870 = vpack.c.b16 %v700, %v695
    %v871 = vpack.c.b16 %v701, %v696
    %v872 = vpack.c.b16 %v702, %v697
    %v873 = vpack.c.b16 %v703, %v698
    %v874 = vpack.c.b16 %v704, %v699
    %v875 = vpack.c.b16 %v710, %v705
    %v876 = vpack.c.b16 %v711, %v706
    %v877 = vpack.c.b16 %v712, %v707
    %v878 = vpack.c.b16 %v713, %v708
    %v879 = vpack.c.b16 %v714, %v709
    %v880 = vpack.c.b16 %v720, %v715
    %v881 = vpack.c.b16 %v721, %v716
    %v882 = vpack.c.b16 %v722, %v717
    %v883 = vpack.c.b16 %v723, %v718
    %v884 = vpack.c.b16 %v724, %v719
    %v885 = vpack.c.b16 %v730, %v725
    %v886 = vpack.c.b16 %v731, %v726
    %v887 = vpack.c.b16 %v732, %v727
    %v888 = vpack.c.b16 %v733, %v728
    %v889 = vpack.c.b16 %v734, %v729
    %v890 = vpack.c.b16 %v740, %v735
    %v891 = vpack.c.b16 %v741, %v736
    %v892 = vpack.c.b16 %v742, %v737
    %v893 = vpack.c.b16 %v743, %v738
    %v894 = vpack.c.b16 %v744, %v739
    %v895 = vpack.c.b16 %v750, %v745
    %v896 = vpack.c.b16 %v751, %v746
    %v897 = vpack.c.b16 %v752, %v747
    %v898 = vpack.c.b16 %v753, %v748
    %v899 = vpack.c.b16 %v754, %v749
    %v900 = vpack.c.b16 %v760, %v755
    %v901 = vpack.c.b16 %v761, %v756
    %v902 = vpack.c.b16 %v762, %v757
    %v903 = vpack.c.b16 %v763, %v758
    %v904 = vpack.c.b16 %v764, %v759
    %v905 = vpack.c.b16 %v770, %v765
    %v906 = vpack.c.b16 %v771, %v766
    %v907 = vpack.c.b16 %v772, %v767
    %v908 = vpack.c.b16 %v773, %v768
    %v909 = vpack.c.b16 %v774, %v769
    %v910 = vpack.c.b16 %v780, %v775
    %v911 = vpack.c.b16 %v781, %v776
    %v912 = vpack.c.b16 %v782, %v777
    %v913 = vpack.c.b16 %v783, %v778
    %v914 = vpack.c.b16 %v784, %v779
    %v915 = vpack.c.b16 %v790, %v785
    %v916 = vpack.c.b16 %v791, %v786
    %v917 = vpack.c.b16 %v792, %v787
    %v918 = vpack.c.b16 %v793, %v788
    %v919 = vpack.c.b16 %v794, %v789
    %v920 = vpack.c.b16 %v800, %v795
    %v921 = vpack.c.b16 %v801, %v796
    %v922 = vpack.c.b16 %v802, %v797
    %v923 = vpack.c.b16 %v803, %v798
    %v924 = vpack.c.b16 %v804, %v799
    %1045 = vmatprep.subr.bf16.mxu0 %v841
    %1046 = vmatpush1.bf16.msra.mxu0 %v840
    %1047 = vmatprep.subr.bf16.mxu0 %v836
    %1048 = vmatpush1.bf16.msra.mxu0 %v835
    %1049 = vmatprep.subr.bf16.mxu0 %v831
    %1050 = vmatpush1.bf16.msra.mxu0 %v830
    %1051 = vmatprep.subr.bf16.mxu0 %v826
    %1052 = vmatpush1.bf16.msra.mxu0 %v825
    %1053 = vmatprep.subr.bf16.mxu0 %v821
    %1054 = vmatpush1.bf16.msra.mxu0 %v820
    %1055 = vmatprep.subr.bf16.mxu0 %v816
    %1056 = vmatpush1.bf16.msra.mxu0 %v815
    %1057 = vmatprep.subr.bf16.mxu0 %v811
    %1058 = vmatpush1.bf16.msra.mxu0 %v810
    %1059 = vmatprep.subr.bf16.mxu0 %v806
    %1060 = vmatpush1.bf16.msra.mxu0 %v805
    %1061 = vmatprep.subr.bf16.mxu0 %v881
    %1062 = vmatpush2.bf16.msra.mxu0 %v880
    %1063 = vmatprep.subr.bf16.mxu0 %v876
    %1064 = vmatpush2.bf16.msra.mxu0 %v875
    %1065 = vmatprep.subr.bf16.mxu0 %v871
    %1066 = vmatpush2.bf16.msra.mxu0 %v870
    %1067 = vmatprep.subr.bf16.mxu0 %v866
    %1068 = vmatpush2.bf16.msra.mxu0 %v865
    %1069 = vmatprep.subr.bf16.mxu0 %v861
    %1070 = vmatpush2.bf16.msra.mxu0 %v860
    %1071 = vmatprep.subr.bf16.mxu0 %v856
    %1072 = vmatpush2.bf16.msra.mxu0 %v855
    %1073 = vmatprep.subr.bf16.mxu0 %v851
    %1074 = vmatpush2.bf16.msra.mxu0 %v850
    %1075 = vmatprep.subr.bf16.mxu0 %v846
    %1076 = vmatpush2.bf16.msra.mxu0 %v845
    %1077 = vmatprep.mubr.bf16.mxu0 %v248
    %1078 = vmatmul.mubr.bf16.gmra.mxu0 %v247
    %v1079 = vpop.f32.mrf.mxu0
    %v1080 = vadd.f32 %v399, %v1079
    %v1081 = vpop.f32.mrf.mxu0
    %v1082 = vadd.f32 %v403, %v1081
    %v1083 = vpop.f32.mrf.mxu0
    %v1084 = vadd.f32 %v399, %v1083
    %v1085 = vpop.f32.mrf.mxu0
    %v1086 = vadd.f32 %v403, %v1085
    %1087 = vdwg.mxu0
    %1088 = vmatprep.subr.bf16.mxu0 %v921
    %1089 = vmatpush1.bf16.msra.mxu0 %v920
    %1090 = vmatprep.subr.bf16.mxu0 %v916
    %1091 = vmatpush1.bf16.msra.mxu0 %v915
    %1092 = vmatprep.subr.bf16.mxu0 %v911
    %1093 = vmatpush1.bf16.msra.mxu0 %v910
    %1094 = vmatprep.subr.bf16.mxu0 %v906
    %1095 = vmatpush1.bf16.msra.mxu0 %v905
    %1096 = vmatprep.subr.bf16.mxu0 %v901
    %1097 = vmatpush1.bf16.msra.mxu0 %v900
    %1098 = vmatprep.subr.bf16.mxu0 %v896
    %1099 = vmatpush1.bf16.msra.mxu0 %v895
    %1100 = vmatprep.subr.bf16.mxu0 %v891
    %1101 = vmatpush1.bf16.msra.mxu0 %v890
    %1102 = vmatprep.subr.bf16.mxu0 %v886
    %1103 = vmatpush1.bf16.msra.mxu0 %v885
    %1104 = vmatprep.subr.bf16.mxu0 0
    %1105 = vmatpush2.bf16.msra.mxu0 0
    %1106 = vmatprep.subr.bf16.mxu0 0
    %1107 = vmatpush2.bf16.msra.mxu0 0
    %1108 = vmatprep.subr.bf16.mxu0 0
    %1109 = vmatpush2.bf16.msra.mxu0 0
    %1110 = vmatprep.subr.bf16.mxu0 0
    %1111 = vmatpush2.bf16.msra.mxu0 0
    %1112 = vmatprep.subr.bf16.mxu0 0
    %1113 = vmatpush2.bf16.msra.mxu0 0
    %1114 = vmatprep.subr.bf16.mxu0 0
    %1115 = vmatpush2.bf16.msra.mxu0 0
    %1116 = vmatprep.subr.bf16.mxu0 0
    %1117 = vmatpush2.bf16.msra.mxu0 0
    %1118 = vmatprep.subr.bf16.mxu0 0
    %1119 = vmatpush2.bf16.msra.mxu0 0
    %1120 = vmatprep.mubr.bf16.mxu0 0
    %1121 = vmatmul.mubr.bf16.gmra.mxu0 %v249
    %v1122 = vpop.f32.mrf.mxu0
    %v1123 = vadd.f32 %v1080, %v1122
    %v1124 = vpop.f32.mrf.mxu0
    %v1125 = vadd.f32 %v1082, %v1124
    %v1126 = vpop.f32.mrf.mxu0
    %v1127 = vadd.f32 %v1084, %v1126
    %v1128 = vpop.f32.mrf.mxu0
    %v1129 = vadd.f32 %v1086, %v1128
    %1130 = vdwg.mxu0
    %1131 = vmatprep.subr.bf16.mxu0 %v843
    %1132 = vmatpush1.bf16.msra.mxu0 %v842
    %1133 = vmatprep.subr.bf16.mxu0 %v838
    %1134 = vmatpush1.bf16.msra.mxu0 %v837
    %1135 = vmatprep.subr.bf16.mxu0 %v833
    %1136 = vmatpush1.bf16.msra.mxu0 %v832
    %1137 = vmatprep.subr.bf16.mxu0 %v828
    %1138 = vmatpush1.bf16.msra.mxu0 %v827
    %1139 = vmatprep.subr.bf16.mxu0 %v823
    %1140 = vmatpush1.bf16.msra.mxu0 %v822
    %1141 = vmatprep.subr.bf16.mxu0 %v818
    %1142 = vmatpush1.bf16.msra.mxu0 %v817
    %1143 = vmatprep.subr.bf16.mxu0 %v813
    %1144 = vmatpush1.bf16.msra.mxu0 %v812
    %1145 = vmatprep.subr.bf16.mxu0 %v808
    %1146 = vmatpush1.bf16.msra.mxu0 %v807
    %1147 = vmatprep.subr.bf16.mxu0 %v883
    %1148 = vmatpush2.bf16.msra.mxu0 %v882
    %1149 = vmatprep.subr.bf16.mxu0 %v878
    %1150 = vmatpush2.bf16.msra.mxu0 %v877
    %1151 = vmatprep.subr.bf16.mxu0 %v873
    %1152 = vmatpush2.bf16.msra.mxu0 %v872
    %1153 = vmatprep.subr.bf16.mxu0 %v868
    %1154 = vmatpush2.bf16.msra.mxu0 %v867
    %1155 = vmatprep.subr.bf16.mxu0 %v863
    %1156 = vmatpush2.bf16.msra.mxu0 %v862
    %1157 = vmatprep.subr.bf16.mxu0 %v858
    %1158 = vmatpush2.bf16.msra.mxu0 %v857
    %1159 = vmatprep.subr.bf16.mxu0 %v853
    %1160 = vmatpush2.bf16.msra.mxu0 %v852
    %1161 = vmatprep.subr.bf16.mxu0 %v848
    %1162 = vmatpush2.bf16.msra.mxu0 %v847
    %1163 = vmatprep.mubr.bf16.mxu0 %v248
    %1164 = vmatmul.mubr.bf16.gmra.mxu0 %v247
    %v1165 = vpop.f32.mrf.mxu0
    %v1166 = vadd.f32 %v407, %v1165
    %v1167 = vpop.f32.mrf.mxu0
    %v1168 = vadd.f32 %v411, %v1167
    %v1169 = vpop.f32.mrf.mxu0
    %v1170 = vadd.f32 %v407, %v1169
    %v1171 = vpop.f32.mrf.mxu0
    %v1172 = vadd.f32 %v411, %v1171
    %1173 = vdwg.mxu0
    %1174 = vmatprep.subr.bf16.mxu0 %v923
    %1175 = vmatpush1.bf16.msra.mxu0 %v922
    %1176 = vmatprep.subr.bf16.mxu0 %v918
    %1177 = vmatpush1.bf16.msra.mxu0 %v917
    %1178 = vmatprep.subr.bf16.mxu0 %v913
    %1179 = vmatpush1.bf16.msra.mxu0 %v912
    %1180 = vmatprep.subr.bf16.mxu0 %v908
    %1181 = vmatpush1.bf16.msra.mxu0 %v907
    %1182 = vmatprep.subr.bf16.mxu0 %v903
    %1183 = vmatpush1.bf16.msra.mxu0 %v902
    %1184 = vmatprep.subr.bf16.mxu0 %v898
    %1185 = vmatpush1.bf16.msra.mxu0 %v897
    %1186 = vmatprep.subr.bf16.mxu0 %v893
    %1187 = vmatpush1.bf16.msra.mxu0 %v892
    %1188 = vmatprep.subr.bf16.mxu0 %v888
    %1189 = vmatpush1.bf16.msra.mxu0 %v887
    %1190 = vmatprep.subr.bf16.mxu0 0
    %1191 = vmatpush2.bf16.msra.mxu0 0
    %1192 = vmatprep.subr.bf16.mxu0 0
    %1193 = vmatpush2.bf16.msra.mxu0 0
    %1194 = vmatprep.subr.bf16.mxu0 0
    %1195 = vmatpush2.bf16.msra.mxu0 0
    %1196 = vmatprep.subr.bf16.mxu0 0
    %1197 = vmatpush2.bf16.msra.mxu0 0
    %1198 = vmatprep.subr.bf16.mxu0 0
    %1199 = vmatpush2.bf16.msra.mxu0 0
    %1200 = vmatprep.subr.bf16.mxu0 0
    %1201 = vmatpush2.bf16.msra.mxu0 0
    %1202 = vmatprep.subr.bf16.mxu0 0
    %1203 = vmatpush2.bf16.msra.mxu0 0
    %1204 = vmatprep.subr.bf16.mxu0 0
    %1205 = vmatpush2.bf16.msra.mxu0 0
    %1206 = vmatprep.mubr.bf16.mxu0 0
    %1207 = vmatmul.mubr.bf16.gmra.mxu0 %v249
    %v1208 = vpop.f32.mrf.mxu0
    %v1209 = vadd.f32 %v1166, %v1208
    %v1210 = vpop.f32.mrf.mxu0
    %v1211 = vadd.f32 %v1168, %v1210
    %v1212 = vpop.f32.mrf.mxu0
    %v1213 = vadd.f32 %v1170, %v1212
    %v1214 = vpop.f32.mrf.mxu0
    %v1215 = vadd.f32 %v1172, %v1214
    %1216 = vdwg.mxu0
    %1217 = vmatprep.subr.bf16.mxu0 0
    %1218 = vmatpush1.bf16.msra.mxu0 %v844
    %1219 = vmatprep.subr.bf16.mxu0 0
    %1220 = vmatpush1.bf16.msra.mxu0 %v839
    %1221 = vmatprep.subr.bf16.mxu0 0
    %1222 = vmatpush1.bf16.msra.mxu0 %v834
    %1223 = vmatprep.subr.bf16.mxu0 0
    %1224 = vmatpush1.bf16.msra.mxu0 %v829
    %1225 = vmatprep.subr.bf16.mxu0 0
    %1226 = vmatpush1.bf16.msra.mxu0 %v824
    %1227 = vmatprep.subr.bf16.mxu0 0
    %1228 = vmatpush1.bf16.msra.mxu0 %v819
    %1229 = vmatprep.subr.bf16.mxu0 0
    %1230 = vmatpush1.bf16.msra.mxu0 %v814
    %1231 = vmatprep.subr.bf16.mxu0 0
    %1232 = vmatpush1.bf16.msra.mxu0 %v809
    %1233 = vmatprep.subr.bf16.mxu0 0
    %1234 = vmatpush2.bf16.msra.mxu0 %v884
    %1235 = vmatprep.subr.bf16.mxu0 0
    %1236 = vmatpush2.bf16.msra.mxu0 %v879
    %1237 = vmatprep.subr.bf16.mxu0 0
    %1238 = vmatpush2.bf16.msra.mxu0 %v874
    %1239 = vmatprep.subr.bf16.mxu0 0
    %1240 = vmatpush2.bf16.msra.mxu0 %v869
    %1241 = vmatprep.subr.bf16.mxu0 0
    %1242 = vmatpush2.bf16.msra.mxu0 %v864
    %1243 = vmatprep.subr.bf16.mxu0 0
    %1244 = vmatpush2.bf16.msra.mxu0 %v859
    %1245 = vmatprep.subr.bf16.mxu0 0
    %1246 = vmatpush2.bf16.msra.mxu0 %v854
    %1247 = vmatprep.subr.bf16.mxu0 0
    %1248 = vmatpush2.bf16.msra.mxu0 %v849
    %1249 = vmatprep.mubr.bf16.mxu0 %v248
    %1250 = vmatmul.mubr.bf16.gmra.mxu0 %v247
    %v1251 = vpop.f32.mrf.mxu0
    %v1252 = vadd.f32 %v415, %v1251
    %v1253 = vpop.f32.mrf.mxu0
    %v1254 = vpop.f32.mrf.mxu0
    %v1255 = vadd.f32 %v415, %v1254
    %v1256 = vpop.f32.mrf.mxu0
    %1257 = vdwg.mxu0
    %1258 = vmatprep.subr.bf16.mxu0 0
    %1259 = vmatpush1.bf16.msra.mxu0 %v924
    %1260 = vmatprep.subr.bf16.mxu0 0
    %1261 = vmatpush1.bf16.msra.mxu0 %v919
    %1262 = vmatprep.subr.bf16.mxu0 0
    %1263 = vmatpush1.bf16.msra.mxu0 %v914
    %1264 = vmatprep.subr.bf16.mxu0 0
    %1265 = vmatpush1.bf16.msra.mxu0 %v909
    %1266 = vmatprep.subr.bf16.mxu0 0
    %1267 = vmatpush1.bf16.msra.mxu0 %v904
    %1268 = vmatprep.subr.bf16.mxu0 0
    %1269 = vmatpush1.bf16.msra.mxu0 %v899
    %1270 = vmatprep.subr.bf16.mxu0 0
    %1271 = vmatpush1.bf16.msra.mxu0 %v894
    %1272 = vmatprep.subr.bf16.mxu0 0
    %1273 = vmatpush1.bf16.msra.mxu0 %v889
    %1274 = vmatprep.subr.bf16.mxu0 0
    %1275 = vmatpush2.bf16.msra.mxu0 0
    %1276 = vmatprep.subr.bf16.mxu0 0
    %1277 = vmatpush2.bf16.msra.mxu0 0
    %1278 = vmatprep.subr.bf16.mxu0 0
    %1279 = vmatpush2.bf16.msra.mxu0 0
    %1280 = vmatprep.subr.bf16.mxu0 0
    %1281 = vmatpush2.bf16.msra.mxu0 0
    %1282 = vmatprep.subr.bf16.mxu0 0
    %1283 = vmatpush2.bf16.msra.mxu0 0
    %1284 = vmatprep.subr.bf16.mxu0 0
    %1285 = vmatpush2.bf16.msra.mxu0 0
    %1286 = vmatprep.subr.bf16.mxu0 0
    %1287 = vmatpush2.bf16.msra.mxu0 0
    %1288 = vmatprep.subr.bf16.mxu0 0
    %1289 = vmatpush2.bf16.msra.mxu0 0
    %1290 = vmatprep.mubr.bf16.mxu0 0
    %1291 = vmatmul.mubr.bf16.gmra.mxu0 %v249
    %v1292 = vpop.f32.mrf.mxu0
    %v1293 = vadd.f32 %v1252, %v1292
    %v1294 = vpop.f32.mrf.mxu0
    %v1295 = vpop.f32.mrf.mxu0
    %v1296 = vadd.f32 %v1255, %v1295
    %v1297 = vpop.f32.mrf.mxu0
    %1298 = vdwg.mxu0
    %v1299 = vmax.f32 %v1123, 0.0
    %v1300 = vmax.f32 %v1125, 0.0
    %v1301 = vmax.f32 %v1209, 0.0
    %v1302 = vmax.f32 %v1211, 0.0
    %v1303 = vmax.f32 %v1293, 0.0
    %v1304 = vmax.f32 %v1127, 0.0
    %v1305 = vmax.f32 %v1129, 0.0
    %v1306 = vmax.f32 %v1213, 0.0
    %v1307 = vmax.f32 %v1215, 0.0
    %v1308 = vmax.f32 %v1296, 0.0
    %v1309 = vpack.c.bf16 %v1304, %v1299
    %v1310 = vpack.c.bf16 %v1305, %v1300
    %v1311 = vpack.c.bf16 %v1306, %v1301
    %v1312 = vpack.c.bf16 %v1307, %v1302
    %v1313 = vpack.c.bf16 %v1308, %v1303
    %v1314 = vld [vmem:[#allocation9] sm:$0xff]
    %v1315 = vld [vmem:[#allocation9 + $0x8] sm:$0xff]
    %v1316 = vld [vmem:[#allocation9 + $0x10] sm:$0xff]
    %v1317 = vld [vmem:[#allocation9 + $0x18] sm:$0xff]
    %v1318 = vld [vmem:[#allocation9 + $0x20] sm:$0xff]
    %v1319 = vld [vmem:[#allocation9 + $0x28] sm:$0xff]
    %v1320 = vld [vmem:[#allocation9 + $0x30] sm:$0xff]
    %v1321 = vld [vmem:[#allocation9 + $0x38] sm:$0xff]
    %v1322 = vld [vmem:[#allocation9 + $0x40] sm:$0xff]
    %v1323 = vld [vmem:[#allocation9 + $0x48] sm:$0xff]
    %v1324 = vld [vmem:[#allocation9 + $0x50] sm:$0xff]
    %v1325 = vld [vmem:[#allocation9 + $0x58] sm:$0xff]
    %v1326 = vld [vmem:[#allocation9 + $0x60] sm:$0xff]
    %v1327 = vld [vmem:[#allocation9 + $0x68] sm:$0xff]
    %v1328 = vld [vmem:[#allocation9 + $0x70] sm:$0xff]
    %v1329 = vld [vmem:[#allocation9 + $0x78] sm:$0xff]
    %v1330 = vld [vmem:[#allocation9 + $0x80] sm:$0xff]
    %v1331 = vld [vmem:[#allocation9 + $0x88] sm:$0xff]
    %v1332 = vld [vmem:[#allocation9 + $0x90] sm:$0xff]
    %v1333 = vld [vmem:[#allocation9 + $0x98] sm:$0xff]
    %v1334 = vld [vmem:[#allocation9 + $0xa0] sm:$0xff]
    %v1335 = vld [vmem:[#allocation9 + $0xa8] sm:$0xff]
    %v1336 = vld [vmem:[#allocation9 + $0xb0] sm:$0xff]
    %v1337 = vld [vmem:[#allocation9 + $0xb8] sm:$0xff]
    %v1338 = vld [vmem:[#allocation9 + $0xc0] sm:$0xff]
    %v1339 = vld [vmem:[#allocation9 + $0xc8] sm:$0xff]
    %v1340 = vld [vmem:[#allocation9 + $0xd0] sm:$0xff]
    %v1341 = vld [vmem:[#allocation9 + $0xd8] sm:$0xff]
    %v1342 = vld [vmem:[#allocation9 + $0xe0] sm:$0xff]
    %v1343 = vld [vmem:[#allocation9 + $0xe8] sm:$0xff]
    %v1344 = vld [vmem:[#allocation9 + $0xf0] sm:$0xff]
    %v1345 = vld [vmem:[#allocation9 + $0xf8] sm:$0xff]
    %v1346 = vld [vmem:[#allocation9 + $0x100] sm:$0xff]
    %v1347 = vld [vmem:[#allocation9 + $0x108] sm:$0xff]
    %v1348 = vld [vmem:[#allocation9 + $0x110] sm:$0xff]
    %v1349 = vld [vmem:[#allocation9 + $0x118] sm:$0xff]
    %v1350 = vld [vmem:[#allocation9 + $0x120] sm:$0xff]
    %v1351 = vld [vmem:[#allocation9 + $0x128] sm:$0xff]
    %v1352 = vld [vmem:[#allocation9 + $0x130] sm:$0xff]
    %v1353 = vld [vmem:[#allocation9 + $0x138] sm:$0xff]
    %v1354 = vld [vmem:[#allocation9 + $0x140] sm:$0xff]
    %v1355 = vld [vmem:[#allocation9 + $0x148] sm:$0xff]
    %v1356 = vld [vmem:[#allocation9 + $0x150] sm:$0xff]
    %v1357 = vld [vmem:[#allocation9 + $0x158] sm:$0xff]
    %v1358 = vld [vmem:[#allocation9 + $0x160] sm:$0xff]
    %v1359 = vld [vmem:[#allocation9 + $0x168] sm:$0xff]
    %v1360 = vld [vmem:[#allocation9 + $0x170] sm:$0xff]
    %v1361 = vld [vmem:[#allocation9 + $0x178] sm:$0xff]
    %v1362 = vld [vmem:[#allocation9 + $0x180] sm:$0xff]
    %v1363 = vld [vmem:[#allocation9 + $0x188] sm:$0xff]
    %v1364 = vld [vmem:[#allocation9 + $0x190] sm:$0xff]
    %v1365 = vld [vmem:[#allocation9 + $0x198] sm:$0xff]
    %v1366 = vld [vmem:[#allocation9 + $0x1a0] sm:$0xff]
    %v1367 = vld [vmem:[#allocation9 + $0x1a8] sm:$0xff]
    %v1368 = vld [vmem:[#allocation9 + $0x1b0] sm:$0xff]
    %v1369 = vld [vmem:[#allocation9 + $0x1b8] sm:$0xff]
    %v1370 = vld [vmem:[#allocation9 + $0x1c0] sm:$0xff]
    %v1371 = vld [vmem:[#allocation9 + $0x1c8] sm:$0xff]
    %v1372 = vld [vmem:[#allocation9 + $0x1d0] sm:$0xff]
    %v1373 = vld [vmem:[#allocation9 + $0x1d8] sm:$0xff]
    %v1374 = vld [vmem:[#allocation9 + $0x1e0] sm:$0xff]
    %v1375 = vld [vmem:[#allocation9 + $0x1e8] sm:$0xff]
    %v1376 = vld [vmem:[#allocation9 + $0x1f0] sm:$0xff]
    %v1377 = vld [vmem:[#allocation9 + $0x1f8] sm:$0xff]
    %v1378 = vld [vmem:[#allocation9 + $0x200] sm:$0xff]
    %v1379 = vld [vmem:[#allocation9 + $0x208] sm:$0xff]
    %v1380 = vld [vmem:[#allocation9 + $0x210] sm:$0xff]
    %v1381 = vld [vmem:[#allocation9 + $0x218] sm:$0xff]
    %v1382 = vld [vmem:[#allocation9 + $0x220] sm:$0xff]
    %v1383 = vld [vmem:[#allocation9 + $0x228] sm:$0xff]
    %v1384 = vld [vmem:[#allocation9 + $0x230] sm:$0xff]
    %v1385 = vld [vmem:[#allocation9 + $0x238] sm:$0xff]
    %v1386 = vld [vmem:[#allocation9 + $0x240] sm:$0xff]
    %v1387 = vld [vmem:[#allocation9 + $0x248] sm:$0xff]
    %v1388 = vld [vmem:[#allocation9 + $0x250] sm:$0xff]
    %v1389 = vld [vmem:[#allocation9 + $0x258] sm:$0xff]
    %v1390 = vld [vmem:[#allocation9 + $0x260] sm:$0xff]
    %v1391 = vld [vmem:[#allocation9 + $0x268] sm:$0xff]
    %v1392 = vld [vmem:[#allocation9 + $0x270] sm:$0xff]
    %v1393 = vld [vmem:[#allocation9 + $0x278] sm:$0xff]
    %v1394 = vld [vmem:[%s6] sm:$0x3]
    %v1396 = vlaneseq
    %v1397 = vshrl.u32 %v1396, 7
    %v1398 = vsub.s32 0, %v1397
    %v1399 = vrot.slane %v1394, %v1398
    %v1400 = vlaneseq
    %v1401 = vshrl.u32 %v1400, 7
    %v1402 = vsub.s32 1, %v1401
    %v1403 = vrot.slane %v1394, %v1402
    %v1486 = vunpack.c.l.b16 %v1314
    %v1487 = vunpack.c.h.b16 %v1314
    %v1488 = vunpack.c.l.b16 %v1315
    %v1489 = vunpack.c.h.b16 %v1315
    %v1490 = vunpack.c.l.b16 %v1316
    %v1491 = vunpack.c.h.b16 %v1316
    %v1492 = vunpack.c.l.b16 %v1317
    %v1493 = vunpack.c.h.b16 %v1317
    %v1494 = vunpack.c.l.b16 %v1318
    %v1495 = vunpack.c.h.b16 %v1318
    %v1496 = vunpack.c.l.b16 %v1319
    %v1497 = vunpack.c.h.b16 %v1319
    %v1498 = vunpack.c.l.b16 %v1320
    %v1499 = vunpack.c.h.b16 %v1320
    %v1500 = vunpack.c.l.b16 %v1321
    %v1501 = vunpack.c.h.b16 %v1321
    %v1502 = vunpack.c.l.b16 %v1322
    %v1503 = vunpack.c.h.b16 %v1322
    %v1504 = vunpack.c.l.b16 %v1323
    %v1505 = vunpack.c.h.b16 %v1323
    %v1506 = vunpack.c.l.b16 %v1324
    %v1507 = vunpack.c.h.b16 %v1324
    %v1508 = vunpack.c.l.b16 %v1325
    %v1509 = vunpack.c.h.b16 %v1325
    %v1510 = vunpack.c.l.b16 %v1326
    %v1511 = vunpack.c.h.b16 %v1326
    %v1512 = vunpack.c.l.b16 %v1327
    %v1513 = vunpack.c.h.b16 %v1327
    %v1514 = vunpack.c.l.b16 %v1328
    %v1515 = vunpack.c.h.b16 %v1328
    %v1516 = vunpack.c.l.b16 %v1329
    %v1517 = vunpack.c.h.b16 %v1329
    %v1518 = vunpack.c.l.b16 %v1330
    %v1519 = vunpack.c.h.b16 %v1330
    %v1520 = vunpack.c.l.b16 %v1331
    %v1521 = vunpack.c.h.b16 %v1331
    %v1522 = vunpack.c.l.b16 %v1332
    %v1523 = vunpack.c.h.b16 %v1332
    %v1524 = vunpack.c.l.b16 %v1333
    %v1525 = vunpack.c.h.b16 %v1333
    %v1526 = vunpack.c.l.b16 %v1334
    %v1527 = vunpack.c.h.b16 %v1334
    %v1528 = vunpack.c.l.b16 %v1335
    %v1529 = vunpack.c.h.b16 %v1335
    %v1530 = vunpack.c.l.b16 %v1336
    %v1531 = vunpack.c.h.b16 %v1336
    %v1532 = vunpack.c.l.b16 %v1337
    %v1533 = vunpack.c.h.b16 %v1337
    %v1534 = vunpack.c.l.b16 %v1338
    %v1535 = vunpack.c.h.b16 %v1338
    %v1536 = vunpack.c.l.b16 %v1339
    %v1537 = vunpack.c.h.b16 %v1339
    %v1538 = vunpack.c.l.b16 %v1340
    %v1539 = vunpack.c.h.b16 %v1340
    %v1540 = vunpack.c.l.b16 %v1341
    %v1541 = vunpack.c.h.b16 %v1341
    %v1542 = vunpack.c.l.b16 %v1342
    %v1543 = vunpack.c.h.b16 %v1342
    %v1544 = vunpack.c.l.b16 %v1343
    %v1545 = vunpack.c.h.b16 %v1343
    %v1546 = vunpack.c.l.b16 %v1344
    %v1547 = vunpack.c.h.b16 %v1344
    %v1548 = vunpack.c.l.b16 %v1345
    %v1549 = vunpack.c.h.b16 %v1345
    %v1550 = vunpack.c.l.b16 %v1346
    %v1551 = vunpack.c.h.b16 %v1346
    %v1552 = vunpack.c.l.b16 %v1347
    %v1553 = vunpack.c.h.b16 %v1347
    %v1554 = vunpack.c.l.b16 %v1348
    %v1555 = vunpack.c.h.b16 %v1348
    %v1556 = vunpack.c.l.b16 %v1349
    %v1557 = vunpack.c.h.b16 %v1349
    %v1558 = vunpack.c.l.b16 %v1350
    %v1559 = vunpack.c.h.b16 %v1350
    %v1560 = vunpack.c.l.b16 %v1351
    %v1561 = vunpack.c.h.b16 %v1351
    %v1562 = vunpack.c.l.b16 %v1352
    %v1563 = vunpack.c.h.b16 %v1352
    %v1564 = vunpack.c.l.b16 %v1353
    %v1565 = vunpack.c.h.b16 %v1353
    %v1566 = vunpack.c.l.b16 %v1354
    %v1567 = vunpack.c.h.b16 %v1354
    %v1568 = vunpack.c.l.b16 %v1355
    %v1569 = vunpack.c.h.b16 %v1355
    %v1570 = vunpack.c.l.b16 %v1356
    %v1571 = vunpack.c.h.b16 %v1356
    %v1572 = vunpack.c.l.b16 %v1357
    %v1573 = vunpack.c.h.b16 %v1357
    %v1574 = vunpack.c.l.b16 %v1358
    %v1575 = vunpack.c.h.b16 %v1358
    %v1576 = vunpack.c.l.b16 %v1359
    %v1577 = vunpack.c.h.b16 %v1359
    %v1578 = vunpack.c.l.b16 %v1360
    %v1579 = vunpack.c.h.b16 %v1360
    %v1580 = vunpack.c.l.b16 %v1361
    %v1581 = vunpack.c.h.b16 %v1361
    %v1582 = vunpack.c.l.b16 %v1362
    %v1583 = vunpack.c.h.b16 %v1362
    %v1584 = vunpack.c.l.b16 %v1363
    %v1585 = vunpack.c.h.b16 %v1363
    %v1586 = vunpack.c.l.b16 %v1364
    %v1587 = vunpack.c.h.b16 %v1364
    %v1588 = vunpack.c.l.b16 %v1365
    %v1589 = vunpack.c.h.b16 %v1365
    %v1590 = vunpack.c.l.b16 %v1366
    %v1591 = vunpack.c.h.b16 %v1366
    %v1592 = vunpack.c.l.b16 %v1367
    %v1593 = vunpack.c.h.b16 %v1367
    %v1594 = vunpack.c.l.b16 %v1368
    %v1595 = vunpack.c.h.b16 %v1368
    %v1596 = vunpack.c.l.b16 %v1369
    %v1597 = vunpack.c.h.b16 %v1369
    %v1598 = vunpack.c.l.b16 %v1370
    %v1599 = vunpack.c.h.b16 %v1370
    %v1600 = vunpack.c.l.b16 %v1371
    %v1601 = vunpack.c.h.b16 %v1371
    %v1602 = vunpack.c.l.b16 %v1372
    %v1603 = vunpack.c.h.b16 %v1372
    %v1604 = vunpack.c.l.b16 %v1373
    %v1605 = vunpack.c.h.b16 %v1373
    %v1606 = vunpack.c.l.b16 %v1374
    %v1607 = vunpack.c.h.b16 %v1374
    %v1608 = vunpack.c.l.b16 %v1375
    %v1609 = vunpack.c.h.b16 %v1375
    %v1610 = vunpack.c.l.b16 %v1376
    %v1611 = vunpack.c.h.b16 %v1376
    %v1612 = vunpack.c.l.b16 %v1377
    %v1613 = vunpack.c.h.b16 %v1377
    %v1614 = vunpack.c.l.b16 %v1378
    %v1615 = vunpack.c.h.b16 %v1378
    %v1616 = vunpack.c.l.b16 %v1379
    %v1617 = vunpack.c.h.b16 %v1379
    %v1618 = vunpack.c.l.b16 %v1380
    %v1619 = vunpack.c.h.b16 %v1380
    %v1620 = vunpack.c.l.b16 %v1381
    %v1621 = vunpack.c.h.b16 %v1381
    %v1622 = vunpack.c.l.b16 %v1382
    %v1623 = vunpack.c.h.b16 %v1382
    %v1624 = vunpack.c.l.b16 %v1383
    %v1625 = vunpack.c.h.b16 %v1383
    %v1626 = vunpack.c.l.b16 %v1384
    %v1627 = vunpack.c.h.b16 %v1384
    %v1628 = vunpack.c.l.b16 %v1385
    %v1629 = vunpack.c.h.b16 %v1385
    %v1630 = vunpack.c.l.b16 %v1386
    %v1631 = vunpack.c.h.b16 %v1386
    %v1632 = vunpack.c.l.b16 %v1387
    %v1633 = vunpack.c.h.b16 %v1387
    %v1634 = vunpack.c.l.b16 %v1388
    %v1635 = vunpack.c.h.b16 %v1388
    %v1636 = vunpack.c.l.b16 %v1389
    %v1637 = vunpack.c.h.b16 %v1389
    %v1638 = vunpack.c.l.b16 %v1390
    %v1639 = vunpack.c.h.b16 %v1390
    %v1640 = vunpack.c.l.b16 %v1391
    %v1641 = vunpack.c.h.b16 %v1391
    %v1642 = vunpack.c.l.b16 %v1392
    %v1643 = vunpack.c.h.b16 %v1392
    %v1644 = vunpack.c.l.b16 %v1393
    %v1645 = vunpack.c.h.b16 %v1393
    %v1646 = vpack.c.b16 %v1488, %v1486
    %v1647 = vpack.c.b16 %v1489, %v1487
    %v1648 = vpack.c.b16 %v1492, %v1490
    %v1649 = vpack.c.b16 %v1493, %v1491
    %v1650 = vpack.c.b16 %v1496, %v1494
    %v1651 = vpack.c.b16 %v1497, %v1495
    %v1652 = vpack.c.b16 %v1500, %v1498
    %v1653 = vpack.c.b16 %v1501, %v1499
    %v1654 = vpack.c.b16 %v1504, %v1502
    %v1655 = vpack.c.b16 %v1505, %v1503
    %v1656 = vpack.c.b16 %v1508, %v1506
    %v1657 = vpack.c.b16 %v1509, %v1507
    %v1658 = vpack.c.b16 %v1512, %v1510
    %v1659 = vpack.c.b16 %v1513, %v1511
    %v1660 = vpack.c.b16 %v1516, %v1514
    %v1661 = vpack.c.b16 %v1517, %v1515
    %v1662 = vpack.c.b16 %v1520, %v1518
    %v1663 = vpack.c.b16 %v1521, %v1519
    %v1664 = vpack.c.b16 %v1524, %v1522
    %v1665 = vpack.c.b16 %v1525, %v1523
    %v1666 = vpack.c.b16 %v1528, %v1526
    %v1667 = vpack.c.b16 %v1529, %v1527
    %v1668 = vpack.c.b16 %v1532, %v1530
    %v1669 = vpack.c.b16 %v1533, %v1531
    %v1670 = vpack.c.b16 %v1536, %v1534
    %v1671 = vpack.c.b16 %v1537, %v1535
    %v1672 = vpack.c.b16 %v1540, %v1538
    %v1673 = vpack.c.b16 %v1541, %v1539
    %v1674 = vpack.c.b16 %v1544, %v1542
    %v1675 = vpack.c.b16 %v1545, %v1543
    %v1676 = vpack.c.b16 %v1548, %v1546
    %v1677 = vpack.c.b16 %v1549, %v1547
    %v1678 = vpack.c.b16 %v1552, %v1550
    %v1679 = vpack.c.b16 %v1553, %v1551
    %v1680 = vpack.c.b16 %v1556, %v1554
    %v1681 = vpack.c.b16 %v1557, %v1555
    %v1682 = vpack.c.b16 %v1560, %v1558
    %v1683 = vpack.c.b16 %v1561, %v1559
    %v1684 = vpack.c.b16 %v1564, %v1562
    %v1685 = vpack.c.b16 %v1565, %v1563
    %v1686 = vpack.c.b16 %v1568, %v1566
    %v1687 = vpack.c.b16 %v1569, %v1567
    %v1688 = vpack.c.b16 %v1572, %v1570
    %v1689 = vpack.c.b16 %v1573, %v1571
    %v1690 = vpack.c.b16 %v1576, %v1574
    %v1691 = vpack.c.b16 %v1577, %v1575
    %v1692 = vpack.c.b16 %v1580, %v1578
    %v1693 = vpack.c.b16 %v1581, %v1579
    %v1694 = vpack.c.b16 %v1584, %v1582
    %v1695 = vpack.c.b16 %v1585, %v1583
    %v1696 = vpack.c.b16 %v1588, %v1586
    %v1697 = vpack.c.b16 %v1589, %v1587
    %v1698 = vpack.c.b16 %v1592, %v1590
    %v1699 = vpack.c.b16 %v1593, %v1591
    %v1700 = vpack.c.b16 %v1596, %v1594
    %v1701 = vpack.c.b16 %v1597, %v1595
    %v1702 = vpack.c.b16 %v1600, %v1598
    %v1703 = vpack.c.b16 %v1601, %v1599
    %v1704 = vpack.c.b16 %v1604, %v1602
    %v1705 = vpack.c.b16 %v1605, %v1603
    %v1706 = vpack.c.b16 %v1608, %v1606
    %v1707 = vpack.c.b16 %v1609, %v1607
    %v1708 = vpack.c.b16 %v1612, %v1610
    %v1709 = vpack.c.b16 %v1613, %v1611
    %v1710 = vpack.c.b16 %v1616, %v1614
    %v1711 = vpack.c.b16 %v1617, %v1615
    %v1712 = vpack.c.b16 %v1620, %v1618
    %v1713 = vpack.c.b16 %v1621, %v1619
    %v1714 = vpack.c.b16 %v1624, %v1622
    %v1715 = vpack.c.b16 %v1625, %v1623
    %v1716 = vpack.c.b16 %v1628, %v1626
    %v1717 = vpack.c.b16 %v1629, %v1627
    %v1718 = vpack.c.b16 %v1632, %v1630
    %v1719 = vpack.c.b16 %v1633, %v1631
    %v1720 = vpack.c.b16 %v1636, %v1634
    %v1721 = vpack.c.b16 %v1637, %v1635
    %v1722 = vpack.c.b16 %v1640, %v1638
    %v1723 = vpack.c.b16 %v1641, %v1639
    %v1724 = vpack.c.b16 %v1644, %v1642
    %v1725 = vpack.c.b16 %v1645, %v1643
    %1806 = vmatprep.subr.bf16.mxu0 %v1661
    %1807 = vmatpush1.bf16.msra.mxu0 %v1660
    %1808 = vmatprep.subr.bf16.mxu0 %v1659
    %1809 = vmatpush1.bf16.msra.mxu0 %v1658
    %1810 = vmatprep.subr.bf16.mxu0 %v1657
    %1811 = vmatpush1.bf16.msra.mxu0 %v1656
    %1812 = vmatprep.subr.bf16.mxu0 %v1655
    %1813 = vmatpush1.bf16.msra.mxu0 %v1654
    %1814 = vmatprep.subr.bf16.mxu0 %v1653
    %1815 = vmatpush1.bf16.msra.mxu0 %v1652
    %1816 = vmatprep.subr.bf16.mxu0 %v1651
    %1817 = vmatpush1.bf16.msra.mxu0 %v1650
    %1818 = vmatprep.subr.bf16.mxu0 %v1649
    %1819 = vmatpush1.bf16.msra.mxu0 %v1648
    %1820 = vmatprep.subr.bf16.mxu0 %v1647
    %1821 = vmatpush1.bf16.msra.mxu0 %v1646
    %1822 = vmatprep.subr.bf16.mxu0 %v1677
    %1823 = vmatpush2.bf16.msra.mxu0 %v1676
    %1824 = vmatprep.subr.bf16.mxu0 %v1675
    %1825 = vmatpush2.bf16.msra.mxu0 %v1674
    %1826 = vmatprep.subr.bf16.mxu0 %v1673
    %1827 = vmatpush2.bf16.msra.mxu0 %v1672
    %1828 = vmatprep.subr.bf16.mxu0 %v1671
    %1829 = vmatpush2.bf16.msra.mxu0 %v1670
    %1830 = vmatprep.subr.bf16.mxu0 %v1669
    %1831 = vmatpush2.bf16.msra.mxu0 %v1668
    %1832 = vmatprep.subr.bf16.mxu0 %v1667
    %1833 = vmatpush2.bf16.msra.mxu0 %v1666
    %1834 = vmatprep.subr.bf16.mxu0 %v1665
    %1835 = vmatpush2.bf16.msra.mxu0 %v1664
    %1836 = vmatprep.subr.bf16.mxu0 %v1663
    %1837 = vmatpush2.bf16.msra.mxu0 %v1662
    %1838 = vmatprep.mubr.bf16.mxu0 %v1310
    %1839 = vmatmul.mubr.bf16.gmra.mxu0 %v1309
    %v1840 = vpop.f32.mrf.mxu0
    %v1841 = vadd.f32 %v1399, %v1840
    %v1842 = vpop.f32.mrf.mxu0
    %v1843 = vadd.f32 %v1403, %v1842
    %v1844 = vpop.f32.mrf.mxu0
    %v1845 = vadd.f32 %v1399, %v1844
    %v1846 = vpop.f32.mrf.mxu0
    %v1847 = vadd.f32 %v1403, %v1846
    %1848 = vdwg.mxu0
    %1849 = vmatprep.subr.bf16.mxu0 %v1693
    %1850 = vmatpush1.bf16.msra.mxu0 %v1692
    %1851 = vmatprep.subr.bf16.mxu0 %v1691
    %1852 = vmatpush1.bf16.msra.mxu0 %v1690
    %1853 = vmatprep.subr.bf16.mxu0 %v1689
    %1854 = vmatpush1.bf16.msra.mxu0 %v1688
    %1855 = vmatprep.subr.bf16.mxu0 %v1687
    %1856 = vmatpush1.bf16.msra.mxu0 %v1686
    %1857 = vmatprep.subr.bf16.mxu0 %v1685
    %1858 = vmatpush1.bf16.msra.mxu0 %v1684
    %1859 = vmatprep.subr.bf16.mxu0 %v1683
    %1860 = vmatpush1.bf16.msra.mxu0 %v1682
    %1861 = vmatprep.subr.bf16.mxu0 %v1681
    %1862 = vmatpush1.bf16.msra.mxu0 %v1680
    %1863 = vmatprep.subr.bf16.mxu0 %v1679
    %1864 = vmatpush1.bf16.msra.mxu0 %v1678
    %1865 = vmatprep.subr.bf16.mxu0 %v1709
    %1866 = vmatpush2.bf16.msra.mxu0 %v1708
    %1867 = vmatprep.subr.bf16.mxu0 %v1707
    %1868 = vmatpush2.bf16.msra.mxu0 %v1706
    %1869 = vmatprep.subr.bf16.mxu0 %v1705
    %1870 = vmatpush2.bf16.msra.mxu0 %v1704
    %1871 = vmatprep.subr.bf16.mxu0 %v1703
    %1872 = vmatpush2.bf16.msra.mxu0 %v1702
    %1873 = vmatprep.subr.bf16.mxu0 %v1701
    %1874 = vmatpush2.bf16.msra.mxu0 %v1700
    %1875 = vmatprep.subr.bf16.mxu0 %v1699
    %1876 = vmatpush2.bf16.msra.mxu0 %v1698
    %1877 = vmatprep.subr.bf16.mxu0 %v1697
    %1878 = vmatpush2.bf16.msra.mxu0 %v1696
    %1879 = vmatprep.subr.bf16.mxu0 %v1695
    %1880 = vmatpush2.bf16.msra.mxu0 %v1694
    %1881 = vmatprep.mubr.bf16.mxu0 %v1312
    %1882 = vmatmul.mubr.bf16.gmra.mxu0 %v1311
    %v1883 = vpop.f32.mrf.mxu0
    %v1884 = vadd.f32 %v1841, %v1883
    %v1885 = vpop.f32.mrf.mxu0
    %v1886 = vadd.f32 %v1843, %v1885
    %v1887 = vpop.f32.mrf.mxu0
    %v1888 = vadd.f32 %v1845, %v1887
    %v1889 = vpop.f32.mrf.mxu0
    %v1890 = vadd.f32 %v1847, %v1889
    %1891 = vdwg.mxu0
    %1892 = vmatprep.subr.bf16.mxu0 %v1725
    %1893 = vmatpush1.bf16.msra.mxu0 %v1724
    %1894 = vmatprep.subr.bf16.mxu0 %v1723
    %1895 = vmatpush1.bf16.msra.mxu0 %v1722
    %1896 = vmatprep.subr.bf16.mxu0 %v1721
    %1897 = vmatpush1.bf16.msra.mxu0 %v1720
    %1898 = vmatprep.subr.bf16.mxu0 %v1719
    %1899 = vmatpush1.bf16.msra.mxu0 %v1718
    %1900 = vmatprep.subr.bf16.mxu0 %v1717
    %1901 = vmatpush1.bf16.msra.mxu0 %v1716
    %1902 = vmatprep.subr.bf16.mxu0 %v1715
    %1903 = vmatpush1.bf16.msra.mxu0 %v1714
    %1904 = vmatprep.subr.bf16.mxu0 %v1713
    %1905 = vmatpush1.bf16.msra.mxu0 %v1712
    %1906 = vmatprep.subr.bf16.mxu0 %v1711
    %1907 = vmatpush1.bf16.msra.mxu0 %v1710
    %1908 = vmatprep.subr.bf16.mxu0 0
    %1909 = vmatpush2.bf16.msra.mxu0 0
    %1910 = vmatprep.subr.bf16.mxu0 0
    %1911 = vmatpush2.bf16.msra.mxu0 0
    %1912 = vmatprep.subr.bf16.mxu0 0
    %1913 = vmatpush2.bf16.msra.mxu0 0
    %1914 = vmatprep.subr.bf16.mxu0 0
    %1915 = vmatpush2.bf16.msra.mxu0 0
    %1916 = vmatprep.subr.bf16.mxu0 0
    %1917 = vmatpush2.bf16.msra.mxu0 0
    %1918 = vmatprep.subr.bf16.mxu0 0
    %1919 = vmatpush2.bf16.msra.mxu0 0
    %1920 = vmatprep.subr.bf16.mxu0 0
    %1921 = vmatpush2.bf16.msra.mxu0 0
    %1922 = vmatprep.subr.bf16.mxu0 0
    %1923 = vmatpush2.bf16.msra.mxu0 0
    %1924 = vmatprep.mubr.bf16.mxu0 0
    %1925 = vmatmul.mubr.bf16.gmra.mxu0 %v1313
    %v1926 = vpop.f32.mrf.mxu0
    %v1927 = vadd.f32 %v1884, %v1926
    %v1928 = vpop.f32.mrf.mxu0
    %v1929 = vadd.f32 %v1886, %v1928
    %v1930 = vpop.f32.mrf.mxu0
    %v1931 = vadd.f32 %v1888, %v1930
    %v1932 = vpop.f32.mrf.mxu0
    %v1933 = vadd.f32 %v1890, %v1932
    %1934 = vdwg.mxu0
    %1935 = vst [vmem:[%s7] sm:$0xff] %v1927
    %1936 = vst [vmem:[%s7 + $0x8] sm:$0xff] %v1929
    %1937 = vst [vmem:[%s7 + $0x10] sm:$0xff] %v1931
    %1938 = vst [vmem:[%s7 + $0x18] sm:$0xff] %v1933
    // Predicated region
    $region50: #{conv_decoder_forward.1} parent=1 // pred_check
      _
    $region51: #{conv_decoder_forward.1} parent=1 // pred_check_branch
      %1940 = sbr.rel (0) target = $region53
    $region52: #{conv_decoder_forward.1} parent=1 // pred_region
      _
    $region53: #{conv_decoder_forward.1} parent=1 // pred_fallthru
      _
    // Predicated region
    $region54: #{conv_decoder_forward.1} parent=1 // pred_check
      _
    $region55: #{conv_decoder_forward.1} parent=1 // pred_check_branch
      %1942 = sbr.rel (0) target = $region57
    $region56: #{conv_decoder_forward.1} parent=1 // pred_region
      _
    $region57: #{conv_decoder_forward.1} parent=1 // pred_fallthru
      _
    %1943 = vsyncpa [#allocation3], 1
    %1944 = vsyncpa [#allocation5], 1
    %1945 = vsyncpa [#allocation8], 1

// kernel: conv_decoder_forward.1
$region0: #{conv_decoder_forward.1}
  #allocation0 [shape = 'u32[]', space=smem, size = 0x4, offset = 0x4, fixed_abs, tag = 'smem constant byte address 0x4 - core index']
  #allocation1 [shape = 'u32[144,128]{1,0:T(1,128)}', space=vmem, size = 0x12000, scoped, tag = 'internal scratch']
  %s0 = inlined_call_operand.hbm [shape: f32[16,32], index: 0, kind: input, shape index: {}]
  %s1 = inlined_call_operand.hbm [shape: bf16[32,384], index: 1, kind: input, shape index: {}]
  %s2 = inlined_call_operand.hbm [shape: f32[1,384], index: 2, kind: input, shape index: {}]
  %s3 = inlined_call_operand.hbm [shape: bf16[384,640], index: 3, kind: input, shape index: {}]
  %s4 = inlined_call_operand.vmem [shape: f32[1,640], index: 4, kind: input, shape index: {}]
  %s5 = inlined_call_operand.hbm [shape: bf16[640,256], index: 5, kind: input, shape index: {}]
  %s6 = inlined_call_operand.vmem [shape: f32[1,256], index: 6, kind: input, shape index: {}]
  %s7 = inlined_call_operand.vmem [shape: f32[16,256], index: 7, kind: output, shape index: {}]
  %s8 = sld [smem:[#allocation0]]
  $region58: #{conv_decoder_forward.1} parent=0
    _
  %s10 = ssub.s32 1, %s8
  %s11 = scalar_select 0, %s10, %s8
  $region1: #{conv_decoder_forward.1} parent=0
    #allocation2 [shape = 'u8[8192]{0}', space=vmem, size = 0x2000, scoped, tag = 'input window, operand 0, single buffered']
    #allocation3 [shape = 's32[1]{0}', space=sflag, size = 0x4, scoped, tag = 'scoped memory for conv_decoder_forward.1']
    #allocation4 [shape = 'u8[24576]{0}', space=vmem, size = 0x6000, scoped, tag = 'input window, operand 1, single buffered']
    #allocation5 [shape = 's32[1]{0}', space=sflag, size = 0x4, scoped, tag = 'scoped memory for conv_decoder_forward.1']
    #allocation6 [shape = 'u8[1536]{0}', space=vmem, size = 0x800, scoped, tag = 'input window, operand 2, single buffered']
    #allocation7 [shape = 'u8[491520]{0}', space=vmem, size = 0x78000, scoped, tag = 'input window, operand 3, single buffered']
    #allocation8 [shape = 's32[1]{0}', space=sflag, size = 0x4, scoped, tag = 'scoped memory for conv_decoder_forward.1']
    #allocation9 [shape = 'u8[327680]{0}', space=vmem, size = 0x50000, scoped, tag = 'input window, operand 5, single buffered']
    %12 = vsyncpa [#allocation3], 0
    %13 = vsyncpa [#allocation5], 0
    %14 = vsyncpa [#allocation8], 0
    // Predicated region
    $region2: #{conv_decoder_forward.1} parent=1 // pred_check
      _
    $region3: #{conv_decoder_forward.1} parent=1 // pred_check_branch
      %16 = sbr.rel (0) target = $region5
    $region4: #{conv_decoder_forward.1} parent=1 // pred_region
      %s18 = ssub.s32 256, 256
      %19 = vsyncadd [#allocation3], %s18
      %s20 = sshll.u32 [#allocation2], 4
      %s21 = int_to_ptr.vmem [resolvable:$true] %s20
      %26 = dma.hbm_to_vmem [thread:$0]  %s0, 256, %s21, [#allocation3], 128, 128, 8
    $region5: #{conv_decoder_forward.1} parent=1 // pred_fallthru
      _
    // Predicated region
    $region6: #{conv_decoder_forward.1} parent=1 // pred_check
      _
    $region7: #{conv_decoder_forward.1} parent=1 // pred_check_branch
      %28 = sbr.rel (0) target = $region9
    $region8: #{conv_decoder_forward.1} parent=1 // pred_region
      %s30 = ssub.s32 768, 768
      %31 = vsyncadd [#allocation5], %s30
      %s32 = sshll.u32 [#allocation4], 4
      %s33 = int_to_ptr.vmem [resolvable:$true] %s32
      %38 = dma.hbm_to_vmem [thread:$0]  %s1, 768, %s33, [#allocation5], 192, 192, 12
    $region9: #{conv_decoder_forward.1} parent=1 // pred_fallthru
      _
    // Predicated region
    $region10: #{conv_decoder_forward.1} parent=1 // pred_check
      _
    $region11: #{conv_decoder_forward.1} parent=1 // pred_check_branch
      %40 = sbr.rel (0) target = $region13
    $region12: #{conv_decoder_forward.1} parent=1 // pred_region
      %s42 = ssub.s32 48, 48
      %43 = vsyncadd [#allocation5], %s42
      %s45 = sshll.u32 [#allocation6], 4
      %s46 = int_to_ptr.vmem [resolvable:$true] %s45
      %48 = dma.hbm_to_vmem [thread:$0]  %s2, 48, %s46, [#allocation5]
    $region13: #{conv_decoder_forward.1} parent=1 // pred_fallthru
      _
    // Predicated region
    $region14: #{conv_decoder_forward.1} parent=1 // pred_check
      _
    $region15: #{conv_decoder_forward.1} parent=1 // pred_check_branch
      %50 = sbr.rel (0) target = $region17
    $region16: #{conv_decoder_forward.1} parent=1 // pred_region
      %s52 = ssub.s32 15360, 15360
      %53 = vsyncadd [#allocation8], %s52
      %s54 = sshll.u32 [#allocation7], 4
      %s55 = int_to_ptr.vmem [resolvable:$true] %s54
      %60 = dma.hbm_to_vmem [thread:$0]  %s3, 15360, %s55, [#allocation8], 320, 320, 20
    $region17: #{conv_decoder_forward.1} parent=1 // pred_fallthru
      _
    // Predicated region
    $region18: #{conv_decoder_forward.1} parent=1 // pred_check
      _
    $region19: #{conv_decoder_forward.1} parent=1 // pred_check_branch
      %62 = sbr.rel (0) target = $region21
    $region20: #{conv_decoder_forward.1} parent=1 // pred_region
      _
    $region21: #{conv_decoder_forward.1} parent=1 // pred_fallthru
      _
    // Predicated region
    $region22: #{conv_decoder_forward.1} parent=1 // pred_check
      _
    $region23: #{conv_decoder_forward.1} parent=1 // pred_check_branch
      %64 = sbr.rel (0) target = $region25
    $region24: #{conv_decoder_forward.1} parent=1 // pred_region
      %s66 = ssub.s32 10240, 10240
      %67 = vsyncadd [#allocation8], %s66
      %s68 = sshll.u32 [#allocation9], 4
      %s69 = int_to_ptr.vmem [resolvable:$true] %s68
      %74 = dma.hbm_to_vmem [thread:$0]  %s5, 10240, %s69, [#allocation8], 128, 128, 8
    $region25: #{conv_decoder_forward.1} parent=1 // pred_fallthru
      _
    // Predicated region
    $region26: #{conv_decoder_forward.1} parent=1 // pred_check
      _
    $region27: #{conv_decoder_forward.1} parent=1 // pred_check_branch
      %76 = sbr.rel (0) target = $region29
    $region28: #{conv_decoder_forward.1} parent=1 // pred_region
      _
    $region29: #{conv_decoder_forward.1} parent=1 // pred_fallthru
      _
    // Predicated region
    $region30: #{conv_decoder_forward.1} parent=1 // pred_check
      _
    $region31: #{conv_decoder_forward.1} parent=1 // pred_check_branch
      %78 = sbr.rel (0) target = $region33
    $region32: #{conv_decoder_forward.1} parent=1 // pred_region
      %79 = dma.done [#allocation3], 256
    $region33: #{conv_decoder_forward.1} parent=1 // pred_fallthru
      _
    // Predicated region
    $region34: #{conv_decoder_forward.1} parent=1 // pred_check
      _
    $region35: #{conv_decoder_forward.1} parent=1 // pred_check_branch
      %81 = sbr.rel (0) target = $region37
    $region36: #{conv_decoder_forward.1} parent=1 // pred_region
      %82 = dma.done [#allocation5], 768
    $region37: #{conv_decoder_forward.1} parent=1 // pred_fallthru
      _
    // Predicated region
    $region38: #{conv_decoder_forward.1} parent=1 // pred_check
      _
    $region39: #{conv_decoder_forward.1} parent=1 // pred_check_branch
      %84 = sbr.rel (0) target = $region41
    $region40: #{conv_decoder_forward.1} parent=1 // pred_region
      %85 = dma.done [#allocation5], 48
    $region41: #{conv_decoder_forward.1} parent=1 // pred_fallthru
      _
    // Predicated region
    $region42: #{conv_decoder_forward.1} parent=1 // pred_check
      _
    $region43: #{conv_decoder_forward.1} parent=1 // pred_check_branch
      %87 = sbr.rel (0) target = $region45
    $region44: #{conv_decoder_forward.1} parent=1 // pred_region
      %88 = dma.done [#allocation8], 15360
    $region45: #{conv_decoder_forward.1} parent=1 // pred_fallthru
      _
    // Predicated region
    $region46: #{conv_decoder_forward.1} parent=1 // pred_check
      _
    $region47: #{conv_decoder_forward.1} parent=1 // pred_check_branch
      %90 = sbr.rel (0) target = $region49
    $region48: #{conv_decoder_forward.1} parent=1 // pred_region
      %91 = dma.done [#allocation8], 10240
    $region49: #{conv_decoder_forward.1} parent=1 // pred_fallthru
      _
    %v93 = vld [vmem:[#allocation2] sm:$0xff]
    %v94 = vld [vmem:[#allocation2 + $0x8] sm:$0xff]
    %v95 = vpack.c.bf16 %v94, %v93
    %v96 = vld [vmem:[#allocation4] sm:$0xff]
    %v97 = vld [vmem:[#allocation4 + $0x8] sm:$0xf]
    %v98 = vld [vmem:[#allocation4 + $0xc] sm:$0xff]
    %v99 = vld [vmem:[#allocation4 + $0x14] sm:$0xf]
    %v100 = vld [vmem:[#allocation4 + $0x18] sm:$0xff]
    %v101 = vld [vmem:[#allocation4 + $0x20] sm:$0xf]
    %v102 = vld [vmem:[#allocation4 + $0x24] sm:$0xff]
    %v103 = vld [vmem:[#allocation4 + $0x2c] sm:$0xf]
    %v104 = vld [vmem:[#allocation6] sm:$0x7]
    %v106 = vlaneseq
    %v107 = vshrl.u32 %v106, 7
    %v108 = vsub.s32 0, %v107
    %v109 = vrot.slane %v104, %v108
    %v110 = vlaneseq
    %v111 = vshrl.u32 %v110, 7
    %v112 = vsub.s32 1, %v111
    %v113 = vrot.slane %v104, %v112
    %v114 = vlaneseq
    %v115 = vshrl.u32 %v114, 7
    %v116 = vsub.s32 2, %v115
    %v117 = vrot.slane %v104, %v116
    %v129 = vunpack.c.l.b16 %v96
    %v130 = vunpack.c.h.b16 %v96
    %v131 = vunpack.c.l.b16 %v97
    %v132 = vunpack.c.l.b16 %v98
    %v133 = vunpack.c.h.b16 %v98
    %v134 = vunpack.c.l.b16 %v99
    %v135 = vunpack.c.l.b16 %v100
    %v136 = vunpack.c.h.b16 %v100
    %v137 = vunpack.c.l.b16 %v101
    %v138 = vunpack.c.l.b16 %v102
    %v139 = vunpack.c.h.b16 %v102
    %v140 = vunpack.c.l.b16 %v103
    %v141 = vpack.c.b16 %v132, %v129
    %v142 = vpack.c.b16 %v133, %v130
    %v143 = vpack.c.b16 %v134, %v131
    %v144 = vpack.c.b16 %v138, %v135
    %v145 = vpack.c.b16 %v139, %v136
    %v146 = vpack.c.b16 %v140, %v137
    %vm153 = vcmask 261120
    %v155 = vsel %vm153, %v95, 0
    %157 = vmatprep.subr.bf16.mxu0 0
    %158 = vmatpush1.bf16.msra.mxu0 0
    %159 = vmatprep.subr.bf16.mxu0 0
    %160 = vmatpush1.bf16.msra.mxu0 0
    %161 = vmatprep.subr.bf16.mxu0 0
    %162 = vmatpush1.bf16.msra.mxu0 0
    %163 = vmatprep.subr.bf16.mxu0 0
    %164 = vmatpush1.bf16.msra.mxu0 0
    %165 = vmatprep.subr.bf16.mxu0 0
    %166 = vmatpush1.bf16.msra.mxu0 0
    %167 = vmatprep.subr.bf16.mxu0 0
    %168 = vmatpush1.bf16.msra.mxu0 0
    %169 = vmatprep.subr.bf16.mxu0 %v145
    %170 = vmatpush1.bf16.msra.mxu0 %v144
    %171 = vmatprep.subr.bf16.mxu0 %v142
    %172 = vmatpush1.bf16.msra.mxu0 %v141
    %173 = vmatprep.subr.bf16.mxu0 0
    %174 = vmatpush2.bf16.msra.mxu0 0
    %175 = vmatprep.subr.bf16.mxu0 0
    %176 = vmatpush2.bf16.msra.mxu0 0
    %177 = vmatprep.subr.bf16.mxu0 0
    %178 = vmatpush2.bf16.msra.mxu0 0
    %179 = vmatprep.subr.bf16.mxu0 0
    %180 = vmatpush2.bf16.msra.mxu0 0
    %181 = vmatprep.subr.bf16.mxu0 0
    %182 = vmatpush2.bf16.msra.mxu0 0
    %183 = vmatprep.subr.bf16.mxu0 0
    %184 = vmatpush2.bf16.msra.mxu0 0
    %185 = vmatprep.subr.bf16.mxu0 0
    %186 = vmatpush2.bf16.msra.mxu0 0
    %187 = vmatprep.subr.bf16.mxu0 0
    %188 = vmatpush2.bf16.msra.mxu0 0
    %189 = vmatprep.mubr.bf16.mxu0 0
    %190 = vmatmul.mubr.bf16.gmra.mxu0 %v155
    %v191 = vpop.f32.mrf.mxu0
    %v192 = vadd.f32 %v109, %v191
    %v193 = vpop.f32.mrf.mxu0
    %v194 = vadd.f32 %v113, %v193
    %v195 = vpop.f32.mrf.mxu0
    %v196 = vadd.f32 %v109, %v195
    %v197 = vpop.f32.mrf.mxu0
    %v198 = vadd.f32 %v113, %v197
    %199 = vdwg.mxu0
    %200 = vmatprep.subr.bf16.mxu0 0
    %201 = vmatpush1.bf16.msra.mxu0 0
    %202 = vmatprep.subr.bf16.mxu0 0
    %203 = vmatpush1.bf16.msra.mxu0 0
    %204 = vmatprep.subr.bf16.mxu0 0
    %205 = vmatpush1.bf16.msra.mxu0 0
    %206 = vmatprep.subr.bf16.mxu0 0
    %207 = vmatpush1.bf16.msra.mxu0 0
    %208 = vmatprep.subr.bf16.mxu0 0
    %209 = vmatpush1.bf16.msra.mxu0 0
    %210 = vmatprep.subr.bf16.mxu0 0
    %211 = vmatpush1.bf16.msra.mxu0 0
    %212 = vmatprep.subr.bf16.mxu0 0
    %213 = vmatpush1.bf16.msra.mxu0 %v146
    %214 = vmatprep.subr.bf16.mxu0 0
    %215 = vmatpush1.bf16.msra.mxu0 %v143
    %216 = vmatprep.subr.bf16.mxu0 0
    %217 = vmatpush2.bf16.msra.mxu0 0
    %218 = vmatprep.subr.bf16.mxu0 0
    %219 = vmatpush2.bf16.msra.mxu0 0
    %220 = vmatprep.subr.bf16.mxu0 0
    %221 = vmatpush2.bf16.msra.mxu0 0
    %222 = vmatprep.subr.bf16.mxu0 0
    %223 = vmatpush2.bf16.msra.mxu0 0
    %224 = vmatprep.subr.bf16.mxu0 0
    %225 = vmatpush2.bf16.msra.mxu0 0
    %226 = vmatprep.subr.bf16.mxu0 0
    %227 = vmatpush2.bf16.msra.mxu0 0
    %228 = vmatprep.subr.bf16.mxu0 0
    %229 = vmatpush2.bf16.msra.mxu0 0
    %230 = vmatprep.subr.bf16.mxu0 0
    %231 = vmatpush2.bf16.msra.mxu0 0
    %232 = vmatprep.mubr.bf16.mxu0 0
    %233 = vmatmul.mubr.bf16.gmra.mxu0 %v155
    %v234 = vpop.f32.mrf.mxu0
    %v235 = vadd.f32 %v117, %v234
    %v236 = vpop.f32.mrf.mxu0
    %v237 = vpop.f32.mrf.mxu0
    %v238 = vadd.f32 %v117, %v237
    %v239 = vpop.f32.mrf.mxu0
    %240 = vdwg.mxu0
    %v241 = vmax.f32 %v192, 0.0
    %v242 = vmax.f32 %v194, 0.0
    %v243 = vmax.f32 %v235, 0.0
    %v244 = vmax.f32 %v196, 0.0
    %v245 = vmax.f32 %v198, 0.0
    %v246 = vmax.f32 %v238, 0.0
    %v247 = vpack.c.bf16 %v244, %v241
    %v248 = vpack.c.bf16 %v245, %v242
    %v249 = vpack.c.bf16 %v246, %v243
    %v250 = vld [vmem:[#allocation7] sm:$0xff]
    %v251 = vld [vmem:[#allocation7 + $0x8] sm:$0xff]
    %v252 = vld [vmem:[#allocation7 + $0x10] sm:$0xf]
    %v253 = vld [vmem:[#allocation7 + $0x14] sm:$0xff]
    %v254 = vld [vmem:[#allocation7 + $0x1c] sm:$0xff]
    %v255 = vld [vmem:[#allocation7 + $0x24] sm:$0xf]
    %v256 = vld [vmem:[#allocation7 + $0x28] sm:$0xff]
    %v257 = vld [vmem:[#allocation7 + $0x30] sm:$0xff]
    %v258 = vld [vmem:[#allocation7 + $0x38] sm:$0xf]
    %v259 = vld [vmem:[#allocation7 + $0x3c] sm:$0xff]
    %v260 = vld [vmem:[#allocation7 + $0x44] sm:$0xff]
    %v261 = vld [vmem:[#allocation7 + $0x4c] sm:$0xf]
    %v262 = vld [vmem:[#allocation7 + $0x50] sm:$0xff]
    %v263 = vld [vmem:[#allocation7 + $0x58] sm:$0xff]
    %v264 = vld [vmem:[#allocation7 + $0x60] sm:$0xf]
    %v265 = vld [vmem:[#allocation7 + $0x64] sm:$0xff]
    %v266 = vld [vmem:[#allocation7 + $0x6c] sm:$0xff]
    %v267 = vld [vmem:[#allocation7 + $0x74] sm:$0xf]
    %v268 = vld [vmem:[#allocation7 + $0x78] sm:$0xff]
    %v269 = vld [vmem:[#allocation7 + $0x80] sm:$0xff]
    %v270 = vld [vmem:[#allocation7 + $0x88] sm:$0xf]
    %v271 = vld [vmem:[#allocation7 + $0x8c] sm:$0xff]
    %v272 = vld [vmem:[#allocation7 + $0x94] sm:$0xff]
    %v273 = vld [vmem:[#allocation7 + $0x9c] sm:$0xf]
    %v274 = vld [vmem:[#allocation7 + $0xa0] sm:$0xff]
    %v275 = vld [vmem:[#allocation7 + $0xa8] sm:$0xff]
    %v276 = vld [vmem:[#allocation7 + $0xb0] sm:$0xf]
    %v277 = vld [vmem:[#allocation7 + $0xb4] sm:$0xff]
    %v278 = vld [vmem:[#allocation7 + $0xbc] sm:$0xff]
    %v279 = vld [vmem:[#allocation7 + $0xc4] sm:$0xf]
    %v280 = vld [vmem:[#allocation7 + $0xc8] sm:$0xff]
    %v281 = vld [vmem:[#allocation7 + $0xd0] sm:$0xff]
    %v282 = vld [vmem:[#allocation7 + $0xd8] sm:$0xf]
    %v283 = vld [vmem:[#allocation7 + $0xdc] sm:$0xff]
    %v284 = vld [vmem:[#allocation7 + $0xe4] sm:$0xff]
    %v285 = vld [vmem:[#allocation7 + $0xec] sm:$0xf]
    %v286 = vld [vmem:[#allocation7 + $0xf0] sm:$0xff]
    %v287 = vld [vmem:[#allocation7 + $0xf8] sm:$0xff]
    %v288 = vld [vmem:[#allocation7 + $0x100] sm:$0xf]
    %v289 = vld [vmem:[#allocation7 + $0x104] sm:$0xff]
    %v290 = vld [vmem:[#allocation7 + $0x10c] sm:$0xff]
    %v291 = vld [vmem:[#allocation7 + $0x114] sm:$0xf]
    %v292 = vld [vmem:[#allocation7 + $0x118] sm:$0xff]
    %v293 = vld [vmem:[#allocation7 + $0x120] sm:$0xff]
    %v294 = vld [vmem:[#allocation7 + $0x128] sm:$0xf]
    %v295 = vld [vmem:[#allocation7 + $0x12c] sm:$0xff]
    %v296 = vld [vmem:[#allocation7 + $0x134] sm:$0xff]
    %v297 = vld [vmem:[#allocation7 + $0x13c] sm:$0xf]
    %v298 = vld [vmem:[#allocation7 + $0x140] sm:$0xff]
    %v299 = vld [vmem:[#allocation7 + $0x148] sm:$0xff]
    %v300 = vld [vmem:[#allocation7 + $0x150] sm:$0xf]
    %v301 = vld [vmem:[#allocation7 + $0x154] sm:$0xff]
    %v302 = vld [vmem:[#allocation7 + $0x15c] sm:$0xff]
    %v303 = vld [vmem:[#allocation7 + $0x164] sm:$0xf]
    %v304 = vld [vmem:[#allocation7 + $0x168] sm:$0xff]
    %v305 = vld [vmem:[#allocation7 + $0x170] sm:$0xff]
    %v306 = vld [vmem:[#allocation7 + $0x178] sm:$0xf]
    %v307 = vld [vmem:[#allocation7 + $0x17c] sm:$0xff]
    %v308 = vld [vmem:[#allocation7 + $0x184] sm:$0xff]
    %v309 = vld [vmem:[#allocation7 + $0x18c] sm:$0xf]
    %v310 = vld [vmem:[#allocation7 + $0x190] sm:$0xff]
    %v311 = vld [vmem:[#allocation7 + $0x198] sm:$0xff]
    %v312 = vld [vmem:[#allocation7 + $0x1a0] sm:$0xf]
    %v313 = vld [vmem:[#allocation7 + $0x1a4] sm:$0xff]
    %v314 = vld [vmem:[#allocation7 + $0x1ac] sm:$0xff]
    %v315 = vld [vmem:[#allocation7 + $0x1b4] sm:$0xf]
    %v316 = vld [vmem:[#allocation7 + $0x1b8] sm:$0xff]
    %v317 = vld [vmem:[#allocation7 + $0x1c0] sm:$0xff]
    %v318 = vld [vmem:[#allocation7 + $0x1c8] sm:$0xf]
    %v319 = vld [vmem:[#allocation7 + $0x1cc] sm:$0xff]
    %v320 = vld [vmem:[#allocation7 + $0x1d4] sm:$0xff]
    %v321 = vld [vmem:[#allocation7 + $0x1dc] sm:$0xf]
    %v322 = vld [vmem:[#allocation7 + $0x1e0] sm:$0xff]
    %v323 = vld [vmem:[#allocation7 + $0x1e8] sm:$0xff]
    %v324 = vld [vmem:[#allocation7 + $0x1f0] sm:$0xf]
    %v325 = vld [vmem:[#allocation7 + $0x1f4] sm:$0xff]
    %v326 = vld [vmem:[#allocation7 + $0x1fc] sm:$0xff]
    %v327 = vld [vmem:[#allocation7 + $0x204] sm:$0xf]
    %v328 = vld [vmem:[#allocation7 + $0x208] sm:$0xff]
    %v329 = vld [vmem:[#allocation7 + $0x210] sm:$0xff]
    %v330 = vld [vmem:[#allocation7 + $0x218] sm:$0xf]
    %v331 = vld [vmem:[#allocation7 + $0x21c] sm:$0xff]
    %v332 = vld [vmem:[#allocation7 + $0x224] sm:$0xff]
    %v333 = vld [vmem:[#allocation7 + $0x22c] sm:$0xf]
    %v334 = vld [vmem:[#allocation7 + $0x230] sm:$0xff]
    %v335 = vld [vmem:[#allocation7 + $0x238] sm:$0xff]
    %v336 = vld [vmem:[#allocation7 + $0x240] sm:$0xf]
    %v337 = vld [vmem:[#allocation7 + $0x244] sm:$0xff]
    %v338 = vld [vmem:[#allocation7 + $0x24c] sm:$0xff]
    %v339 = vld [vmem:[#allocation7 + $0x254] sm:$0xf]
    %v340 = vld [vmem:[#allocation7 + $0x258] sm:$0xff]
    %v341 = vld [vmem:[#allocation7 + $0x260] sm:$0xff]
    %v342 = vld [vmem:[#allocation7 + $0x268] sm:$0xf]
    %v343 = vld [vmem:[#allocation7 + $0x26c] sm:$0xff]
    %v344 = vld [vmem:[#allocation7 + $0x274] sm:$0xff]
    %v345 = vld [vmem:[#allocation7 + $0x27c] sm:$0xf]
    %v346 = vld [vmem:[#allocation7 + $0x280] sm:$0xff]
    %v347 = vld [vmem:[#allocation7 + $0x288] sm:$0xff]
    %v348 = vld [vmem:[#allocation7 + $0x290] sm:$0xf]
    %v349 = vld [vmem:[#allocation7 + $0x294] sm:$0xff]
    %v350 = vld [vmem:[#allocation7 + $0x29c] sm:$0xff]
    %v351 = vld [vmem:[#allocation7 + $0x2a4] sm:$0xf]
    %v352 = vld [vmem:[#allocation7 + $0x2a8] sm:$0xff]
    %v353 = vld [vmem:[#allocation7 + $0x2b0] sm:$0xff]
    %v354 = vld [vmem:[#allocation7 + $0x2b8] sm:$0xf]
    %v355 = vld [vmem:[#allocation7 + $0x2bc] sm:$0xff]
    %v356 = vld [vmem:[#allocation7 + $0x2c4] sm:$0xff]
    %v357 = vld [vmem:[#allocation7 + $0x2cc] sm:$0xf]
    %v358 = vld [vmem:[#allocation7 + $0x2d0] sm:$0xff]
    %v359 = vld [vmem:[#allocation7 + $0x2d8] sm:$0xff]
    %v360 = vld [vmem:[#allocation7 + $0x2e0] sm:$0xf]
    %v361 = vld [vmem:[#allocation7 + $0x2e4] sm:$0xff]
    %v362 = vld [vmem:[#allocation7 + $0x2ec] sm:$0xff]
    %v363 = vld [vmem:[#allocation7 + $0x2f4] sm:$0xf]
    %v364 = vld [vmem:[#allocation7 + $0x2f8] sm:$0xff]
    %v365 = vld [vmem:[#allocation7 + $0x300] sm:$0xff]
    %v366 = vld [vmem:[#allocation7 + $0x308] sm:$0xf]
    %v367 = vld [vmem:[#allocation7 + $0x30c] sm:$0xff]
    %v368 = vld [vmem:[#allocation7 + $0x314] sm:$0xff]
    %v369 = vld [vmem:[#allocation7 + $0x31c] sm:$0xf]
    %v370 = vld [vmem:[#allocation7 + $0x320] sm:$0xff]
    %v371 = vld [vmem:[#allocation7 + $0x328] sm:$0xff]
    %v372 = vld [vmem:[#allocation7 + $0x330] sm:$0xf]
    %v373 = vld [vmem:[#allocation7 + $0x334] sm:$0xff]
    %v374 = vld [vmem:[#allocation7 + $0x33c] sm:$0xff]
    %v375 = vld [vmem:[#allocation7 + $0x344] sm:$0xf]
    %v376 = vld [vmem:[#allocation7 + $0x348] sm:$0xff]
    %v377 = vld [vmem:[#allocation7 + $0x350] sm:$0xff]
    %v378 = vld [vmem:[#allocation7 + $0x358] sm:$0xf]
    %v379 = vld [vmem:[#allocation7 + $0x35c] sm:$0xff]
    %v380 = vld [vmem:[#allocation7 + $0x364] sm:$0xff]
    %v381 = vld [vmem:[#allocation7 + $0x36c] sm:$0xf]
    %v382 = vld [vmem:[#allocation7 + $0x370] sm:$0xff]
    %v383 = vld [vmem:[#allocation7 + $0x378] sm:$0xff]
    %v384 = vld [vmem:[#allocation7 + $0x380] sm:$0xf]
    %v385 = vld [vmem:[#allocation7 + $0x384] sm:$0xff]
    %v386 = vld [vmem:[#allocation7 + $0x38c] sm:$0xff]
    %v387 = vld [vmem:[#allocation7 + $0x394] sm:$0xf]
    %v388 = vld [vmem:[#allocation7 + $0x398] sm:$0xff]
    %v389 = vld [vmem:[#allocation7 + $0x3a0] sm:$0xff]
    %v390 = vld [vmem:[#allocation7 + $0x3a8] sm:$0xf]
    %v391 = vld [vmem:[#allocation7 + $0x3ac] sm:$0xff]
    %v392 = vld [vmem:[#allocation7 + $0x3b4] sm:$0xff]
    %v393 = vld [vmem:[#allocation7 + $0x3bc] sm:$0xf]
    %v394 = vld [vmem:[%s4] sm:$0x1f]
    %v396 = vlaneseq
    %v397 = vshrl.u32 %v396, 7
    %v398 = vsub.s32 0, %v397
    %v399 = vrot.slane %v394, %v398
    %v400 = vlaneseq
    %v401 = vshrl.u32 %v400, 7
    %v402 = vsub.s32 1, %v401
    %v403 = vrot.slane %v394, %v402
    %v404 = vlaneseq
    %v405 = vshrl.u32 %v404, 7
    %v406 = vsub.s32 2, %v405
    %v407 = vrot.slane %v394, %v406
    %v408 = vlaneseq
    %v409 = vshrl.u32 %v408, 7
    %v410 = vsub.s32 3, %v409
    %v411 = vrot.slane %v394, %v410
    %v412 = vlaneseq
    %v413 = vshrl.u32 %v412, 7
    %v414 = vsub.s32 4, %v413
    %v415 = vrot.slane %v394, %v414
    %v565 = vunpack.c.l.b16 %v250
    %v566 = vunpack.c.h.b16 %v250
    %v567 = vunpack.c.l.b16 %v251
    %v568 = vunpack.c.h.b16 %v251
    %v569 = vunpack.c.l.b16 %v252
    %v570 = vunpack.c.l.b16 %v253
    %v571 = vunpack.c.h.b16 %v253
    %v572 = vunpack.c.l.b16 %v254
    %v573 = vunpack.c.h.b16 %v254
    %v574 = vunpack.c.l.b16 %v255
    %v575 = vunpack.c.l.b16 %v256
    %v576 = vunpack.c.h.b16 %v256
    %v577 = vunpack.c.l.b16 %v257
    %v578 = vunpack.c.h.b16 %v257
    %v579 = vunpack.c.l.b16 %v258
    %v580 = vunpack.c.l.b16 %v259
    %v581 = vunpack.c.h.b16 %v259
    %v582 = vunpack.c.l.b16 %v260
    %v583 = vunpack.c.h.b16 %v260
    %v584 = vunpack.c.l.b16 %v261
    %v585 = vunpack.c.l.b16 %v262
    %v586 = vunpack.c.h.b16 %v262
    %v587 = vunpack.c.l.b16 %v263
    %v588 = vunpack.c.h.b16 %v263
    %v589 = vunpack.c.l.b16 %v264
    %v590 = vunpack.c.l.b16 %v265
    %v591 = vunpack.c.h.b16 %v265
    %v592 = vunpack.c.l.b16 %v266
    %v593 = vunpack.c.h.b16 %v266
    %v594 = vunpack.c.l.b16 %v267
    %v595 = vunpack.c.l.b16 %v268
    %v596 = vunpack.c.h.b16 %v268
    %v597 = vunpack.c.l.b16 %v269
    %v598 = vunpack.c.h.b16 %v269
    %v599 = vunpack.c.l.b16 %v270
    %v600 = vunpack.c.l.b16 %v271
    %v601 = vunpack.c.h.b16 %v271
    %v602 = vunpack.c.l.b16 %v272
    %v603 = vunpack.c.h.b16 %v272
    %v604 = vunpack.c.l.b16 %v273
    %v605 = vunpack.c.l.b16 %v274
    %v606 = vunpack.c.h.b16 %v274
    %v607 = vunpack.c.l.b16 %v275
    %v608 = vunpack.c.h.b16 %v275
    %v609 = vunpack.c.l.b16 %v276
    %v610 = vunpack.c.l.b16 %v277
    %v611 = vunpack.c.h.b16 %v277
    %v612 = vunpack.c.l.b16 %v278
    %v613 = vunpack.c.h.b16 %v278
    %v614 = vunpack.c.l.b16 %v279
    %v615 = vunpack.c.l.b16 %v280
    %v616 = vunpack.c.h.b16 %v280
    %v617 = vunpack.c.l.b16 %v281
    %v618 = vunpack.c.h.b16 %v281
    %v619 = vunpack.c.l.b16 %v282
    %v620 = vunpack.c.l.b16 %v283
    %v621 = vunpack.c.h.b16 %v283
    %v622 = vunpack.c.l.b16 %v284
    %v623 = vunpack.c.h.b16 %v284
    %v624 = vunpack.c.l.b16 %v285
    %v625 = vunpack.c.l.b16 %v286
    %v626 = vunpack.c.h.b16 %v286
    %v627 = vunpack.c.l.b16 %v287
    %v628 = vunpack.c.h.b16 %v287
    %v629 = vunpack.c.l.b16 %v288
    %v630 = vunpack.c.l.b16 %v289
    %v631 = vunpack.c.h.b16 %v289
    %v632 = vunpack.c.l.b16 %v290
    %v633 = vunpack.c.h.b16 %v290
    %v634 = vunpack.c.l.b16 %v291
    %v635 = vunpack.c.l.b16 %v292
    %v636 = vunpack.c.h.b16 %v292
    %v637 = vunpack.c.l.b16 %v293
    %v638 = vunpack.c.h.b16 %v293
    %v639 = vunpack.c.l.b16 %v294
    %v640 = vunpack.c.l.b16 %v295
    %v641 = vunpack.c.h.b16 %v295
    %v642 = vunpack.c.l.b16 %v296
    %v643 = vunpack.c.h.b16 %v296
    %v644 = vunpack.c.l.b16 %v297
    %v645 = vunpack.c.l.b16 %v298
    %v646 = vunpack.c.h.b16 %v298
    %v647 = vunpack.c.l.b16 %v299
    %v648 = vunpack.c.h.b16 %v299
    %v649 = vunpack.c.l.b16 %v300
    %v650 = vunpack.c.l.b16 %v301
    %v651 = vunpack.c.h.b16 %v301
    %v652 = vunpack.c.l.b16 %v302
    %v653 = vunpack.c.h.b16 %v302
    %v654 = vunpack.c.l.b16 %v303
    %v655 = vunpack.c.l.b16 %v304
    %v656 = vunpack.c.h.b16 %v304
    %v657 = vunpack.c.l.b16 %v305
    %v658 = vunpack.c.h.b16 %v305
    %v659 = vunpack.c.l.b16 %v306
    %v660 = vunpack.c.l.b16 %v307
    %v661 = vunpack.c.h.b16 %v307
    %v662 = vunpack.c.l.b16 %v308
    %v663 = vunpack.c.h.b16 %v308
    %v664 = vunpack.c.l.b16 %v309
    %v665 = vunpack.c.l.b16 %v310
    %v666 = vunpack.c.h.b16 %v310
    %v667 = vunpack.c.l.b16 %v311
    %v668 = vunpack.c.h.b16 %v311
    %v669 = vunpack.c.l.b16 %v312
    %v670 = vunpack.c.l.b16 %v313
    %v671 = vunpack.c.h.b16 %v313
    %v672 = vunpack.c.l.b16 %v314
    %v673 = vunpack.c.h.b16 %v314
    %v674 = vunpack.c.l.b16 %v315
    %v675 = vunpack.c.l.b16 %v316
    %v676 = vunpack.c.h.b16 %v316
    %v677 = vunpack.c.l.b16 %v317
    %v678 = vunpack.c.h.b16 %v317
    %v679 = vunpack.c.l.b16 %v318
    %v680 = vunpack.c.l.b16 %v319
    %v681 = vunpack.c.h.b16 %v319
    %v682 = vunpack.c.l.b16 %v320
    %v683 = vunpack.c.h.b16 %v320
    %v684 = vunpack.c.l.b16 %v321
    %v685 = vunpack.c.l.b16 %v322
    %v686 = vunpack.c.h.b16 %v322
    %v687 = vunpack.c.l.b16 %v323
    %v688 = vunpack.c.h.b16 %v323
    %v689 = vunpack.c.l.b16 %v324
    %v690 = vunpack.c.l.b16 %v325
    %v691 = vunpack.c.h.b16 %v325
    %v692 = vunpack.c.l.b16 %v326
    %v693 = vunpack.c.h.b16 %v326
    %v694 = vunpack.c.l.b16 %v327
    %v695 = vunpack.c.l.b16 %v328
    %v696 = vunpack.c.h.b16 %v328
    %v697 = vunpack.c.l.b16 %v329
    %v698 = vunpack.c.h.b16 %v329
    %v699 = vunpack.c.l.b16 %v330
    %v700 = vunpack.c.l.b16 %v331
    %v701 = vunpack.c.h.b16 %v331
    %v702 = vunpack.c.l.b16 %v332
    %v703 = vunpack.c.h.b16 %v332
    %v704 = vunpack.c.l.b16 %v333
    %v705 = vunpack.c.l.b16 %v334
    %v706 = vunpack.c.h.b16 %v334
    %v707 = vunpack.c.l.b16 %v335
    %v708 = vunpack.c.h.b16 %v335
    %v709 = vunpack.c.l.b16 %v336
    %v710 = vunpack.c.l.b16 %v337
    %v711 = vunpack.c.h.b16 %v337
    %v712 = vunpack.c.l.b16 %v338
    %v713 = vunpack.c.h.b16 %v338
    %v714 = vunpack.c.l.b16 %v339
    %v715 = vunpack.c.l.b16 %v340
    %v716 = vunpack.c.h.b16 %v340
    %v717 = vunpack.c.l.b16 %v341
    %v718 = vunpack.c.h.b16 %v341
    %v719 = vunpack.c.l.b16 %v342
    %v720 = vunpack.c.l.b16 %v343
    %v721 = vunpack.c.h.b16 %v343
    %v722 = vunpack.c.l.b16 %v344
    %v723 = vunpack.c.h.b16 %v344
    %v724 = vunpack.c.l.b16 %v345
    %v725 = vunpack.c.l.b16 %v346
    %v726 = vunpack.c.h.b16 %v346
    %v727 = vunpack.c.l.b16 %v347
    %v728 = vunpack.c.h.b16 %v347
    %v729 = vunpack.c.l.b16 %v348
    %v730 = vunpack.c.l.b16 %v349
    %v731 = vunpack.c.h.b16 %v349
    %v732 = vunpack.c.l.b16 %v350
    %v733 = vunpack.c.h.b16 %v350
    %v734 = vunpack.c.l.b16 %v351
    %v735 = vunpack.c.l.b16 %v352
    %v736 = vunpack.c.h.b16 %v352
    %v737 = vunpack.c.l.b16 %v353
    %v738 = vunpack.c.h.b16 %v353
    %v739 = vunpack.c.l.b16 %v354
    %v740 = vunpack.c.l.b16 %v355
    %v741 = vunpack.c.h.b16 %v355
    %v742 = vunpack.c.l.b16 %v356
    %v743 = vunpack.c.h.b16 %v356
    %v744 = vunpack.c.l.b16 %v357
    %v745 = vunpack.c.l.b16 %v358
    %v746 = vunpack.c.h.b16 %v358
    %v747 = vunpack.c.l.b16 %v359
    %v748 = vunpack.c.h.b16 %v359
    %v749 = vunpack.c.l.b16 %v360
    %v750 = vunpack.c.l.b16 %v361
    %v751 = vunpack.c.h.b16 %v361
    %v752 = vunpack.c.l.b16 %v362
    %v753 = vunpack.c.h.b16 %v362
    %v754 = vunpack.c.l.b16 %v363
    %v755 = vunpack.c.l.b16 %v364
    %v756 = vunpack.c.h.b16 %v364
    %v757 = vunpack.c.l.b16 %v365
    %v758 = vunpack.c.h.b16 %v365
    %v759 = vunpack.c.l.b16 %v366
    %v760 = vunpack.c.l.b16 %v367
    %v761 = vunpack.c.h.b16 %v367
    %v762 = vunpack.c.l.b16 %v368
    %v763 = vunpack.c.h.b16 %v368
    %v764 = vunpack.c.l.b16 %v369
    %v765 = vunpack.c.l.b16 %v370
    %v766 = vunpack.c.h.b16 %v370
    %v767 = vunpack.c.l.b16 %v371
    %v768 = vunpack.c.h.b16 %v371
    %v769 = vunpack.c.l.b16 %v372
    %v770 = vunpack.c.l.b16 %v373
    %v771 = vunpack.c.h.b16 %v373
    %v772 = vunpack.c.l.b16 %v374
    %v773 = vunpack.c.h.b16 %v374
    %v774 = vunpack.c.l.b16 %v375
    %v775 = vunpack.c.l.b16 %v376
    %v776 = vunpack.c.h.b16 %v376
    %v777 = vunpack.c.l.b16 %v377
    %v778 = vunpack.c.h.b16 %v377
    %v779 = vunpack.c.l.b16 %v378
    %v780 = vunpack.c.l.b16 %v379
    %v781 = vunpack.c.h.b16 %v379
    %v782 = vunpack.c.l.b16 %v380
    %v783 = vunpack.c.h.b16 %v380
    %v784 = vunpack.c.l.b16 %v381
    %v785 = vunpack.c.l.b16 %v382
    %v786 = vunpack.c.h.b16 %v382
    %v787 = vunpack.c.l.b16 %v383
    %v788 = vunpack.c.h.b16 %v383
    %v789 = vunpack.c.l.b16 %v384
    %v790 = vunpack.c.l.b16 %v385
    %v791 = vunpack.c.h.b16 %v385
    %v792 = vunpack.c.l.b16 %v386
    %v793 = vunpack.c.h.b16 %v386
    %v794 = vunpack.c.l.b16 %v387
    %v795 = vunpack.c.l.b16 %v388
    %v796 = vunpack.c.h.b16 %v388
    %v797 = vunpack.c.l.b16 %v389
    %v798 = vunpack.c.h.b16 %v389
    %v799 = vunpack.c.l.b16 %v390
    %v800 = vunpack.c.l.b16 %v391
    %v801 = vunpack.c.h.b16 %v391
    %v802 = vunpack.c.l.b16 %v392
    %v803 = vunpack.c.h.b16 %v392
    %v804 = vunpack.c.l.b16 %v393
    %v805 = vpack.c.b16 %v570, %v565
    %v806 = vpack.c.b16 %v571, %v566
    %v807 = vpack.c.b16 %v572, %v567
    %v808 = vpack.c.b16 %v573, %v568
    %v809 = vpack.c.b16 %v574, %v569
    %v810 = vpack.c.b16 %v580, %v575
    %v811 = vpack.c.b16 %v581, %v576
    %v812 = vpack.c.b16 %v582, %v577
    %v813 = vpack.c.b16 %v583, %v578
    %v814 = vpack.c.b16 %v584, %v579
    %v815 = vpack.c.b16 %v590, %v585
    %v816 = vpack.c.b16 %v591, %v586
    %v817 = vpack.c.b16 %v592, %v587
    %v818 = vpack.c.b16 %v593, %v588
    %v819 = vpack.c.b16 %v594, %v589
    %v820 = vpack.c.b16 %v600, %v595
    %v821 = vpack.c.b16 %v601, %v596
    %v822 = vpack.c.b16 %v602, %v597
    %v823 = vpack.c.b16 %v603, %v598
    %v824 = vpack.c.b16 %v604, %v599
    %v825 = vpack.c.b16 %v610, %v605
    %v826 = vpack.c.b16 %v611, %v606
    %v827 = vpack.c.b16 %v612, %v607
    %v828 = vpack.c.b16 %v613, %v608
    %v829 = vpack.c.b16 %v614, %v609
    %v830 = vpack.c.b16 %v620, %v615
    %v831 = vpack.c.b16 %v621, %v616
    %v832 = vpack.c.b16 %v622, %v617
    %v833 = vpack.c.b16 %v623, %v618
    %v834 = vpack.c.b16 %v624, %v619
    %v835 = vpack.c.b16 %v630, %v625
    %v836 = vpack.c.b16 %v631, %v626
    %v837 = vpack.c.b16 %v632, %v627
    %v838 = vpack.c.b16 %v633, %v628
    %v839 = vpack.c.b16 %v634, %v629
    %v840 = vpack.c.b16 %v640, %v635
    %v841 = vpack.c.b16 %v641, %v636
    %v842 = vpack.c.b16 %v642, %v637
    %v843 = vpack.c.b16 %v643, %v638
    %v844 = vpack.c.b16 %v644, %v639
    %v845 = vpack.c.b16 %v650, %v645
    %v846 = vpack.c.b16 %v651, %v646
    %v847 = vpack.c.b16 %v652, %v647
    %v848 = vpack.c.b16 %v653, %v648
    %v849 = vpack.c.b16 %v654, %v649
    %v850 = vpack.c.b16 %v660, %v655
    %v851 = vpack.c.b16 %v661, %v656
    %v852 = vpack.c.b16 %v662, %v657
    %v853 = vpack.c.b16 %v663, %v658
    %v854 = vpack.c.b16 %v664, %v659
    %v855 = vpack.c.b16 %v670, %v665
    %v856 = vpack.c.b16 %v671, %v666
    %v857 = vpack.c.b16 %v672, %v667
    %v858 = vpack.c.b16 %v673, %v668
    %v859 = vpack.c.b16 %v674, %v669
    %v860 = vpack.c.b16 %v680, %v675
    %v861 = vpack.c.b16 %v681, %v676
    %v862 = vpack.c.b16 %v682, %v677
    %v863 = vpack.c.b16 %v683, %v678
    %v864 = vpack.c.b16 %v684, %v679
    %v865 = vpack.c.b16 %v690, %v685
    %v866 = vpack.c.b16 %v691, %v686
    %v867 = vpack.c.b16 %v692, %v687
    %v868 = vpack.c.b16 %v693, %v688
    %v869 = vpack.c.b16 %v694, %v689
    %v870 = vpack.c.b16 %v700, %v695
    %v871 = vpack.c.b16 %v701, %v696
    %v872 = vpack.c.b16 %v702, %v697
    %v873 = vpack.c.b16 %v703, %v698
    %v874 = vpack.c.b16 %v704, %v699
    %v875 = vpack.c.b16 %v710, %v705
    %v876 = vpack.c.b16 %v711, %v706
    %v877 = vpack.c.b16 %v712, %v707
    %v878 = vpack.c.b16 %v713, %v708
    %v879 = vpack.c.b16 %v714, %v709
    %v880 = vpack.c.b16 %v720, %v715
    %v881 = vpack.c.b16 %v721, %v716
    %v882 = vpack.c.b16 %v722, %v717
    %v883 = vpack.c.b16 %v723, %v718
    %v884 = vpack.c.b16 %v724, %v719
    %v885 = vpack.c.b16 %v730, %v725
    %v886 = vpack.c.b16 %v731, %v726
    %v887 = vpack.c.b16 %v732, %v727
    %v888 = vpack.c.b16 %v733, %v728
    %v889 = vpack.c.b16 %v734, %v729
    %v890 = vpack.c.b16 %v740, %v735
    %v891 = vpack.c.b16 %v741, %v736
    %v892 = vpack.c.b16 %v742, %v737
    %v893 = vpack.c.b16 %v743, %v738
    %v894 = vpack.c.b16 %v744, %v739
    %v895 = vpack.c.b16 %v750, %v745
    %v896 = vpack.c.b16 %v751, %v746
    %v897 = vpack.c.b16 %v752, %v747
    %v898 = vpack.c.b16 %v753, %v748
    %v899 = vpack.c.b16 %v754, %v749
    %v900 = vpack.c.b16 %v760, %v755
    %v901 = vpack.c.b16 %v761, %v756
    %v902 = vpack.c.b16 %v762, %v757
    %v903 = vpack.c.b16 %v763, %v758
    %v904 = vpack.c.b16 %v764, %v759
    %v905 = vpack.c.b16 %v770, %v765
    %v906 = vpack.c.b16 %v771, %v766
    %v907 = vpack.c.b16 %v772, %v767
    %v908 = vpack.c.b16 %v773, %v768
    %v909 = vpack.c.b16 %v774, %v769
    %v910 = vpack.c.b16 %v780, %v775
    %v911 = vpack.c.b16 %v781, %v776
    %v912 = vpack.c.b16 %v782, %v777
    %v913 = vpack.c.b16 %v783, %v778
    %v914 = vpack.c.b16 %v784, %v779
    %v915 = vpack.c.b16 %v790, %v785
    %v916 = vpack.c.b16 %v791, %v786
    %v917 = vpack.c.b16 %v792, %v787
    %v918 = vpack.c.b16 %v793, %v788
    %v919 = vpack.c.b16 %v794, %v789
    %v920 = vpack.c.b16 %v800, %v795
    %v921 = vpack.c.b16 %v801, %v796
    %v922 = vpack.c.b16 %v802, %v797
    %v923 = vpack.c.b16 %v803, %v798
    %v924 = vpack.c.b16 %v804, %v799
    %1045 = vmatprep.subr.bf16.mxu0 %v841
    %1046 = vmatpush1.bf16.msra.mxu0 %v840
    %1047 = vmatprep.subr.bf16.mxu0 %v836
    %1048 = vmatpush1.bf16.msra.mxu0 %v835
    %1049 = vmatprep.subr.bf16.mxu0 %v831
    %1050 = vmatpush1.bf16.msra.mxu0 %v830
    %1051 = vmatprep.subr.bf16.mxu0 %v826
    %1052 = vmatpush1.bf16.msra.mxu0 %v825
    %1053 = vmatprep.subr.bf16.mxu0 %v821
    %1054 = vmatpush1.bf16.msra.mxu0 %v820
    %1055 = vmatprep.subr.bf16.mxu0 %v816
    %1056 = vmatpush1.bf16.msra.mxu0 %v815
    %1057 = vmatprep.subr.bf16.mxu0 %v811
    %1058 = vmatpush1.bf16.msra.mxu0 %v810
    %1059 = vmatprep.subr.bf16.mxu0 %v806
    %1060 = vmatpush1.bf16.msra.mxu0 %v805
    %1061 = vmatprep.subr.bf16.mxu0 %v881
    %1062 = vmatpush2.bf16.msra.mxu0 %v880
    %1063 = vmatprep.subr.bf16.mxu0 %v876
    %1064 = vmatpush2.bf16.msra.mxu0 %v875
    %1065 = vmatprep.subr.bf16.mxu0 %v871
    %1066 = vmatpush2.bf16.msra.mxu0 %v870
    %1067 = vmatprep.subr.bf16.mxu0 %v866
    %1068 = vmatpush2.bf16.msra.mxu0 %v865
    %1069 = vmatprep.subr.bf16.mxu0 %v861
    %1070 = vmatpush2.bf16.msra.mxu0 %v860
    %1071 = vmatprep.subr.bf16.mxu0 %v856
    %1072 = vmatpush2.bf16.msra.mxu0 %v855
    %1073 = vmatprep.subr.bf16.mxu0 %v851
    %1074 = vmatpush2.bf16.msra.mxu0 %v850
    %1075 = vmatprep.subr.bf16.mxu0 %v846
    %1076 = vmatpush2.bf16.msra.mxu0 %v845
    %1077 = vmatprep.mubr.bf16.mxu0 %v248
    %1078 = vmatmul.mubr.bf16.gmra.mxu0 %v247
    %v1079 = vpop.f32.mrf.mxu0
    %v1080 = vadd.f32 %v399, %v1079
    %v1081 = vpop.f32.mrf.mxu0
    %v1082 = vadd.f32 %v403, %v1081
    %v1083 = vpop.f32.mrf.mxu0
    %v1084 = vadd.f32 %v399, %v1083
    %v1085 = vpop.f32.mrf.mxu0
    %v1086 = vadd.f32 %v403, %v1085
    %1087 = vdwg.mxu0
    %1088 = vmatprep.subr.bf16.mxu0 %v921
    %1089 = vmatpush1.bf16.msra.mxu0 %v920
    %1090 = vmatprep.subr.bf16.mxu0 %v916
    %1091 = vmatpush1.bf16.msra.mxu0 %v915
    %1092 = vmatprep.subr.bf16.mxu0 %v911
    %1093 = vmatpush1.bf16.msra.mxu0 %v910
    %1094 = vmatprep.subr.bf16.mxu0 %v906
    %1095 = vmatpush1.bf16.msra.mxu0 %v905
    %1096 = vmatprep.subr.bf16.mxu0 %v901
    %1097 = vmatpush1.bf16.msra.mxu0 %v900
    %1098 = vmatprep.subr.bf16.mxu0 %v896
    %1099 = vmatpush1.bf16.msra.mxu0 %v895
    %1100 = vmatprep.subr.bf16.mxu0 %v891
    %1101 = vmatpush1.bf16.msra.mxu0 %v890
    %1102 = vmatprep.subr.bf16.mxu0 %v886
    %1103 = vmatpush1.bf16.msra.mxu0 %v885
    %1104 = vmatprep.subr.bf16.mxu0 0
    %1105 = vmatpush2.bf16.msra.mxu0 0
    %1106 = vmatprep.subr.bf16.mxu0 0
    %1107 = vmatpush2.bf16.msra.mxu0 0
    %1108 = vmatprep.subr.bf16.mxu0 0
    %1109 = vmatpush2.bf16.msra.mxu0 0
    %1110 = vmatprep.subr.bf16.mxu0 0
    %1111 = vmatpush2.bf16.msra.mxu0 0
    %1112 = vmatprep.subr.bf16.mxu0 0
    %1113 = vmatpush2.bf16.msra.mxu0 0
    %1114 = vmatprep.subr.bf16.mxu0 0
    %1115 = vmatpush2.bf16.msra.mxu0 0
    %1116 = vmatprep.subr.bf16.mxu0 0
    %1117 = vmatpush2.bf16.msra.mxu0 0
    %1118 = vmatprep.subr.bf16.mxu0 0
    %1119 = vmatpush2.bf16.msra.mxu0 0
    %1120 = vmatprep.mubr.bf16.mxu0 0
    %1121 = vmatmul.mubr.bf16.gmra.mxu0 %v249
    %v1122 = vpop.f32.mrf.mxu0
    %v1123 = vadd.f32 %v1080, %v1122
    %v1124 = vpop.f32.mrf.mxu0
    %v1125 = vadd.f32 %v1082, %v1124
    %v1126 = vpop.f32.mrf.mxu0
    %v1127 = vadd.f32 %v1084, %v1126
    %v1128 = vpop.f32.mrf.mxu0
    %v1129 = vadd.f32 %v1086, %v1128
    %1130 = vdwg.mxu0
    %1131 = vmatprep.subr.bf16.mxu0 %v843
    %1132 = vmatpush1.bf16.msra.mxu0 %v842
    %1133 = vmatprep.subr.bf16.mxu0 %v838
    %1134 = vmatpush1.bf16.msra.mxu0 %v837
    %1135 = vmatprep.subr.bf16.mxu0 %v833
    %1136 = vmatpush1.bf16.msra.mxu0 %v832
    %1137 = vmatprep.subr.bf16.mxu0 %v828
    %1138 = vmatpush1.bf16.msra.mxu0 %v827
    %1139 = vmatprep.subr.bf16.mxu0 %v823
    %1140 = vmatpush1.bf16.msra.mxu0 %v822
    %1141 = vmatprep.subr.bf16.mxu0 %v818
    %1142 = vmatpush1.bf16.msra.mxu0 %v817
    %1143 = vmatprep.subr.bf16.mxu0 %v813
    %1144 = vmatpush1.bf16.msra.mxu0 %v812
    %1145 = vmatprep.subr.bf16.mxu0 %v808
    %1146 = vmatpush1.bf16.msra.mxu0 %v807
    %1147 = vmatprep.subr.bf16.mxu0 %v883
    %1148 = vmatpush2.bf16.msra.mxu0 %v882
    %1149 = vmatprep.subr.bf16.mxu0 %v878
    %1150 = vmatpush2.bf16.msra.mxu0 %v877
    %1151 = vmatprep.subr.bf16.mxu0 %v873
    %1152 = vmatpush2.bf16.msra.mxu0 %v872
    %1153 = vmatprep.subr.bf16.mxu0 %v868
    %1154 = vmatpush2.bf16.msra.mxu0 %v867
    %1155 = vmatprep.subr.bf16.mxu0 %v863
    %1156 = vmatpush2.bf16.msra.mxu0 %v862
    %1157 = vmatprep.subr.bf16.mxu0 %v858
    %1158 = vmatpush2.bf16.msra.mxu0 %v857
    %1159 = vmatprep.subr.bf16.mxu0 %v853
    %1160 = vmatpush2.bf16.msra.mxu0 %v852
    %1161 = vmatprep.subr.bf16.mxu0 %v848
    %1162 = vmatpush2.bf16.msra.mxu0 %v847
    %1163 = vmatprep.mubr.bf16.mxu0 %v248
    %1164 = vmatmul.mubr.bf16.gmra.mxu0 %v247
    %v1165 = vpop.f32.mrf.mxu0
    %v1166 = vadd.f32 %v407, %v1165
    %v1167 = vpop.f32.mrf.mxu0
    %v1168 = vadd.f32 %v411, %v1167
    %v1169 = vpop.f32.mrf.mxu0
    %v1170 = vadd.f32 %v407, %v1169
    %v1171 = vpop.f32.mrf.mxu0
    %v1172 = vadd.f32 %v411, %v1171
    %1173 = vdwg.mxu0
    %1174 = vmatprep.subr.bf16.mxu0 %v923
    %1175 = vmatpush1.bf16.msra.mxu0 %v922
    %1176 = vmatprep.subr.bf16.mxu0 %v918
    %1177 = vmatpush1.bf16.msra.mxu0 %v917
    %1178 = vmatprep.subr.bf16.mxu0 %v913
    %1179 = vmatpush1.bf16.msra.mxu0 %v912
    %1180 = vmatprep.subr.bf16.mxu0 %v908
    %1181 = vmatpush1.bf16.msra.mxu0 %v907
    %1182 = vmatprep.subr.bf16.mxu0 %v903
    %1183 = vmatpush1.bf16.msra.mxu0 %v902
    %1184 = vmatprep.subr.bf16.mxu0 %v898
    %1185 = vmatpush1.bf16.msra.mxu0 %v897
    %1186 = vmatprep.subr.bf16.mxu0 %v893
    %1187 = vmatpush1.bf16.msra.mxu0 %v892
    %1188 = vmatprep.subr.bf16.mxu0 %v888
    %1189 = vmatpush1.bf16.msra.mxu0 %v887
    %1190 = vmatprep.subr.bf16.mxu0 0
    %1191 = vmatpush2.bf16.msra.mxu0 0
    %1192 = vmatprep.subr.bf16.mxu0 0
    %1193 = vmatpush2.bf16.msra.mxu0 0
    %1194 = vmatprep.subr.bf16.mxu0 0
    %1195 = vmatpush2.bf16.msra.mxu0 0
    %1196 = vmatprep.subr.bf16.mxu0 0
    %1197 = vmatpush2.bf16.msra.mxu0 0
    %1198 = vmatprep.subr.bf16.mxu0 0
    %1199 = vmatpush2.bf16.msra.mxu0 0
    %1200 = vmatprep.subr.bf16.mxu0 0
    %1201 = vmatpush2.bf16.msra.mxu0 0
    %1202 = vmatprep.subr.bf16.mxu0 0
    %1203 = vmatpush2.bf16.msra.mxu0 0
    %1204 = vmatprep.subr.bf16.mxu0 0
    %1205 = vmatpush2.bf16.msra.mxu0 0
    %1206 = vmatprep.mubr.bf16.mxu0 0
    %1207 = vmatmul.mubr.bf16.gmra.mxu0 %v249
    %v1208 = vpop.f32.mrf.mxu0
    %v1209 = vadd.f32 %v1166, %v1208
    %v1210 = vpop.f32.mrf.mxu0
    %v1211 = vadd.f32 %v1168, %v1210
    %v1212 = vpop.f32.mrf.mxu0
    %v1213 = vadd.f32 %v1170, %v1212
    %v1214 = vpop.f32.mrf.mxu0
    %v1215 = vadd.f32 %v1172, %v1214
    %1216 = vdwg.mxu0
    %1217 = vmatprep.subr.bf16.mxu0 0
    %1218 = vmatpush1.bf16.msra.mxu0 %v844
    %1219 = vmatprep.subr.bf16.mxu0 0
    %1220 = vmatpush1.bf16.msra.mxu0 %v839
    %1221 = vmatprep.subr.bf16.mxu0 0
    %1222 = vmatpush1.bf16.msra.mxu0 %v834
    %1223 = vmatprep.subr.bf16.mxu0 0
    %1224 = vmatpush1.bf16.msra.mxu0 %v829
    %1225 = vmatprep.subr.bf16.mxu0 0
    %1226 = vmatpush1.bf16.msra.mxu0 %v824
    %1227 = vmatprep.subr.bf16.mxu0 0
    %1228 = vmatpush1.bf16.msra.mxu0 %v819
    %1229 = vmatprep.subr.bf16.mxu0 0
    %1230 = vmatpush1.bf16.msra.mxu0 %v814
    %1231 = vmatprep.subr.bf16.mxu0 0
    %1232 = vmatpush1.bf16.msra.mxu0 %v809
    %1233 = vmatprep.subr.bf16.mxu0 0
    %1234 = vmatpush2.bf16.msra.mxu0 %v884
    %1235 = vmatprep.subr.bf16.mxu0 0
    %1236 = vmatpush2.bf16.msra.mxu0 %v879
    %1237 = vmatprep.subr.bf16.mxu0 0
    %1238 = vmatpush2.bf16.msra.mxu0 %v874
    %1239 = vmatprep.subr.bf16.mxu0 0
    %1240 = vmatpush2.bf16.msra.mxu0 %v869
    %1241 = vmatprep.subr.bf16.mxu0 0
    %1242 = vmatpush2.bf16.msra.mxu0 %v864
    %1243 = vmatprep.subr.bf16.mxu0 0
    %1244 = vmatpush2.bf16.msra.mxu0 %v859
    %1245 = vmatprep.subr.bf16.mxu0 0
    %1246 = vmatpush2.bf16.msra.mxu0 %v854
    %1247 = vmatprep.subr.bf16.mxu0 0
    %1248 = vmatpush2.bf16.msra.mxu0 %v849
    %1249 = vmatprep.mubr.bf16.mxu0 %v248
    %1250 = vmatmul.mubr.bf16.gmra.mxu0 %v247
    %v1251 = vpop.f32.mrf.mxu0
    %v1252 = vadd.f32 %v415, %v1251
    %v1253 = vpop.f32.mrf.mxu0
    %v1254 = vpop.f32.mrf.mxu0
    %v1255 = vadd.f32 %v415, %v1254
    %v1256 = vpop.f32.mrf.mxu0
    %1257 = vdwg.mxu0
    %1258 = vmatprep.subr.bf16.mxu0 0
    %1259 = vmatpush1.bf16.msra.mxu0 %v924
    %1260 = vmatprep.subr.bf16.mxu0 0
    %1261 = vmatpush1.bf16.msra.mxu0 %v919
    %1262 = vmatprep.subr.bf16.mxu0 0
    %1263 = vmatpush1.bf16.msra.mxu0 %v914
    %1264 = vmatprep.subr.bf16.mxu0 0
    %1265 = vmatpush1.bf16.msra.mxu0 %v909
    %1266 = vmatprep.subr.bf16.mxu0 0
    %1267 = vmatpush1.bf16.msra.mxu0 %v904
    %1268 = vmatprep.subr.bf16.mxu0 0
    %1269 = vmatpush1.bf16.msra.mxu0 %v899
    %1270 = vmatprep.subr.bf16.mxu0 0
    %1271 = vmatpush1.bf16.msra.mxu0 %v894
    %1272 = vmatprep.subr.bf16.mxu0 0
    %1273 = vmatpush1.bf16.msra.mxu0 %v889
    %1274 = vmatprep.subr.bf16.mxu0 0
    %1275 = vmatpush2.bf16.msra.mxu0 0
    %1276 = vmatprep.subr.bf16.mxu0 0
    %1277 = vmatpush2.bf16.msra.mxu0 0
    %1278 = vmatprep.subr.bf16.mxu0 0
    %1279 = vmatpush2.bf16.msra.mxu0 0
    %1280 = vmatprep.subr.bf16.mxu0 0
    %1281 = vmatpush2.bf16.msra.mxu0 0
    %1282 = vmatprep.subr.bf16.mxu0 0
    %1283 = vmatpush2.bf16.msra.mxu0 0
    %1284 = vmatprep.subr.bf16.mxu0 0
    %1285 = vmatpush2.bf16.msra.mxu0 0
    %1286 = vmatprep.subr.bf16.mxu0 0
    %1287 = vmatpush2.bf16.msra.mxu0 0
    %1288 = vmatprep.subr.bf16.mxu0 0
    %1289 = vmatpush2.bf16.msra.mxu0 0
    %1290 = vmatprep.mubr.bf16.mxu0 0
    %1291 = vmatmul.mubr.bf16.gmra.mxu0 %v249
    %v1292 = vpop.f32.mrf.mxu0
    %v1293 = vadd.f32 %v1252, %v1292
    %v1294 = vpop.f32.mrf.mxu0
    %v1295 = vpop.f32.mrf.mxu0
    %v1296 = vadd.f32 %v1255, %v1295
    %v1297 = vpop.f32.mrf.mxu0
    %1298 = vdwg.mxu0
    %v1299 = vmax.f32 %v1123, 0.0
    %v1300 = vmax.f32 %v1125, 0.0
    %v1301 = vmax.f32 %v1209, 0.0
    %v1302 = vmax.f32 %v1211, 0.0
    %v1303 = vmax.f32 %v1293, 0.0
    %v1304 = vmax.f32 %v1127, 0.0
    %v1305 = vmax.f32 %v1129, 0.0
    %v1306 = vmax.f32 %v1213, 0.0
    %v1307 = vmax.f32 %v1215, 0.0
    %v1308 = vmax.f32 %v1296, 0.0
    %v1309 = vpack.c.bf16 %v1304, %v1299
    %v1310 = vpack.c.bf16 %v1305, %v1300
    %v1311 = vpack.c.bf16 %v1306, %v1301
    %v1312 = vpack.c.bf16 %v1307, %v1302
    %v1313 = vpack.c.bf16 %v1308, %v1303
    %v1314 = vld [vmem:[#allocation9] sm:$0xff]
    %v1315 = vld [vmem:[#allocation9 + $0x8] sm:$0xff]
    %v1316 = vld [vmem:[#allocation9 + $0x10] sm:$0xff]
    %v1317 = vld [vmem:[#allocation9 + $0x18] sm:$0xff]
    %v1318 = vld [vmem:[#allocation9 + $0x20] sm:$0xff]
    %v1319 = vld [vmem:[#allocation9 + $0x28] sm:$0xff]
    %v1320 = vld [vmem:[#allocation9 + $0x30] sm:$0xff]
    %v1321 = vld [vmem:[#allocation9 + $0x38] sm:$0xff]
    %v1322 = vld [vmem:[#allocation9 + $0x40] sm:$0xff]
    %v1323 = vld [vmem:[#allocation9 + $0x48] sm:$0xff]
    %v1324 = vld [vmem:[#allocation9 + $0x50] sm:$0xff]
    %v1325 = vld [vmem:[#allocation9 + $0x58] sm:$0xff]
    %v1326 = vld [vmem:[#allocation9 + $0x60] sm:$0xff]
    %v1327 = vld [vmem:[#allocation9 + $0x68] sm:$0xff]
    %v1328 = vld [vmem:[#allocation9 + $0x70] sm:$0xff]
    %v1329 = vld [vmem:[#allocation9 + $0x78] sm:$0xff]
    %v1330 = vld [vmem:[#allocation9 + $0x80] sm:$0xff]
    %v1331 = vld [vmem:[#allocation9 + $0x88] sm:$0xff]
    %v1332 = vld [vmem:[#allocation9 + $0x90] sm:$0xff]
    %v1333 = vld [vmem:[#allocation9 + $0x98] sm:$0xff]
    %v1334 = vld [vmem:[#allocation9 + $0xa0] sm:$0xff]
    %v1335 = vld [vmem:[#allocation9 + $0xa8] sm:$0xff]
    %v1336 = vld [vmem:[#allocation9 + $0xb0] sm:$0xff]
    %v1337 = vld [vmem:[#allocation9 + $0xb8] sm:$0xff]
    %v1338 = vld [vmem:[#allocation9 + $0xc0] sm:$0xff]
    %v1339 = vld [vmem:[#allocation9 + $0xc8] sm:$0xff]
    %v1340 = vld [vmem:[#allocation9 + $0xd0] sm:$0xff]
    %v1341 = vld [vmem:[#allocation9 + $0xd8] sm:$0xff]
    %v1342 = vld [vmem:[#allocation9 + $0xe0] sm:$0xff]
    %v1343 = vld [vmem:[#allocation9 + $0xe8] sm:$0xff]
    %v1344 = vld [vmem:[#allocation9 + $0xf0] sm:$0xff]
    %v1345 = vld [vmem:[#allocation9 + $0xf8] sm:$0xff]
    %v1346 = vld [vmem:[#allocation9 + $0x100] sm:$0xff]
    %v1347 = vld [vmem:[#allocation9 + $0x108] sm:$0xff]
    %v1348 = vld [vmem:[#allocation9 + $0x110] sm:$0xff]
    %v1349 = vld [vmem:[#allocation9 + $0x118] sm:$0xff]
    %v1350 = vld [vmem:[#allocation9 + $0x120] sm:$0xff]
    %v1351 = vld [vmem:[#allocation9 + $0x128] sm:$0xff]
    %v1352 = vld [vmem:[#allocation9 + $0x130] sm:$0xff]
    %v1353 = vld [vmem:[#allocation9 + $0x138] sm:$0xff]
    %v1354 = vld [vmem:[#allocation9 + $0x140] sm:$0xff]
    %v1355 = vld [vmem:[#allocation9 + $0x148] sm:$0xff]
    %v1356 = vld [vmem:[#allocation9 + $0x150] sm:$0xff]
    %v1357 = vld [vmem:[#allocation9 + $0x158] sm:$0xff]
    %v1358 = vld [vmem:[#allocation9 + $0x160] sm:$0xff]
    %v1359 = vld [vmem:[#allocation9 + $0x168] sm:$0xff]
    %v1360 = vld [vmem:[#allocation9 + $0x170] sm:$0xff]
    %v1361 = vld [vmem:[#allocation9 + $0x178] sm:$0xff]
    %v1362 = vld [vmem:[#allocation9 + $0x180] sm:$0xff]
    %v1363 = vld [vmem:[#allocation9 + $0x188] sm:$0xff]
    %v1364 = vld [vmem:[#allocation9 + $0x190] sm:$0xff]
    %v1365 = vld [vmem:[#allocation9 + $0x198] sm:$0xff]
    %v1366 = vld [vmem:[#allocation9 + $0x1a0] sm:$0xff]
    %v1367 = vld [vmem:[#allocation9 + $0x1a8] sm:$0xff]
    %v1368 = vld [vmem:[#allocation9 + $0x1b0] sm:$0xff]
    %v1369 = vld [vmem:[#allocation9 + $0x1b8] sm:$0xff]
    %v1370 = vld [vmem:[#allocation9 + $0x1c0] sm:$0xff]
    %v1371 = vld [vmem:[#allocation9 + $0x1c8] sm:$0xff]
    %v1372 = vld [vmem:[#allocation9 + $0x1d0] sm:$0xff]
    %v1373 = vld [vmem:[#allocation9 + $0x1d8] sm:$0xff]
    %v1374 = vld [vmem:[#allocation9 + $0x1e0] sm:$0xff]
    %v1375 = vld [vmem:[#allocation9 + $0x1e8] sm:$0xff]
    %v1376 = vld [vmem:[#allocation9 + $0x1f0] sm:$0xff]
    %v1377 = vld [vmem:[#allocation9 + $0x1f8] sm:$0xff]
    %v1378 = vld [vmem:[#allocation9 + $0x200] sm:$0xff]
    %v1379 = vld [vmem:[#allocation9 + $0x208] sm:$0xff]
    %v1380 = vld [vmem:[#allocation9 + $0x210] sm:$0xff]
    %v1381 = vld [vmem:[#allocation9 + $0x218] sm:$0xff]
    %v1382 = vld [vmem:[#allocation9 + $0x220] sm:$0xff]
    %v1383 = vld [vmem:[#allocation9 + $0x228] sm:$0xff]
    %v1384 = vld [vmem:[#allocation9 + $0x230] sm:$0xff]
    %v1385 = vld [vmem:[#allocation9 + $0x238] sm:$0xff]
    %v1386 = vld [vmem:[#allocation9 + $0x240] sm:$0xff]
    %v1387 = vld [vmem:[#allocation9 + $0x248] sm:$0xff]
    %v1388 = vld [vmem:[#allocation9 + $0x250] sm:$0xff]
    %v1389 = vld [vmem:[#allocation9 + $0x258] sm:$0xff]
    %v1390 = vld [vmem:[#allocation9 + $0x260] sm:$0xff]
    %v1391 = vld [vmem:[#allocation9 + $0x268] sm:$0xff]
    %v1392 = vld [vmem:[#allocation9 + $0x270] sm:$0xff]
    %v1393 = vld [vmem:[#allocation9 + $0x278] sm:$0xff]
    %v1394 = vld [vmem:[%s6] sm:$0x3]
    %v1396 = vlaneseq
    %v1397 = vshrl.u32 %v1396, 7
    %v1398 = vsub.s32 0, %v1397
    %v1399 = vrot.slane %v1394, %v1398
    %v1400 = vlaneseq
    %v1401 = vshrl.u32 %v1400, 7
    %v1402 = vsub.s32 1, %v1401
    %v1403 = vrot.slane %v1394, %v1402
    %v1486 = vunpack.c.l.b16 %v1314
    %v1487 = vunpack.c.h.b16 %v1314
    %v1488 = vunpack.c.l.b16 %v1315
    %v1489 = vunpack.c.h.b16 %v1315
    %v1490 = vunpack.c.l.b16 %v1316
    %v1491 = vunpack.c.h.b16 %v1316
    %v1492 = vunpack.c.l.b16 %v1317
    %v1493 = vunpack.c.h.b16 %v1317
    %v1494 = vunpack.c.l.b16 %v1318
    %v1495 = vunpack.c.h.b16 %v1318
    %v1496 = vunpack.c.l.b16 %v1319
    %v1497 = vunpack.c.h.b16 %v1319
    %v1498 = vunpack.c.l.b16 %v1320
    %v1499 = vunpack.c.h.b16 %v1320
    %v1500 = vunpack.c.l.b16 %v1321
    %v1501 = vunpack.c.h.b16 %v1321
    %v1502 = vunpack.c.l.b16 %v1322
    %v1503 = vunpack.c.h.b16 %v1322
    %v1504 = vunpack.c.l.b16 %v1323
    %v1505 = vunpack.c.h.b16 %v1323
    %v1506 = vunpack.c.l.b16 %v1324
    %v1507 = vunpack.c.h.b16 %v1324
    %v1508 = vunpack.c.l.b16 %v1325
    %v1509 = vunpack.c.h.b16 %v1325
    %v1510 = vunpack.c.l.b16 %v1326
    %v1511 = vunpack.c.h.b16 %v1326
    %v1512 = vunpack.c.l.b16 %v1327
    %v1513 = vunpack.c.h.b16 %v1327
    %v1514 = vunpack.c.l.b16 %v1328
    %v1515 = vunpack.c.h.b16 %v1328
    %v1516 = vunpack.c.l.b16 %v1329
    %v1517 = vunpack.c.h.b16 %v1329
    %v1518 = vunpack.c.l.b16 %v1330
    %v1519 = vunpack.c.h.b16 %v1330
    %v1520 = vunpack.c.l.b16 %v1331
    %v1521 = vunpack.c.h.b16 %v1331
    %v1522 = vunpack.c.l.b16 %v1332
    %v1523 = vunpack.c.h.b16 %v1332
    %v1524 = vunpack.c.l.b16 %v1333
    %v1525 = vunpack.c.h.b16 %v1333
    %v1526 = vunpack.c.l.b16 %v1334
    %v1527 = vunpack.c.h.b16 %v1334
    %v1528 = vunpack.c.l.b16 %v1335
    %v1529 = vunpack.c.h.b16 %v1335
    %v1530 = vunpack.c.l.b16 %v1336
    %v1531 = vunpack.c.h.b16 %v1336
    %v1532 = vunpack.c.l.b16 %v1337
    %v1533 = vunpack.c.h.b16 %v1337
    %v1534 = vunpack.c.l.b16 %v1338
    %v1535 = vunpack.c.h.b16 %v1338
    %v1536 = vunpack.c.l.b16 %v1339
    %v1537 = vunpack.c.h.b16 %v1339
    %v1538 = vunpack.c.l.b16 %v1340
    %v1539 = vunpack.c.h.b16 %v1340
    %v1540 = vunpack.c.l.b16 %v1341
    %v1541 = vunpack.c.h.b16 %v1341
    %v1542 = vunpack.c.l.b16 %v1342
    %v1543 = vunpack.c.h.b16 %v1342
    %v1544 = vunpack.c.l.b16 %v1343
    %v1545 = vunpack.c.h.b16 %v1343
    %v1546 = vunpack.c.l.b16 %v1344
    %v1547 = vunpack.c.h.b16 %v1344
    %v1548 = vunpack.c.l.b16 %v1345
    %v1549 = vunpack.c.h.b16 %v1345
    %v1550 = vunpack.c.l.b16 %v1346
    %v1551 = vunpack.c.h.b16 %v1346
    %v1552 = vunpack.c.l.b16 %v1347
    %v1553 = vunpack.c.h.b16 %v1347
    %v1554 = vunpack.c.l.b16 %v1348
    %v1555 = vunpack.c.h.b16 %v1348
    %v1556 = vunpack.c.l.b16 %v1349
    %v1557 = vunpack.c.h.b16 %v1349
    %v1558 = vunpack.c.l.b16 %v1350
    %v1559 = vunpack.c.h.b16 %v1350
    %v1560 = vunpack.c.l.b16 %v1351
    %v1561 = vunpack.c.h.b16 %v1351
    %v1562 = vunpack.c.l.b16 %v1352
    %v1563 = vunpack.c.h.b16 %v1352
    %v1564 = vunpack.c.l.b16 %v1353
    %v1565 = vunpack.c.h.b16 %v1353
    %v1566 = vunpack.c.l.b16 %v1354
    %v1567 = vunpack.c.h.b16 %v1354
    %v1568 = vunpack.c.l.b16 %v1355
    %v1569 = vunpack.c.h.b16 %v1355
    %v1570 = vunpack.c.l.b16 %v1356
    %v1571 = vunpack.c.h.b16 %v1356
    %v1572 = vunpack.c.l.b16 %v1357
    %v1573 = vunpack.c.h.b16 %v1357
    %v1574 = vunpack.c.l.b16 %v1358
    %v1575 = vunpack.c.h.b16 %v1358
    %v1576 = vunpack.c.l.b16 %v1359
    %v1577 = vunpack.c.h.b16 %v1359
    %v1578 = vunpack.c.l.b16 %v1360
    %v1579 = vunpack.c.h.b16 %v1360
    %v1580 = vunpack.c.l.b16 %v1361
    %v1581 = vunpack.c.h.b16 %v1361
    %v1582 = vunpack.c.l.b16 %v1362
    %v1583 = vunpack.c.h.b16 %v1362
    %v1584 = vunpack.c.l.b16 %v1363
    %v1585 = vunpack.c.h.b16 %v1363
    %v1586 = vunpack.c.l.b16 %v1364
    %v1587 = vunpack.c.h.b16 %v1364
    %v1588 = vunpack.c.l.b16 %v1365
    %v1589 = vunpack.c.h.b16 %v1365
    %v1590 = vunpack.c.l.b16 %v1366
    %v1591 = vunpack.c.h.b16 %v1366
    %v1592 = vunpack.c.l.b16 %v1367
    %v1593 = vunpack.c.h.b16 %v1367
    %v1594 = vunpack.c.l.b16 %v1368
    %v1595 = vunpack.c.h.b16 %v1368
    %v1596 = vunpack.c.l.b16 %v1369
    %v1597 = vunpack.c.h.b16 %v1369
    %v1598 = vunpack.c.l.b16 %v1370
    %v1599 = vunpack.c.h.b16 %v1370
    %v1600 = vunpack.c.l.b16 %v1371
    %v1601 = vunpack.c.h.b16 %v1371
    %v1602 = vunpack.c.l.b16 %v1372
    %v1603 = vunpack.c.h.b16 %v1372
    %v1604 = vunpack.c.l.b16 %v1373
    %v1605 = vunpack.c.h.b16 %v1373
    %v1606 = vunpack.c.l.b16 %v1374
    %v1607 = vunpack.c.h.b16 %v1374
    %v1608 = vunpack.c.l.b16 %v1375
    %v1609 = vunpack.c.h.b16 %v1375
    %v1610 = vunpack.c.l.b16 %v1376
    %v1611 = vunpack.c.h.b16 %v1376
    %v1612 = vunpack.c.l.b16 %v1377
    %v1613 = vunpack.c.h.b16 %v1377
    %v1614 = vunpack.c.l.b16 %v1378
    %v1615 = vunpack.c.h.b16 %v1378
    %v1616 = vunpack.c.l.b16 %v1379
    %v1617 = vunpack.c.h.b16 %v1379
    %v1618 = vunpack.c.l.b16 %v1380
    %v1619 = vunpack.c.h.b16 %v1380
    %v1620 = vunpack.c.l.b16 %v1381
    %v1621 = vunpack.c.h.b16 %v1381
    %v1622 = vunpack.c.l.b16 %v1382
    %v1623 = vunpack.c.h.b16 %v1382
    %v1624 = vunpack.c.l.b16 %v1383
    %v1625 = vunpack.c.h.b16 %v1383
    %v1626 = vunpack.c.l.b16 %v1384
    %v1627 = vunpack.c.h.b16 %v1384
    %v1628 = vunpack.c.l.b16 %v1385
    %v1629 = vunpack.c.h.b16 %v1385
    %v1630 = vunpack.c.l.b16 %v1386
    %v1631 = vunpack.c.h.b16 %v1386
    %v1632 = vunpack.c.l.b16 %v1387
    %v1633 = vunpack.c.h.b16 %v1387
    %v1634 = vunpack.c.l.b16 %v1388
    %v1635 = vunpack.c.h.b16 %v1388
    %v1636 = vunpack.c.l.b16 %v1389
    %v1637 = vunpack.c.h.b16 %v1389
    %v1638 = vunpack.c.l.b16 %v1390
    %v1639 = vunpack.c.h.b16 %v1390
    %v1640 = vunpack.c.l.b16 %v1391
    %v1641 = vunpack.c.h.b16 %v1391
    %v1642 = vunpack.c.l.b16 %v1392
    %v1643 = vunpack.c.h.b16 %v1392
    %v1644 = vunpack.c.l.b16 %v1393
    %v1645 = vunpack.c.h.b16 %v1393
    %v1646 = vpack.c.b16 %v1488, %v1486
    %v1647 = vpack.c.b16 %v1489, %v1487
    %v1648 = vpack.c.b16 %v1492, %v1490
    %v1649 = vpack.c.b16 %v1493, %v1491
    %v1650 = vpack.c.b16 %v1496, %v1494
    %v1651 = vpack.c.b16 %v1497, %v1495
    %v1652 = vpack.c.b16 %v1500, %v1498
    %v1653 = vpack.c.b16 %v1501, %v1499
    %v1654 = vpack.c.b16 %v1504, %v1502
    %v1655 = vpack.c.b16 %v1505, %v1503
    %v1656 = vpack.c.b16 %v1508, %v1506
    %v1657 = vpack.c.b16 %v1509, %v1507
    %v1658 = vpack.c.b16 %v1512, %v1510
    %v1659 = vpack.c.b16 %v1513, %v1511
    %v1660 = vpack.c.b16 %v1516, %v1514
    %v1661 = vpack.c.b16 %v1517, %v1515
    %v1662 = vpack.c.b16 %v1520, %v1518
    %v1663 = vpack.c.b16 %v1521, %v1519
    %v1664 = vpack.c.b16 %v1524, %v1522
    %v1665 = vpack.c.b16 %v1525, %v1523
    %v1666 = vpack.c.b16 %v1528, %v1526
    %v1667 = vpack.c.b16 %v1529, %v1527
    %v1668 = vpack.c.b16 %v1532, %v1530
    %v1669 = vpack.c.b16 %v1533, %v1531
    %v1670 = vpack.c.b16 %v1536, %v1534
    %v1671 = vpack.c.b16 %v1537, %v1535
    %v1672 = vpack.c.b16 %v1540, %v1538
    %v1673 = vpack.c.b16 %v1541, %v1539
    %v1674 = vpack.c.b16 %v1544, %v1542
    %v1675 = vpack.c.b16 %v1545, %v1543
    %v1676 = vpack.c.b16 %v1548, %v1546
    %v1677 = vpack.c.b16 %v1549, %v1547
    %v1678 = vpack.c.b16 %v1552, %v1550
    %v1679 = vpack.c.b16 %v1553, %v1551
    %v1680 = vpack.c.b16 %v1556, %v1554
    %v1681 = vpack.c.b16 %v1557, %v1555
    %v1682 = vpack.c.b16 %v1560, %v1558
    %v1683 = vpack.c.b16 %v1561, %v1559
    %v1684 = vpack.c.b16 %v1564, %v1562
    %v1685 = vpack.c.b16 %v1565, %v1563
    %v1686 = vpack.c.b16 %v1568, %v1566
    %v1687 = vpack.c.b16 %v1569, %v1567
    %v1688 = vpack.c.b16 %v1572, %v1570
    %v1689 = vpack.c.b16 %v1573, %v1571
    %v1690 = vpack.c.b16 %v1576, %v1574
    %v1691 = vpack.c.b16 %v1577, %v1575
    %v1692 = vpack.c.b16 %v1580, %v1578
    %v1693 = vpack.c.b16 %v1581, %v1579
    %v1694 = vpack.c.b16 %v1584, %v1582
    %v1695 = vpack.c.b16 %v1585, %v1583
    %v1696 = vpack.c.b16 %v1588, %v1586
    %v1697 = vpack.c.b16 %v1589, %v1587
    %v1698 = vpack.c.b16 %v1592, %v1590
    %v1699 = vpack.c.b16 %v1593, %v1591
    %v1700 = vpack.c.b16 %v1596, %v1594
    %v1701 = vpack.c.b16 %v1597, %v1595
    %v1702 = vpack.c.b16 %v1600, %v1598
    %v1703 = vpack.c.b16 %v1601, %v1599
    %v1704 = vpack.c.b16 %v1604, %v1602
    %v1705 = vpack.c.b16 %v1605, %v1603
    %v1706 = vpack.c.b16 %v1608, %v1606
    %v1707 = vpack.c.b16 %v1609, %v1607
    %v1708 = vpack.c.b16 %v1612, %v1610
    %v1709 = vpack.c.b16 %v1613, %v1611
    %v1710 = vpack.c.b16 %v1616, %v1614
    %v1711 = vpack.c.b16 %v1617, %v1615
    %v1712 = vpack.c.b16 %v1620, %v1618
    %v1713 = vpack.c.b16 %v1621, %v1619
    %v1714 = vpack.c.b16 %v1624, %v1622
    %v1715 = vpack.c.b16 %v1625, %v1623
    %v1716 = vpack.c.b16 %v1628, %v1626
    %v1717 = vpack.c.b16 %v1629, %v1627
    %v1718 = vpack.c.b16 %v1632, %v1630
    %v1719 = vpack.c.b16 %v1633, %v1631
    %v1720 = vpack.c.b16 %v1636, %v1634
    %v1721 = vpack.c.b16 %v1637, %v1635
    %v1722 = vpack.c.b16 %v1640, %v1638
    %v1723 = vpack.c.b16 %v1641, %v1639
    %v1724 = vpack.c.b16 %v1644, %v1642
    %v1725 = vpack.c.b16 %v1645, %v1643
    %1806 = vmatprep.subr.bf16.mxu0 %v1661
    %1807 = vmatpush1.bf16.msra.mxu0 %v1660
    %1808 = vmatprep.subr.bf16.mxu0 %v1659
    %1809 = vmatpush1.bf16.msra.mxu0 %v1658
    %1810 = vmatprep.subr.bf16.mxu0 %v1657
    %1811 = vmatpush1.bf16.msra.mxu0 %v1656
    %1812 = vmatprep.subr.bf16.mxu0 %v1655
    %1813 = vmatpush1.bf16.msra.mxu0 %v1654
    %1814 = vmatprep.subr.bf16.mxu0 %v1653
    %1815 = vmatpush1.bf16.msra.mxu0 %v1652
    %1816 = vmatprep.subr.bf16.mxu0 %v1651
    %1817 = vmatpush1.bf16.msra.mxu0 %v1650
    %1818 = vmatprep.subr.bf16.mxu0 %v1649
    %1819 = vmatpush1.bf16.msra.mxu0 %v1648
    %1820 = vmatprep.subr.bf16.mxu0 %v1647
    %1821 = vmatpush1.bf16.msra.mxu0 %v1646
    %1822 = vmatprep.subr.bf16.mxu0 %v1677
    %1823 = vmatpush2.bf16.msra.mxu0 %v1676
    %1824 = vmatprep.subr.bf16.mxu0 %v1675
    %1825 = vmatpush2.bf16.msra.mxu0 %v1674
    %1826 = vmatprep.subr.bf16.mxu0 %v1673
    %1827 = vmatpush2.bf16.msra.mxu0 %v1672
    %1828 = vmatprep.subr.bf16.mxu0 %v1671
    %1829 = vmatpush2.bf16.msra.mxu0 %v1670
    %1830 = vmatprep.subr.bf16.mxu0 %v1669
    %1831 = vmatpush2.bf16.msra.mxu0 %v1668
    %1832 = vmatprep.subr.bf16.mxu0 %v1667
    %1833 = vmatpush2.bf16.msra.mxu0 %v1666
    %1834 = vmatprep.subr.bf16.mxu0 %v1665
    %1835 = vmatpush2.bf16.msra.mxu0 %v1664
    %1836 = vmatprep.subr.bf16.mxu0 %v1663
    %1837 = vmatpush2.bf16.msra.mxu0 %v1662
    %1838 = vmatprep.mubr.bf16.mxu0 %v1310
    %1839 = vmatmul.mubr.bf16.gmra.mxu0 %v1309
    %v1840 = vpop.f32.mrf.mxu0
    %v1841 = vadd.f32 %v1399, %v1840
    %v1842 = vpop.f32.mrf.mxu0
    %v1843 = vadd.f32 %v1403, %v1842
    %v1844 = vpop.f32.mrf.mxu0
    %v1845 = vadd.f32 %v1399, %v1844
    %v1846 = vpop.f32.mrf.mxu0
    %v1847 = vadd.f32 %v1403, %v1846
    %1848 = vdwg.mxu0
    %1849 = vmatprep.subr.bf16.mxu0 %v1693
    %1850 = vmatpush1.bf16.msra.mxu0 %v1692
    %1851 = vmatprep.subr.bf16.mxu0 %v1691
    %1852 = vmatpush1.bf16.msra.mxu0 %v1690
    %1853 = vmatprep.subr.bf16.mxu0 %v1689
    %1854 = vmatpush1.bf16.msra.mxu0 %v1688
    %1855 = vmatprep.subr.bf16.mxu0 %v1687
    %1856 = vmatpush1.bf16.msra.mxu0 %v1686
    %1857 = vmatprep.subr.bf16.mxu0 %v1685
    %1858 = vmatpush1.bf16.msra.mxu0 %v1684
    %1859 = vmatprep.subr.bf16.mxu0 %v1683
    %1860 = vmatpush1.bf16.msra.mxu0 %v1682
    %1861 = vmatprep.subr.bf16.mxu0 %v1681
    %1862 = vmatpush1.bf16.msra.mxu0 %v1680
    %1863 = vmatprep.subr.bf16.mxu0 %v1679
    %1864 = vmatpush1.bf16.msra.mxu0 %v1678
    %1865 = vmatprep.subr.bf16.mxu0 %v1709
    %1866 = vmatpush2.bf16.msra.mxu0 %v1708
    %1867 = vmatprep.subr.bf16.mxu0 %v1707
    %1868 = vmatpush2.bf16.msra.mxu0 %v1706
    %1869 = vmatprep.subr.bf16.mxu0 %v1705
    %1870 = vmatpush2.bf16.msra.mxu0 %v1704
    %1871 = vmatprep.subr.bf16.mxu0 %v1703
    %1872 = vmatpush2.bf16.msra.mxu0 %v1702
    %1873 = vmatprep.subr.bf16.mxu0 %v1701
    %1874 = vmatpush2.bf16.msra.mxu0 %v1700
    %1875 = vmatprep.subr.bf16.mxu0 %v1699
    %1876 = vmatpush2.bf16.msra.mxu0 %v1698
    %1877 = vmatprep.subr.bf16.mxu0 %v1697
    %1878 = vmatpush2.bf16.msra.mxu0 %v1696
    %1879 = vmatprep.subr.bf16.mxu0 %v1695
    %1880 = vmatpush2.bf16.msra.mxu0 %v1694
    %1881 = vmatprep.mubr.bf16.mxu0 %v1312
    %1882 = vmatmul.mubr.bf16.gmra.mxu0 %v1311
    %v1883 = vpop.f32.mrf.mxu0
    %v1884 = vadd.f32 %v1841, %v1883
    %v1885 = vpop.f32.mrf.mxu0
    %v1886 = vadd.f32 %v1843, %v1885
    %v1887 = vpop.f32.mrf.mxu0
    %v1888 = vadd.f32 %v1845, %v1887
    %v1889 = vpop.f32.mrf.mxu0
    %v1890 = vadd.f32 %v1847, %v1889
    %1891 = vdwg.mxu0
    %1892 = vmatprep.subr.bf16.mxu0 %v1725
    %1893 = vmatpush1.bf16.msra.mxu0 %v1724
    %1894 = vmatprep.subr.bf16.mxu0 %v1723
    %1895 = vmatpush1.bf16.msra.mxu0 %v1722
    %1896 = vmatprep.subr.bf16.mxu0 %v1721
    %1897 = vmatpush1.bf16.msra.mxu0 %v1720
    %1898 = vmatprep.subr.bf16.mxu0 %v1719
    %1899 = vmatpush1.bf16.msra.mxu0 %v1718
    %1900 = vmatprep.subr.bf16.mxu0 %v1717
    %1901 = vmatpush1.bf16.msra.mxu0 %v1716
    %1902 = vmatprep.subr.bf16.mxu0 %v1715
    %1903 = vmatpush1.bf16.msra.mxu0 %v1714
    %1904 = vmatprep.subr.bf16.mxu0 %v1713
    %1905 = vmatpush1.bf16.msra.mxu0 %v1712
    %1906 = vmatprep.subr.bf16.mxu0 %v1711
    %1907 = vmatpush1.bf16.msra.mxu0 %v1710
    %1908 = vmatprep.subr.bf16.mxu0 0
    %1909 = vmatpush2.bf16.msra.mxu0 0
    %1910 = vmatprep.subr.bf16.mxu0 0
    %1911 = vmatpush2.bf16.msra.mxu0 0
    %1912 = vmatprep.subr.bf16.mxu0 0
    %1913 = vmatpush2.bf16.msra.mxu0 0
    %1914 = vmatprep.subr.bf16.mxu0 0
    %1915 = vmatpush2.bf16.msra.mxu0 0
    %1916 = vmatprep.subr.bf16.mxu0 0
    %1917 = vmatpush2.bf16.msra.mxu0 0
    %1918 = vmatprep.subr.bf16.mxu0 0
    %1919 = vmatpush2.bf16.msra.mxu0 0
    %1920 = vmatprep.subr.bf16.mxu0 0
    %1921 = vmatpush2.bf16.msra.mxu0 0
    %1922 = vmatprep.subr.bf16.mxu0 0
    %1923 = vmatpush2.bf16.msra.mxu0 0
    %1924 = vmatprep.mubr.bf16.mxu0 0
    %1925 = vmatmul.mubr.bf16.gmra.mxu0 %v1313
    %v1926 = vpop.f32.mrf.mxu0
    %v1927 = vadd.f32 %v1884, %v1926
    %v1928 = vpop.f32.mrf.mxu0
    %v1929 = vadd.f32 %v1886, %v1928
    %v1930 = vpop.f32.mrf.mxu0
    %v1931 = vadd.f32 %v1888, %v1930
    %v1932 = vpop.f32.mrf.mxu0
    %v1933 = vadd.f32 %v1890, %v1932
    %1934 = vdwg.mxu0
    %1935 = vst [vmem:[%s7] sm:$0xff] %v1927
    %1936 = vst [vmem:[%s7 + $0x8] sm:$0xff] %v1929
    %1937 = vst [vmem:[%s7 + $0x10] sm:$0xff] %v1931
    %1938 = vst [vmem:[%s7 + $0x18] sm:$0xff] %v1933
    // Predicated region
    $region50: #{conv_decoder_forward.1} parent=1 // pred_check
      _
    $region51: #{conv_decoder_forward.1} parent=1 // pred_check_branch
      %1940 = sbr.rel (0) target = $region53
    $region52: #{conv_decoder_forward.1} parent=1 // pred_region
      _
    $region53: #{conv_decoder_forward.1} parent=1 // pred_fallthru
      _
    // Predicated region
    $region54: #{conv_decoder_forward.1} parent=1 // pred_check
      _
    $region55: #{conv_decoder_forward.1} parent=1 // pred_check_branch
      %1942 = sbr.rel (0) target = $region57
    $region56: #{conv_decoder_forward.1} parent=1 // pred_region
      _
    $region57: #{conv_decoder_forward.1} parent=1 // pred_fallthru
      _
    %1943 = vsyncpa [#allocation3], 1
    %1944 = vsyncpa [#allocation5], 1
    %1945 = vsyncpa [#allocation8], 1

</llo_original>
